<compile_context>
chip_gen: v7x
topology: tpu7x:2x2x1
jax: 0.10.0
libtpu: 0.0.40
codegen_flags: <defaults>
</compile_context>

<pallas_src>
import math

import jax
import jax.numpy as jnp
from jax import lax
from jax.experimental import pallas as pl
from jax.experimental.pallas import tpu as pltpu

# ---------------- config (small, structure-faithful, lane-dense) ----------------
IMG, PATCH, CIN = 16, 8, 3
NUM_PATCHES = (IMG // PATCH) ** 2          # 4
SEQ = NUM_PATCHES + 1                      # 5 = cls + patches
SEQ_PAD = 8                                # sublane-aligned padded sequence (pad tokens masked)
D = 256                                    # vision hidden size (analog of 1024)
NUM_HEADS = 2
HEAD_DIM = D // NUM_HEADS                  # 128 -> lane-aligned head slices
NUM_LAYERS = 2
MLP_DIM = 4 * D                            # 1024
PROJ_DIM = 128                             # visual projection dim (analog of 768)
OUT_DIM = 128                              # GeoCLIP output dim (analog of 512)
LN_EPS = 1e-5
BATCH = 2
CPP = CIN * PATCH * PATCH                  # 192 (im2col feature size)
ROWS = BATCH * SEQ_PAD                     # 16
ATTN_SCALE = 1.0 / math.sqrt(HEAD_DIM)


def _full_spec(shape):
    # whole-array block (no grid tiling along these axes)
    return pl.BlockSpec(shape, lambda *_: (0,) * len(shape))


def _layernorm(x, g, b):
    mean = jnp.mean(x, axis=-1, keepdims=True)
    xc = x - mean
    var = jnp.mean(xc * xc, axis=-1, keepdims=True)
    return xc * lax.rsqrt(var + LN_EPS) * g + b


# ---------------- kernel 1: patch embed + cls/pos + pre-LN ----------------
def _embed_kernel(patch_ref, pw_ref, tok_ref, g_ref, b_ref, o_ref):
    emb = jnp.dot(patch_ref[...].astype(jnp.bfloat16), pw_ref[...],
                  preferred_element_type=jnp.float32)          # conv-as-matmul, no bias
    x = emb + tok_ref[...]                                     # class emb + positional emb
    o_ref[...] = _layernorm(x, g_ref[...], b_ref[...])


def embed_pallas(patches_ext, tok, p):
    return pl.pallas_call(
        _embed_kernel,
        out_shape=jax.ShapeDtypeStruct((ROWS, D), jnp.float32),
        in_specs=[_full_spec((ROWS, CPP)), _full_spec((CPP, D)),
                  _full_spec((ROWS, D)), _full_spec((1, D)), _full_spec((1, D))],
        out_specs=_full_spec((ROWS, D)),
    )(patches_ext, p["patch_w"], tok, p["pre_ln_g"], p["pre_ln_b"])


# ---------------- kernel 2: whole transformer encoder (grid over layers) ----------------
def _encoder_kernel(h0_ref,
                    ln1g_ref, ln1b_ref, qkvw_ref, qkvb_ref, ow_ref, ob_ref,
                    ln2g_ref, ln2b_ref, fc1w_ref, fc1b_ref, fc2w_ref, fc2b_ref,
                    out_ref, h_scr):
    layer = pl.program_id(0)

    @pl.when(layer == 0)
    def _():
        h_scr[...] = h0_ref[...]

    h = h_scr[...]                                             # [ROWS, D] f32 residual stream

    # ---- self-attention block (pre-LN, fused QKV) ----
    hn = _layernorm(h, ln1g_ref[0], ln1b_ref[0])
    qkv = jnp.dot(hn.astype(jnp.bfloat16), qkvw_ref[0],
                  preferred_element_type=jnp.float32) + qkvb_ref[0]
    q = qkv[:, 0 * D:1 * D] * ATTN_SCALE
    k = qkv[:, 1 * D:2 * D]
    v = qkv[:, 2 * D:3 * D]

    # mask padded key positions (>= SEQ)
    key_pos = lax.broadcasted_iota(jnp.int32, (SEQ_PAD, SEQ_PAD), 1)
    neg = jnp.where(key_pos >= SEQ, -1e30, 0.0).astype(jnp.float32)

    batch_out = []
    for b in range(BATCH):
        r0 = b * SEQ_PAD
        qb, kb, vb = (t[r0:r0 + SEQ_PAD, :] for t in (q, k, v))
        head_out = []
        for hd in range(NUM_HEADS):
            c0 = hd * HEAD_DIM
            qh = qb[:, c0:c0 + HEAD_DIM].astype(jnp.bfloat16)
            kh = kb[:, c0:c0 + HEAD_DIM].astype(jnp.bfloat16)
            vh = vb[:, c0:c0 + HEAD_DIM].astype(jnp.bfloat16)
            s = lax.dot_general(qh, kh, (((1,), (1,)), ((), ())),
                                preferred_element_type=jnp.float32) + neg
            m = jnp.max(s, axis=-1, keepdims=True)
            pexp = jnp.exp(s - m)
            inv = pl.reciprocal(jnp.sum(pexp, axis=-1, keepdims=True), approx=True)
            pexp = pexp * inv
            head_out.append(jnp.dot(pexp.astype(jnp.bfloat16), vh,
                                    preferred_element_type=jnp.float32))
        batch_out.append(jnp.concatenate(head_out, axis=-1))
    attn = jnp.concatenate(batch_out, axis=0)                  # [ROWS, D]

    h = h + jnp.dot(attn.astype(jnp.bfloat16), ow_ref[0],
                    preferred_element_type=jnp.float32) + ob_ref[0]

    # ---- MLP block (pre-LN, quick_gelu) ----
    hn = _layernorm(h, ln2g_ref[0], ln2b_ref[0])
    g = jnp.dot(hn.astype(jnp.bfloat16), fc1w_ref[0],
                preferred_element_type=jnp.float32) + fc1b_ref[0]
    g = g * jax.nn.sigmoid(1.702 * g)
    h = h + jnp.dot(g.astype(jnp.bfloat16), fc2w_ref[0],
                    preferred_element_type=jnp.float32) + fc2b_ref[0]

    h_scr[...] = h

    @pl.when(layer == pl.num_programs(0) - 1)
    def _():
        out_ref[...] = h


def encoder_pallas(h0, p):
    def wspec(shape):
        n = len(shape)
        return pl.BlockSpec((1,) + shape, lambda l, _n=n: (l,) + (0,) * _n)

    grid_spec = pltpu.PrefetchScalarGridSpec(
        num_scalar_prefetch=0,
        grid=(NUM_LAYERS,),
        in_specs=[
            pl.BlockSpec((ROWS, D), lambda l: (0, 0)),   # h0 (resident)
            wspec((1, D)),            # ln1_g
            wspec((1, D)),            # ln1_b
            wspec((D, 3 * D)),        # qkv_w (fused)
            wspec((1, 3 * D)),        # qkv_b
            wspec((D, D)),            # o_w
            wspec((1, D)),            # o_b
            wspec((1, D)),            # ln2_g
            wspec((1, D)),            # ln2_b
            wspec((D, MLP_DIM)),      # fc1_w
            wspec((1, MLP_DIM)),      # fc1_b
            wspec((MLP_DIM, D)),      # fc2_w
            wspec((1, D)),            # fc2_b
        ],
        out_specs=pl.BlockSpec((ROWS, D), lambda l: (0, 0)),
        scratch_shapes=[pltpu.VMEM((ROWS, D), jnp.float32)],
    )
    return pl.pallas_call(
        _encoder_kernel,
        out_shape=jax.ShapeDtypeStruct((ROWS, D), jnp.float32),
        grid_spec=grid_spec,
        compiler_params=pltpu.CompilerParams(dimension_semantics=("arbitrary",)),
    )(h0,
      p["ln1_g"], p["ln1_b"], p["qkv_w"], p["qkv_b"], p["o_w"], p["o_b"],
      p["ln2_g"], p["ln2_b"], p["fc1_w"], p["fc1_b"], p["fc2_w"], p["fc2_b"])


# ---------------- kernel 3: pooled-CLS tail (post-LN -> proj -> Linear/ReLU/Linear) ----------------
def _head_kernel(x_ref, g_ref, b_ref, projw_ref, m1w_ref, m1b_ref, m2w_ref, m2b_ref, o_ref):
    x = _layernorm(x_ref[...], g_ref[...], b_ref[...])
    f = jnp.dot(x.astype(jnp.bfloat16), projw_ref[...],
                preferred_element_type=jnp.float32)            # visual_projection, no bias
    y = jnp.dot(f.astype(jnp.bfloat16), m1w_ref[...],
                preferred_element_type=jnp.float32) + m1b_ref[...]
    y = jnp.maximum(y, 0.0)                                    # ReLU
    y = jnp.dot(y.astype(jnp.bfloat16), m2w_ref[...],
                preferred_element_type=jnp.float32) + m2b_ref[...]
    o_ref[...] = y


def head_pallas(pooled, p):
    return pl.pallas_call(
        _head_kernel,
        out_shape=jax.ShapeDtypeStruct((BATCH, OUT_DIM), jnp.float32),
        in_specs=[_full_spec((BATCH, D)), _full_spec((1, D)), _full_spec((1, D)),
                  _full_spec((D, PROJ_DIM)),
                  _full_spec((PROJ_DIM, PROJ_DIM)), _full_spec((1, PROJ_DIM)),
                  _full_spec((PROJ_DIM, OUT_DIM)), _full_spec((1, OUT_DIM))],
        out_specs=_full_spec((BATCH, OUT_DIM)),
    )(pooled, p["post_ln_g"], p["post_ln_b"], p["proj_w"],
      p["mlp1_w"], p["mlp1_b"], p["mlp2_w"], p["mlp2_b"])


# ---------------- parameter init (deterministic; weights stored bf16) ----------------
def init_params(key):
    keys = iter(jax.random.split(key, 32))

    def nrm(shape, dtype=jnp.float32, std=0.02):
        return (jax.random.normal(next(keys), shape, jnp.float32) * std).astype(dtype)

    L = NUM_LAYERS
    return {
        "patch_w": nrm((CPP, D), jnp.bfloat16),                 # conv-as-matmul, no bias
        "class_emb": nrm((D,)),
        "pos_emb": nrm((SEQ, D)),
        "pre_ln_g": jnp.ones((1, D), jnp.float32),
        "pre_ln_b": jnp.zeros((1, D), jnp.float32),
        # stacked per-layer weights [L, ...]
        "ln1_g": jnp.ones((L, 1, D), jnp.float32),
        "ln1_b": jnp.zeros((L, 1, D), jnp.float32),
        "qkv_w": nrm((L, D, 3 * D), jnp.bfloat16),
        "qkv_b": jnp.zeros((L, 1, 3 * D), jnp.float32),
        "o_w": nrm((L, D, D), jnp.bfloat16),
        "o_b": jnp.zeros((L, 1, D), jnp.float32),
        "ln2_g": jnp.ones((L, 1, D), jnp.float32),
        "ln2_b": jnp.zeros((L, 1, D), jnp.float32),
        "fc1_w": nrm((L, D, MLP_DIM), jnp.bfloat16),
        "fc1_b": jnp.zeros((L, 1, MLP_DIM), jnp.float32),
        "fc2_w": nrm((L, MLP_DIM, D), jnp.bfloat16),
        "fc2_b": jnp.zeros((L, 1, D), jnp.float32),
        # pooled tail
        "post_ln_g": jnp.ones((1, D), jnp.float32),
        "post_ln_b": jnp.zeros((1, D), jnp.float32),
        "proj_w": nrm((D, PROJ_DIM), jnp.bfloat16),             # visual projection, no bias
        "mlp1_w": nrm((PROJ_DIM, PROJ_DIM), jnp.bfloat16),
        "mlp1_b": jnp.zeros((1, PROJ_DIM), jnp.float32),
        "mlp2_w": nrm((PROJ_DIM, OUT_DIM), jnp.bfloat16),
        "mlp2_b": jnp.zeros((1, OUT_DIM), jnp.float32),
    }


# ---------------- forward (CLIP.get_image_features + mlp head) ----------------
def image_encoder_forward(x, params):
    B_, C, Himg, Wimg = x.shape
    nH, nW = Himg // PATCH, Wimg // PATCH
    npatch = nH * nW

    # im2col: stride-P / kernel-P conv == patch extraction + matmul (no bias)
    patches = x.reshape(B_, C, nH, PATCH, nW, PATCH).transpose(0, 2, 4, 1, 3, 5)
    patches = patches.reshape(B_, npatch, CPP)
    # padded sequence layout: row 0 = CLS (zeros), rows 1..npatch = patches, rest = pad (zeros)
    patches_ext = jnp.zeros((B_, SEQ_PAD, CPP), jnp.float32)
    patches_ext = patches_ext.at[:, 1:1 + npatch, :].set(patches)
    patches_ext = patches_ext.reshape(B_ * SEQ_PAD, CPP)

    # per-token additive term: class embedding on row 0 + positional embeddings (zeros on pad rows)
    tok = jnp.zeros((SEQ_PAD, D), jnp.float32)
    tok = tok.at[:SEQ, :].set(params["pos_emb"])
    tok = tok.at[0, :].add(params["class_emb"])
    tok = jnp.tile(tok, (B_, 1))                               # [ROWS, D]

    h0 = embed_pallas(patches_ext, tok, params)                # patch embed + cls/pos + pre-LN
    h = encoder_pallas(h0, params)                             # all transformer layers, one call
    pooled = h.reshape(B_, SEQ_PAD, D)[:, 0, :]                # CLS token
    return head_pallas(pooled, params)                         # post-LN + proj + GeoCLIP MLP head


if __name__ == "__main__":
    key = jax.random.PRNGKey(0)
    k_params, k_x = jax.random.split(key)
    params = init_params(k_params)
    x = jax.random.normal(k_x, (BATCH, CIN, IMG, IMG), dtype=jnp.float32)  # NCHW pixel values

    out = jax.jit(image_encoder_forward)(x, params)
    out = jax.block_until_ready(out)
    assert out.shape == (BATCH, OUT_DIM), out.shape
    assert jnp.all(jnp.isfinite(out))
    print("KERNEL_OK")
</pallas_src>

<mosaic_0001>
module attributes {stable_mosaic.version = 11 : i64} {
  func.func @_embed_kernel(%arg0: memref<16x192xf32, #tpu.memory_space<vmem>>, %arg1: memref<192x256xbf16, #tpu.memory_space<vmem>>, %arg2: memref<16x256xf32, #tpu.memory_space<vmem>>, %arg3: memref<1x256xf32, #tpu.memory_space<vmem>>, %arg4: memref<1x256xf32, #tpu.memory_space<vmem>>, %arg5: memref<16x256xf32, #tpu.memory_space<vmem>>) attributes {dimension_semantics = [], scalar_prefetch = 0 : i64, scratch_operands = 0 : i64, tpu.core_type = #tpu.core_type<tc>} {
    %c0 = arith.constant 0 : index
    %c0_0 = arith.constant 0 : index
    %0 = vector.load %arg0[%c0, %c0_0] : memref<16x192xf32, #tpu.memory_space<vmem>>, vector<16x192xf32>
    %1 = arith.truncf %0 : vector<16x192xf32> to vector<16x192xbf16>
    %c0_1 = arith.constant 0 : index
    %c0_2 = arith.constant 0 : index
    %2 = vector.load %arg1[%c0_1, %c0_2] : memref<192x256xbf16, #tpu.memory_space<vmem>>, vector<192x256xbf16>
    %cst = arith.constant dense<0.000000e+00> : vector<16x256xf32>
    %3 = tpu.matmul %1, %2, %cst {dimension_numbers = #tpu.dot_dimension_numbers<[1], [0], [0], [1], [0, 0, 1, 1], [], []>} : vector<16x192xbf16>, vector<192x256xbf16>, vector<16x256xf32> -> vector<16x256xf32>
    %c0_3 = arith.constant 0 : index
    %c0_4 = arith.constant 0 : index
    %4 = vector.load %arg2[%c0_3, %c0_4] : memref<16x256xf32, #tpu.memory_space<vmem>>, vector<16x256xf32>
    %5 = arith.addf %3, %4 : vector<16x256xf32>
    %c0_5 = arith.constant 0 : index
    %c0_6 = arith.constant 0 : index
    %6 = vector.load %arg3[%c0_5, %c0_6] : memref<1x256xf32, #tpu.memory_space<vmem>>, vector<1x256xf32>
    %c0_7 = arith.constant 0 : index
    %c0_8 = arith.constant 0 : index
    %7 = vector.load %arg4[%c0_7, %c0_8] : memref<1x256xf32, #tpu.memory_space<vmem>>, vector<1x256xf32>
    %cst_9 = arith.constant dense<0.000000e+00> : vector<16xf32>
    %8 = vector.multi_reduction <add>, %5, %cst_9 [1] : vector<16x256xf32> to vector<16xf32>
    %9 = vector.shape_cast %8 : vector<16xf32> to vector<16x1xf32>
    %cst_10 = arith.constant 2.560000e+02 : f32
    %10 = vector.broadcast %cst_10 : f32 to vector<16x1xf32>
    %11 = arith.divf %9, %10 : vector<16x1xf32>
    %12 = vector.broadcast %11 : vector<16x1xf32> to vector<16x256xf32>
    %13 = arith.subf %5, %12 : vector<16x256xf32>
    %14 = arith.mulf %13, %13 : vector<16x256xf32>
    %cst_11 = arith.constant dense<0.000000e+00> : vector<16xf32>
    %15 = vector.multi_reduction <add>, %14, %cst_11 [1] : vector<16x256xf32> to vector<16xf32>
    %16 = vector.shape_cast %15 : vector<16xf32> to vector<16x1xf32>
    %cst_12 = arith.constant 2.560000e+02 : f32
    %17 = vector.broadcast %cst_12 : f32 to vector<16x1xf32>
    %18 = arith.divf %16, %17 : vector<16x1xf32>
    %cst_13 = arith.constant 9.99999974E-6 : f32
    %19 = vector.broadcast %cst_13 : f32 to vector<16x1xf32>
    %20 = arith.addf %18, %19 : vector<16x1xf32>
    %21 = math.rsqrt %20 : vector<16x1xf32>
    %22 = vector.broadcast %21 : vector<16x1xf32> to vector<16x256xf32>
    %23 = arith.mulf %13, %22 : vector<16x256xf32>
    %24 = vector.broadcast %6 : vector<1x256xf32> to vector<16x256xf32>
    %25 = arith.mulf %23, %24 : vector<16x256xf32>
    %26 = vector.broadcast %7 : vector<1x256xf32> to vector<16x256xf32>
    %27 = arith.addf %25, %26 : vector<16x256xf32>
    %c0_14 = arith.constant 0 : index
    %c0_15 = arith.constant 0 : index
    %28 = vector.load %arg5[%c0_14, %c0_15] : memref<16x256xf32, #tpu.memory_space<vmem>>, vector<16x256xf32>
    tpu.vector_store %arg5[%c0_14, %c0_15], %27 {strides = array<i32>} : memref<16x256xf32, #tpu.memory_space<vmem>>, vector<16x256xf32>,
    return
  }
}

module attributes {stable_mosaic.version = 11 : i64} {
  func.func @_encoder_kernel(%arg0: i32, %arg1: memref<16x256xf32, #tpu.memory_space<vmem>>, %arg2: memref<1x1x256xf32, #tpu.memory_space<vmem>>, %arg3: memref<1x1x256xf32, #tpu.memory_space<vmem>>, %arg4: memref<1x256x768xbf16, #tpu.memory_space<vmem>>, %arg5: memref<1x1x768xf32, #tpu.memory_space<vmem>>, %arg6: memref<1x256x256xbf16, #tpu.memory_space<vmem>>, %arg7: memref<1x1x256xf32, #tpu.memory_space<vmem>>, %arg8: memref<1x1x256xf32, #tpu.memory_space<vmem>>, %arg9: memref<1x1x256xf32, #tpu.memory_space<vmem>>, %arg10: memref<1x256x1024xbf16, #tpu.memory_space<vmem>>, %arg11: memref<1x1x1024xf32, #tpu.memory_space<vmem>>, %arg12: memref<1x1024x256xbf16, #tpu.memory_space<vmem>>, %arg13: memref<1x1x256xf32, #tpu.memory_space<vmem>>, %arg14: memref<16x256xf32, #tpu.memory_space<vmem>>, %arg15: memref<16x256xf32, #tpu.memory_space<vmem>>) attributes {dimension_semantics = [#tpu.dimension_semantics<arbitrary>], iteration_bounds = array<i64: 2>, scalar_prefetch = 0 : i64, scratch_operands = 1 : i64, tpu.core_type = #tpu.core_type<tc>, window_params = [{pipeline_mode = #tpu.pipeline_mode<synchronous>, transform_indices = @transform_0, window_bounds = array<i64: 16, 256>}, {transform_indices = @transform_1, window_bounds = array<i64: 1, 1, 256>}, {transform_indices = @transform_2, window_bounds = array<i64: 1, 1, 256>}, {transform_indices = @transform_3, window_bounds = array<i64: 1, 256, 768>}, {transform_indices = @transform_4, window_bounds = array<i64: 1, 1, 768>}, {transform_indices = @transform_5, window_bounds = array<i64: 1, 256, 256>}, {transform_indices = @transform_6, window_bounds = array<i64: 1, 1, 256>}, {transform_indices = @transform_7, window_bounds = array<i64: 1, 1, 256>}, {transform_indices = @transform_8, window_bounds = array<i64: 1, 1, 256>}, {transform_indices = @transform_9, window_bounds = array<i64: 1, 256, 1024>}, {transform_indices = @transform_10, window_bounds = array<i64: 1, 1, 1024>}, {transform_indices = @transform_11, window_bounds = array<i64: 1, 1024, 256>}, {transform_indices = @transform_12, window_bounds = array<i64: 1, 1, 256>}, {pipeline_mode = #tpu.pipeline_mode<synchronous>, transform_indices = @transform_13, window_bounds = array<i64: 16, 256>}]} {
    %c0_i32 = arith.constant 0 : i32
    %0 = arith.cmpi eq, %arg0, %c0_i32 : i32
    %1 = arith.extui %0 : i1 to i32
    %c0_i32_0 = arith.constant 0 : i32
    %2 = arith.cmpi ne, %1, %c0_i32_0 : i32
    scf.if %2 {
      %c0_75 = arith.constant 0 : index
      %c0_76 = arith.constant 0 : index
      %198 = vector.load %arg1[%c0_75, %c0_76] : memref<16x256xf32, #tpu.memory_space<vmem>>, vector<16x256xf32>
      %c0_77 = arith.constant 0 : index
      %c0_78 = arith.constant 0 : index
      %199 = vector.load %arg15[%c0_77, %c0_78] : memref<16x256xf32, #tpu.memory_space<vmem>>, vector<16x256xf32>
      tpu.vector_store %arg15[%c0_77, %c0_78], %198 {strides = array<i32>} : memref<16x256xf32, #tpu.memory_space<vmem>>, vector<16x256xf32>,
    } else {
    }
    %c0 = arith.constant 0 : index
    %c0_1 = arith.constant 0 : index
    %3 = vector.load %arg15[%c0, %c0_1] : memref<16x256xf32, #tpu.memory_space<vmem>>, vector<16x256xf32>
    %c0_2 = arith.constant 0 : index
    %c0_3 = arith.constant 0 : index
    %c0_4 = arith.constant 0 : index
    %4 = vector.load %arg2[%c0_2, %c0_3, %c0_4] : memref<1x1x256xf32, #tpu.memory_space<vmem>>, vector<1x1x256xf32>
    %5 = vector.shape_cast %4 : vector<1x1x256xf32> to vector<1x256xf32>
    %c0_5 = arith.constant 0 : index
    %c0_6 = arith.constant 0 : index
    %c0_7 = arith.constant 0 : index
    %6 = vector.load %arg3[%c0_5, %c0_6, %c0_7] : memref<1x1x256xf32, #tpu.memory_space<vmem>>, vector<1x1x256xf32>
    %7 = vector.shape_cast %6 : vector<1x1x256xf32> to vector<1x256xf32>
    %cst = arith.constant dense<0.000000e+00> : vector<16xf32>
    %8 = vector.multi_reduction <add>, %3, %cst [1] : vector<16x256xf32> to vector<16xf32>
    %9 = vector.shape_cast %8 : vector<16xf32> to vector<16x1xf32>
    %cst_8 = arith.constant 2.560000e+02 : f32
    %10 = vector.broadcast %cst_8 : f32 to vector<16x1xf32>
    %11 = arith.divf %9, %10 : vector<16x1xf32>
    %12 = vector.broadcast %11 : vector<16x1xf32> to vector<16x256xf32>
    %13 = arith.subf %3, %12 : vector<16x256xf32>
    %14 = arith.mulf %13, %13 : vector<16x256xf32>
    %cst_9 = arith.constant dense<0.000000e+00> : vector<16xf32>
    %15 = vector.multi_reduction <add>, %14, %cst_9 [1] : vector<16x256xf32> to vector<16xf32>
    %16 = vector.shape_cast %15 : vector<16xf32> to vector<16x1xf32>
    %cst_10 = arith.constant 2.560000e+02 : f32
    %17 = vector.broadcast %cst_10 : f32 to vector<16x1xf32>
    %18 = arith.divf %16, %17 : vector<16x1xf32>
    %cst_11 = arith.constant 9.99999974E-6 : f32
    %19 = vector.broadcast %cst_11 : f32 to vector<16x1xf32>
    %20 = arith.addf %18, %19 : vector<16x1xf32>
    %21 = math.rsqrt %20 : vector<16x1xf32>
    %22 = vector.broadcast %21 : vector<16x1xf32> to vector<16x256xf32>
    %23 = arith.mulf %13, %22 : vector<16x256xf32>
    %24 = vector.broadcast %5 : vector<1x256xf32> to vector<16x256xf32>
    %25 = arith.mulf %23, %24 : vector<16x256xf32>
    %26 = vector.broadcast %7 : vector<1x256xf32> to vector<16x256xf32>
    %27 = arith.addf %25, %26 : vector<16x256xf32>
    %28 = arith.truncf %27 : vector<16x256xf32> to vector<16x256xbf16>
    %c0_12 = arith.constant 0 : index
    %c0_13 = arith.constant 0 : index
    %c0_14 = arith.constant 0 : index
    %29 = vector.load %arg4[%c0_12, %c0_13, %c0_14] : memref<1x256x768xbf16, #tpu.memory_space<vmem>>, vector<1x256x768xbf16>
    %30 = vector.shape_cast %29 : vector<1x256x768xbf16> to vector<256x768xbf16>
    %cst_15 = arith.constant dense<0.000000e+00> : vector<16x768xf32>
    %31 = tpu.matmul %28, %30, %cst_15 {dimension_numbers = #tpu.dot_dimension_numbers<[1], [0], [0], [1], [0, 0, 1, 1], [], []>} : vector<16x256xbf16>, vector<256x768xbf16>, vector<16x768xf32> -> vector<16x768xf32>
    %c0_16 = arith.constant 0 : index
    %c0_17 = arith.constant 0 : index
    %c0_18 = arith.constant 0 : index
    %32 = vector.load %arg5[%c0_16, %c0_17, %c0_18] : memref<1x1x768xf32, #tpu.memory_space<vmem>>, vector<1x1x768xf32>
    %33 = vector.shape_cast %32 : vector<1x1x768xf32> to vector<1x768xf32>
    %34 = vector.broadcast %33 : vector<1x768xf32> to vector<16x768xf32>
    %35 = arith.addf %31, %34 : vector<16x768xf32>
    %36 = vector.extract_strided_slice %35 {offsets = [0, 0], sizes = [16, 256], strides = [1, 1]} : vector<16x768xf32> to vector<16x256xf32>
    %cst_19 = arith.constant 0.0883883461 : f32
    %37 = vector.broadcast %cst_19 : f32 to vector<16x256xf32>
    %38 = arith.mulf %36, %37 : vector<16x256xf32>
    %39 = vector.extract_strided_slice %35 {offsets = [0, 256], sizes = [16, 256], strides = [1, 1]} : vector<16x768xf32> to vector<16x256xf32>
    %40 = vector.extract_strided_slice %35 {offsets = [0, 512], sizes = [16, 256], strides = [1, 1]} : vector<16x768xf32> to vector<16x256xf32>
    %41 = tpu.iota {dimensions = array<i32: 1>} : vector<8x8xi32>
    %c5_i32 = arith.constant 5 : i32
    %42 = vector.broadcast %c5_i32 : i32 to vector<8x8xi32>
    %43 = arith.cmpi sge, %41, %42 : vector<8x8xi32>
    %cst_20 = arith.constant -1.000000e+30 : f32
    %cst_21 = arith.constant 0.000000e+00 : f32
    %44 = vector.broadcast %cst_20 : f32 to vector<8x8xf32>
    %45 = vector.broadcast %cst_21 : f32 to vector<8x8xf32>
    %46 = arith.select %43, %44, %45 : vector<8x8xi1>, vector<8x8xf32>
    %47 = vector.extract_strided_slice %38 {offsets = [0, 0], sizes = [8, 256], strides = [1, 1]} : vector<16x256xf32> to vector<8x256xf32>
    %48 = vector.extract_strided_slice %39 {offsets = [0, 0], sizes = [8, 256], strides = [1, 1]} : vector<16x256xf32> to vector<8x256xf32>
    %49 = vector.extract_strided_slice %40 {offsets = [0, 0], sizes = [8, 256], strides = [1, 1]} : vector<16x256xf32> to vector<8x256xf32>
    %50 = vector.extract_strided_slice %47 {offsets = [0, 0], sizes = [8, 128], strides = [1, 1]} : vector<8x256xf32> to vector<8x128xf32>
    %51 = arith.truncf %50 : vector<8x128xf32> to vector<8x128xbf16>
    %52 = vector.extract_strided_slice %48 {offsets = [0, 0], sizes = [8, 128], strides = [1, 1]} : vector<8x256xf32> to vector<8x128xf32>
    %53 = arith.truncf %52 : vector<8x128xf32> to vector<8x128xbf16>
    %54 = vector.extract_strided_slice %49 {offsets = [0, 0], sizes = [8, 128], strides = [1, 1]} : vector<8x256xf32> to vector<8x128xf32>
    %55 = arith.truncf %54 : vector<8x128xf32> to vector<8x128xbf16>
    %cst_22 = arith.constant dense<0.000000e+00> : vector<8x8xf32>
    %56 = tpu.matmul %51, %53, %cst_22 {dimension_numbers = #tpu.dot_dimension_numbers<[1], [1], [0], [0], [0, 0, 1, 0], [], []>} : vector<8x128xbf16>, vector<8x128xbf16>, vector<8x8xf32> -> vector<8x8xf32>
    %57 = arith.addf %56, %46 : vector<8x8xf32>
    %cst_23 = arith.constant dense<0xFF800000> : vector<8xf32>
    %58 = vector.multi_reduction <maximumf>, %57, %cst_23 [1] : vector<8x8xf32> to vector<8xf32>
    %59 = vector.shape_cast %58 : vector<8xf32> to vector<8x1xf32>
    %60 = vector.broadcast %59 : vector<8x1xf32> to vector<8x8xf32>
    %61 = arith.subf %57, %60 : vector<8x8xf32>
    %62 = math.exp %61 : vector<8x8xf32>
    %cst_24 = arith.constant dense<0.000000e+00> : vector<8xf32>
    %63 = vector.multi_reduction <add>, %62, %cst_24 [1] : vector<8x8xf32> to vector<8xf32>
    %64 = vector.shape_cast %63 : vector<8xf32> to vector<8x1xf32>
    %65 = tpu.reciprocal %64 {approx = true} : vector<8x1xf32> -> vector<8x1xf32>
    %66 = vector.broadcast %65 : vector<8x1xf32> to vector<8x8xf32>
    %67 = arith.mulf %62, %66 : vector<8x8xf32>
    %68 = arith.truncf %67 : vector<8x8xf32> to vector<8x8xbf16>
    %cst_25 = arith.constant dense<0.000000e+00> : vector<8x128xf32>
    %69 = tpu.matmul %68, %55, %cst_25 {dimension_numbers = #tpu.dot_dimension_numbers<[1], [0], [0], [1], [0, 0, 1, 1], [], []>} : vector<8x8xbf16>, vector<8x128xbf16>, vector<8x128xf32> -> vector<8x128xf32>
    %70 = vector.extract_strided_slice %47 {offsets = [0, 128], sizes = [8, 128], strides = [1, 1]} : vector<8x256xf32> to vector<8x128xf32>
    %71 = arith.truncf %70 : vector<8x128xf32> to vector<8x128xbf16>
    %72 = vector.extract_strided_slice %48 {offsets = [0, 128], sizes = [8, 128], strides = [1, 1]} : vector<8x256xf32> to vector<8x128xf32>
    %73 = arith.truncf %72 : vector<8x128xf32> to vector<8x128xbf16>
    %74 = vector.extract_strided_slice %49 {offsets = [0, 128], sizes = [8, 128], strides = [1, 1]} : vector<8x256xf32> to vector<8x128xf32>
    %75 = arith.truncf %74 : vector<8x128xf32> to vector<8x128xbf16>
    %cst_26 = arith.constant dense<0.000000e+00> : vector<8x8xf32>
    %76 = tpu.matmul %71, %73, %cst_26 {dimension_numbers = #tpu.dot_dimension_numbers<[1], [1], [0], [0], [0, 0, 1, 0], [], []>} : vector<8x128xbf16>, vector<8x128xbf16>, vector<8x8xf32> -> vector<8x8xf32>
    %77 = arith.addf %76, %46 : vector<8x8xf32>
    %cst_27 = arith.constant dense<0xFF800000> : vector<8xf32>
    %78 = vector.multi_reduction <maximumf>, %77, %cst_27 [1] : vector<8x8xf32> to vector<8xf32>
    %79 = vector.shape_cast %78 : vector<8xf32> to vector<8x1xf32>
    %80 = vector.broadcast %79 : vector<8x1xf32> to vector<8x8xf32>
    %81 = arith.subf %77, %80 : vector<8x8xf32>
    %82 = math.exp %81 : vector<8x8xf32>
    %cst_28 = arith.constant dense<0.000000e+00> : vector<8xf32>
    %83 = vector.multi_reduction <add>, %82, %cst_28 [1] : vector<8x8xf32> to vector<8xf32>
    %84 = vector.shape_cast %83 : vector<8xf32> to vector<8x1xf32>
    %85 = tpu.reciprocal %84 {approx = true} : vector<8x1xf32> -> vector<8x1xf32>
    %86 = vector.broadcast %85 : vector<8x1xf32> to vector<8x8xf32>
    %87 = arith.mulf %82, %86 : vector<8x8xf32>
    %88 = arith.truncf %87 : vector<8x8xf32> to vector<8x8xbf16>
    %cst_29 = arith.constant dense<0.000000e+00> : vector<8x128xf32>
    %89 = tpu.matmul %88, %75, %cst_29 {dimension_numbers = #tpu.dot_dimension_numbers<[1], [0], [0], [1], [0, 0, 1, 1], [], []>} : vector<8x8xbf16>, vector<8x128xbf16>, vector<8x128xf32> -> vector<8x128xf32>
    %90 = tpu.concatenate %69, %89 in 1 : vector<8x128xf32>, vector<8x128xf32> -> vector<8x256xf32>
    %91 = vector.extract_strided_slice %38 {offsets = [8, 0], sizes = [8, 256], strides = [1, 1]} : vector<16x256xf32> to vector<8x256xf32>
    %92 = vector.extract_strided_slice %39 {offsets = [8, 0], sizes = [8, 256], strides = [1, 1]} : vector<16x256xf32> to vector<8x256xf32>
    %93 = vector.extract_strided_slice %40 {offsets = [8, 0], sizes = [8, 256], strides = [1, 1]} : vector<16x256xf32> to vector<8x256xf32>
    %94 = vector.extract_strided_slice %91 {offsets = [0, 0], sizes = [8, 128], strides = [1, 1]} : vector<8x256xf32> to vector<8x128xf32>
    %95 = arith.truncf %94 : vector<8x128xf32> to vector<8x128xbf16>
    %96 = vector.extract_strided_slice %92 {offsets = [0, 0], sizes = [8, 128], strides = [1, 1]} : vector<8x256xf32> to vector<8x128xf32>
    %97 = arith.truncf %96 : vector<8x128xf32> to vector<8x128xbf16>
    %98 = vector.extract_strided_slice %93 {offsets = [0, 0], sizes = [8, 128], strides = [1, 1]} : vector<8x256xf32> to vector<8x128xf32>
    %99 = arith.truncf %98 : vector<8x128xf32> to vector<8x128xbf16>
    %cst_30 = arith.constant dense<0.000000e+00> : vector<8x8xf32>
    %100 = tpu.matmul %95, %97, %cst_30 {dimension_numbers = #tpu.dot_dimension_numbers<[1], [1], [0], [0], [0, 0, 1, 0], [], []>} : vector<8x128xbf16>, vector<8x128xbf16>, vector<8x8xf32> -> vector<8x8xf32>
    %101 = arith.addf %100, %46 : vector<8x8xf32>
    %cst_31 = arith.constant dense<0xFF800000> : vector<8xf32>
    %102 = vector.multi_reduction <maximumf>, %101, %cst_31 [1] : vector<8x8xf32> to vector<8xf32>
    %103 = vector.shape_cast %102 : vector<8xf32> to vector<8x1xf32>
    %104 = vector.broadcast %103 : vector<8x1xf32> to vector<8x8xf32>
    %105 = arith.subf %101, %104 : vector<8x8xf32>
    %106 = math.exp %105 : vector<8x8xf32>
    %cst_32 = arith.constant dense<0.000000e+00> : vector<8xf32>
    %107 = vector.multi_reduction <add>, %106, %cst_32 [1] : vector<8x8xf32> to vector<8xf32>
    %108 = vector.shape_cast %107 : vector<8xf32> to vector<8x1xf32>
    %109 = tpu.reciprocal %108 {approx = true} : vector<8x1xf32> -> vector<8x1xf32>
    %110 = vector.broadcast %109 : vector<8x1xf32> to vector<8x8xf32>
    %111 = arith.mulf %106, %110 : vector<8x8xf32>
    %112 = arith.truncf %111 : vector<8x8xf32> to vector<8x8xbf16>
    %cst_33 = arith.constant dense<0.000000e+00> : vector<8x128xf32>
    %113 = tpu.matmul %112, %99, %cst_33 {dimension_numbers = #tpu.dot_dimension_numbers<[1], [0], [0], [1], [0, 0, 1, 1], [], []>} : vector<8x8xbf16>, vector<8x128xbf16>, vector<8x128xf32> -> vector<8x128xf32>
    %114 = vector.extract_strided_slice %91 {offsets = [0, 128], sizes = [8, 128], strides = [1, 1]} : vector<8x256xf32> to vector<8x128xf32>
    %115 = arith.truncf %114 : vector<8x128xf32> to vector<8x128xbf16>
    %116 = vector.extract_strided_slice %92 {offsets = [0, 128], sizes = [8, 128], strides = [1, 1]} : vector<8x256xf32> to vector<8x128xf32>
    %117 = arith.truncf %116 : vector<8x128xf32> to vector<8x128xbf16>
    %118 = vector.extract_strided_slice %93 {offsets = [0, 128], sizes = [8, 128], strides = [1, 1]} : vector<8x256xf32> to vector<8x128xf32>
    %119 = arith.truncf %118 : vector<8x128xf32> to vector<8x128xbf16>
    %cst_34 = arith.constant dense<0.000000e+00> : vector<8x8xf32>
    %120 = tpu.matmul %115, %117, %cst_34 {dimension_numbers = #tpu.dot_dimension_numbers<[1], [1], [0], [0], [0, 0, 1, 0], [], []>} : vector<8x128xbf16>, vector<8x128xbf16>, vector<8x8xf32> -> vector<8x8xf32>
    %121 = arith.addf %120, %46 : vector<8x8xf32>
    %cst_35 = arith.constant dense<0xFF800000> : vector<8xf32>
    %122 = vector.multi_reduction <maximumf>, %121, %cst_35 [1] : vector<8x8xf32> to vector<8xf32>
    %123 = vector.shape_cast %122 : vector<8xf32> to vector<8x1xf32>
    %124 = vector.broadcast %123 : vector<8x1xf32> to vector<8x8xf32>
    %125 = arith.subf %121, %124 : vector<8x8xf32>
    %126 = math.exp %125 : vector<8x8xf32>
    %cst_36 = arith.constant dense<0.000000e+00> : vector<8xf32>
    %127 = vector.multi_reduction <add>, %126, %cst_36 [1] : vector<8x8xf32> to vector<8xf32>
    %128 = vector.shape_cast %127 : vector<8xf32> to vector<8x1xf32>
    %129 = tpu.reciprocal %128 {approx = true} : vector<8x1xf32> -> vector<8x1xf32>
    %130 = vector.broadcast %129 : vector<8x1xf32> to vector<8x8xf32>
    %131 = arith.mulf %126, %130 : vector<8x8xf32>
    %132 = arith.truncf %131 : vector<8x8xf32> to vector<8x8xbf16>
    %cst_37 = arith.constant dense<0.000000e+00> : vector<8x128xf32>
    %133 = tpu.matmul %132, %119, %cst_37 {dimension_numbers = #tpu.dot_dimension_numbers<[1], [0], [0], [1], [0, 0, 1, 1], [], []>} : vector<8x8xbf16>, vector<8x128xbf16>, vector<8x128xf32> -> vector<8x128xf32>
    %134 = tpu.concatenate %113, %133 in 1 : vector<8x128xf32>, vector<8x128xf32> -> vector<8x256xf32>
    %135 = tpu.concatenate %90, %134 in 0 : vector<8x256xf32>, vector<8x256xf32> -> vector<16x256xf32>
    %136 = arith.truncf %135 : vector<16x256xf32> to vector<16x256xbf16>
    %c0_38 = arith.constant 0 : index
    %c0_39 = arith.constant 0 : index
    %c0_40 = arith.constant 0 : index
    %137 = vector.load %arg6[%c0_38, %c0_39, %c0_40] : memref<1x256x256xbf16, #tpu.memory_space<vmem>>, vector<1x256x256xbf16>
    %138 = vector.shape_cast %137 : vector<1x256x256xbf16> to vector<256x256xbf16>
    %cst_41 = arith.constant dense<0.000000e+00> : vector<16x256xf32>
    %139 = tpu.matmul %136, %138, %cst_41 {dimension_numbers = #tpu.dot_dimension_numbers<[1], [0], [0], [1], [0, 0, 1, 1], [], []>} : vector<16x256xbf16>, vector<256x256xbf16>, vector<16x256xf32> -> vector<16x256xf32>
    %140 = arith.addf %3, %139 : vector<16x256xf32>
    %c0_42 = arith.constant 0 : index
    %c0_43 = arith.constant 0 : index
    %c0_44 = arith.constant 0 : index
    %141 = vector.load %arg7[%c0_42, %c0_43, %c0_44] : memref<1x1x256xf32, #tpu.memory_space<vmem>>, vector<1x1x256xf32>
    %142 = vector.shape_cast %141 : vector<1x1x256xf32> to vector<1x256xf32>
    %143 = vector.broadcast %142 : vector<1x256xf32> to vector<16x256xf32>
    %144 = arith.addf %140, %143 : vector<16x256xf32>
    %c0_45 = arith.constant 0 : index
    %c0_46 = arith.constant 0 : index
    %c0_47 = arith.constant 0 : index
    %145 = vector.load %arg8[%c0_45, %c0_46, %c0_47] : memref<1x1x256xf32, #tpu.memory_space<vmem>>, vector<1x1x256xf32>
    %146 = vector.shape_cast %145 : vector<1x1x256xf32> to vector<1x256xf32>
    %c0_48 = arith.constant 0 : index
    %c0_49 = arith.constant 0 : index
    %c0_50 = arith.constant 0 : index
    %147 = vector.load %arg9[%c0_48, %c0_49, %c0_50] : memref<1x1x256xf32, #tpu.memory_space<vmem>>, vector<1x1x256xf32>
    %148 = vector.shape_cast %147 : vector<1x1x256xf32> to vector<1x256xf32>
    %cst_51 = arith.constant dense<0.000000e+00> : vector<16xf32>
    %149 = vector.multi_reduction <add>, %144, %cst_51 [1] : vector<16x256xf32> to vector<16xf32>
    %150 = vector.shape_cast %149 : vector<16xf32> to vector<16x1xf32>
    %cst_52 = arith.constant 2.560000e+02 : f32
    %151 = vector.broadcast %cst_52 : f32 to vector<16x1xf32>
    %152 = arith.divf %150, %151 : vector<16x1xf32>
    %153 = vector.broadcast %152 : vector<16x1xf32> to vector<16x256xf32>
    %154 = arith.subf %144, %153 : vector<16x256xf32>
    %155 = arith.mulf %154, %154 : vector<16x256xf32>
    %cst_53 = arith.constant dense<0.000000e+00> : vector<16xf32>
    %156 = vector.multi_reduction <add>, %155, %cst_53 [1] : vector<16x256xf32> to vector<16xf32>
    %157 = vector.shape_cast %156 : vector<16xf32> to vector<16x1xf32>
    %cst_54 = arith.constant 2.560000e+02 : f32
    %158 = vector.broadcast %cst_54 : f32 to vector<16x1xf32>
    %159 = arith.divf %157, %158 : vector<16x1xf32>
    %cst_55 = arith.constant 9.99999974E-6 : f32
    %160 = vector.broadcast %cst_55 : f32 to vector<16x1xf32>
    %161 = arith.addf %159, %160 : vector<16x1xf32>
    %162 = math.rsqrt %161 : vector<16x1xf32>
    %163 = vector.broadcast %162 : vector<16x1xf32> to vector<16x256xf32>
    %164 = arith.mulf %154, %163 : vector<16x256xf32>
    %165 = vector.broadcast %146 : vector<1x256xf32> to vector<16x256xf32>
    %166 = arith.mulf %164, %165 : vector<16x256xf32>
    %167 = vector.broadcast %148 : vector<1x256xf32> to vector<16x256xf32>
    %168 = arith.addf %166, %167 : vector<16x256xf32>
    %169 = arith.truncf %168 : vector<16x256xf32> to vector<16x256xbf16>
    %c0_56 = arith.constant 0 : index
    %c0_57 = arith.constant 0 : index
    %c0_58 = arith.constant 0 : index
    %170 = vector.load %arg10[%c0_56, %c0_57, %c0_58] : memref<1x256x1024xbf16, #tpu.memory_space<vmem>>, vector<1x256x1024xbf16>
    %171 = vector.shape_cast %170 : vector<1x256x1024xbf16> to vector<256x1024xbf16>
    %cst_59 = arith.constant dense<0.000000e+00> : vector<16x1024xf32>
    %172 = tpu.matmul %169, %171, %cst_59 {dimension_numbers = #tpu.dot_dimension_numbers<[1], [0], [0], [1], [0, 0, 1, 1], [], []>} : vector<16x256xbf16>, vector<256x1024xbf16>, vector<16x1024xf32> -> vector<16x1024xf32>
    %c0_60 = arith.constant 0 : index
    %c0_61 = arith.constant 0 : index
    %c0_62 = arith.constant 0 : index
    %173 = vector.load %arg11[%c0_60, %c0_61, %c0_62] : memref<1x1x1024xf32, #tpu.memory_space<vmem>>, vector<1x1x1024xf32>
    %174 = vector.shape_cast %173 : vector<1x1x1024xf32> to vector<1x1024xf32>
    %175 = vector.broadcast %174 : vector<1x1024xf32> to vector<16x1024xf32>
    %176 = arith.addf %172, %175 : vector<16x1024xf32>
    %cst_63 = arith.constant 1.702000e+00 : f32
    %177 = vector.broadcast %cst_63 : f32 to vector<16x1024xf32>
    %178 = arith.mulf %177, %176 : vector<16x1024xf32>
    %179 = arith.negf %178 : vector<16x1024xf32>
    %180 = math.exp %179 : vector<16x1024xf32>
    %cst_64 = arith.constant 1.000000e+00 : f32
    %181 = vector.broadcast %cst_64 : f32 to vector<16x1024xf32>
    %182 = arith.addf %181, %180 : vector<16x1024xf32>
    %183 = arith.divf %181, %182 : vector<16x1024xf32>
    %184 = arith.mulf %176, %183 : vector<16x1024xf32>
    %185 = arith.truncf %184 : vector<16x1024xf32> to vector<16x1024xbf16>
    %c0_65 = arith.constant 0 : index
    %c0_66 = arith.constant 0 : index
    %c0_67 = arith.constant 0 : index
    %186 = vector.load %arg12[%c0_65, %c0_66, %c0_67] : memref<1x1024x256xbf16, #tpu.memory_space<vmem>>, vector<1x1024x256xbf16>
    %187 = vector.shape_cast %186 : vector<1x1024x256xbf16> to vector<1024x256xbf16>
    %cst_68 = arith.constant dense<0.000000e+00> : vector<16x256xf32>
    %188 = tpu.matmul %185, %187, %cst_68 {dimension_numbers = #tpu.dot_dimension_numbers<[1], [0], [0], [1], [0, 0, 1, 1], [], []>} : vector<16x1024xbf16>, vector<1024x256xbf16>, vector<16x256xf32> -> vector<16x256xf32>
    %189 = arith.addf %144, %188 : vector<16x256xf32>
    %c0_69 = arith.constant 0 : index
    %c0_70 = arith.constant 0 : index
    %c0_71 = arith.constant 0 : index
    %190 = vector.load %arg13[%c0_69, %c0_70, %c0_71] : memref<1x1x256xf32, #tpu.memory_space<vmem>>, vector<1x1x256xf32>
    %191 = vector.shape_cast %190 : vector<1x1x256xf32> to vector<1x256xf32>
    %192 = vector.broadcast %191 : vector<1x256xf32> to vector<16x256xf32>
    %193 = arith.addf %189, %192 : vector<16x256xf32>
    %c0_72 = arith.constant 0 : index
    %c0_73 = arith.constant 0 : index
    %194 = vector.load %arg15[%c0_72, %c0_73] : memref<16x256xf32, #tpu.memory_space<vmem>>, vector<16x256xf32>
    tpu.vector_store %arg15[%c0_72, %c0_73], %193 {strides = array<i32>} : memref<16x256xf32, #tpu.memory_space<vmem>>, vector<16x256xf32>,
    %c1_i32 = arith.constant 1 : i32
    %195 = arith.cmpi eq, %arg0, %c1_i32 : i32
    %196 = arith.extui %195 : i1 to i32
    %c0_i32_74 = arith.constant 0 : i32
    %197 = arith.cmpi ne, %196, %c0_i32_74 : i32
    scf.if %197 {
      %c0_75 = arith.constant 0 : index
      %c0_76 = arith.constant 0 : index
      %198 = vector.load %arg14[%c0_75, %c0_76] : memref<16x256xf32, #tpu.memory_space<vmem>>, vector<16x256xf32>
      tpu.vector_store %arg14[%c0_75, %c0_76], %193 {strides = array<i32>} : memref<16x256xf32, #tpu.memory_space<vmem>>, vector<16x256xf32>,
    } else {
    }
    return
  }
  func.func @transform_0(%arg0: i32) -> (i32, i32) {
    %c0_i32 = arith.constant 0 : i32
    %c0_i32_0 = arith.constant 0 : i32
    %c0_i32_1 = arith.constant 0 : i32
    return %c0_i32, %c0_i32_0 : i32, i32
  }
  func.func @transform_1(%arg0: i32) -> (i32, i32, i32) {
    %c0_i32 = arith.constant 0 : i32
    %c0_i32_0 = arith.constant 0 : i32
    %c0_i32_1 = arith.constant 0 : i32
    return %arg0, %c0_i32, %c0_i32_0 : i32, i32, i32
  }
  func.func @transform_2(%arg0: i32) -> (i32, i32, i32) {
    %c0_i32 = arith.constant 0 : i32
    %c0_i32_0 = arith.constant 0 : i32
    %c0_i32_1 = arith.constant 0 : i32
    return %arg0, %c0_i32, %c0_i32_0 : i32, i32, i32
  }
  func.func @transform_3(%arg0: i32) -> (i32, i32, i32) {
    %c0_i32 = arith.constant 0 : i32
    %c0_i32_0 = arith.constant 0 : i32
    %c0_i32_1 = arith.constant 0 : i32
    return %arg0, %c0_i32, %c0_i32_0 : i32, i32, i32
  }
  func.func @transform_4(%arg0: i32) -> (i32, i32, i32) {
    %c0_i32 = arith.constant 0 : i32
    %c0_i32_0 = arith.constant 0 : i32
    %c0_i32_1 = arith.constant 0 : i32
    return %arg0, %c0_i32, %c0_i32_0 : i32, i32, i32
  }
  func.func @transform_5(%arg0: i32) -> (i32, i32, i32) {
    %c0_i32 = arith.constant 0 : i32
    %c0_i32_0 = arith.constant 0 : i32
    %c0_i32_1 = arith.constant 0 : i32
    return %arg0, %c0_i32, %c0_i32_0 : i32, i32, i32
  }
  func.func @transform_6(%arg0: i32) -> (i32, i32, i32) {
    %c0_i32 = arith.constant 0 : i32
    %c0_i32_0 = arith.constant 0 : i32
    %c0_i32_1 = arith.constant 0 : i32
    return %arg0, %c0_i32, %c0_i32_0 : i32, i32, i32
  }
  func.func @transform_7(%arg0: i32) -> (i32, i32, i32) {
    %c0_i32 = arith.constant 0 : i32
    %c0_i32_0 = arith.constant 0 : i32
    %c0_i32_1 = arith.constant 0 : i32
    return %arg0, %c0_i32, %c0_i32_0 : i32, i32, i32
  }
  func.func @transform_8(%arg0: i32) -> (i32, i32, i32) {
    %c0_i32 = arith.constant 0 : i32
    %c0_i32_0 = arith.constant 0 : i32
    %c0_i32_1 = arith.constant 0 : i32
    return %arg0, %c0_i32, %c0_i32_0 : i32, i32, i32
  }
  func.func @transform_9(%arg0: i32) -> (i32, i32, i32) {
    %c0_i32 = arith.constant 0 : i32
    %c0_i32_0 = arith.constant 0 : i32
    %c0_i32_1 = arith.constant 0 : i32
    return %arg0, %c0_i32, %c0_i32_0 : i32, i32, i32
  }
  func.func @transform_10(%arg0: i32) -> (i32, i32, i32) {
    %c0_i32 = arith.constant 0 : i32
    %c0_i32_0 = arith.constant 0 : i32
    %c0_i32_1 = arith.constant 0 : i32
    return %arg0, %c0_i32, %c0_i32_0 : i32, i32, i32
  }
  func.func @transform_11(%arg0: i32) -> (i32, i32, i32) {
    %c0_i32 = arith.constant 0 : i32
    %c0_i32_0 = arith.constant 0 : i32
    %c0_i32_1 = arith.constant 0 : i32
    return %arg0, %c0_i32, %c0_i32_0 : i32, i32, i32
  }
  func.func @transform_12(%arg0: i32) -> (i32, i32, i32) {
    %c0_i32 = arith.constant 0 : i32
    %c0_i32_0 = arith.constant 0 : i32
    %c0_i32_1 = arith.constant 0 : i32
    return %arg0, %c0_i32, %c0_i32_0 : i32, i32, i32
  }
  func.func @transform_13(%arg0: i32) -> (i32, i32) {
    %c0_i32 = arith.constant 0 : i32
    %c0_i32_0 = arith.constant 0 : i32
    %c0_i32_1 = arith.constant 0 : i32
    return %c0_i32, %c0_i32_0 : i32, i32
  }
}

module attributes {stable_mosaic.version = 11 : i64} {
  func.func @_head_kernel(%arg0: memref<2x256xf32, #tpu.memory_space<vmem>>, %arg1: memref<1x256xf32, #tpu.memory_space<vmem>>, %arg2: memref<1x256xf32, #tpu.memory_space<vmem>>, %arg3: memref<256x128xbf16, #tpu.memory_space<vmem>>, %arg4: memref<128x128xbf16, #tpu.memory_space<vmem>>, %arg5: memref<1x128xf32, #tpu.memory_space<vmem>>, %arg6: memref<128x128xbf16, #tpu.memory_space<vmem>>, %arg7: memref<1x128xf32, #tpu.memory_space<vmem>>, %arg8: memref<2x128xf32, #tpu.memory_space<vmem>>) attributes {dimension_semantics = [], scalar_prefetch = 0 : i64, scratch_operands = 0 : i64, tpu.core_type = #tpu.core_type<tc>} {
    %c0 = arith.constant 0 : index
    %c0_0 = arith.constant 0 : index
    %0 = vector.load %arg0[%c0, %c0_0] : memref<2x256xf32, #tpu.memory_space<vmem>>, vector<2x256xf32>
    %c0_1 = arith.constant 0 : index
    %c0_2 = arith.constant 0 : index
    %1 = vector.load %arg1[%c0_1, %c0_2] : memref<1x256xf32, #tpu.memory_space<vmem>>, vector<1x256xf32>
    %c0_3 = arith.constant 0 : index
    %c0_4 = arith.constant 0 : index
    %2 = vector.load %arg2[%c0_3, %c0_4] : memref<1x256xf32, #tpu.memory_space<vmem>>, vector<1x256xf32>
    %cst = arith.constant dense<0.000000e+00> : vector<2xf32>
    %3 = vector.multi_reduction <add>, %0, %cst [1] : vector<2x256xf32> to vector<2xf32>
    %4 = vector.shape_cast %3 : vector<2xf32> to vector<2x1xf32>
    %cst_5 = arith.constant 2.560000e+02 : f32
    %5 = vector.broadcast %cst_5 : f32 to vector<2x1xf32>
    %6 = arith.divf %4, %5 : vector<2x1xf32>
    %7 = vector.broadcast %6 : vector<2x1xf32> to vector<2x256xf32>
    %8 = arith.subf %0, %7 : vector<2x256xf32>
    %9 = arith.mulf %8, %8 : vector<2x256xf32>
    %cst_6 = arith.constant dense<0.000000e+00> : vector<2xf32>
    %10 = vector.multi_reduction <add>, %9, %cst_6 [1] : vector<2x256xf32> to vector<2xf32>
    %11 = vector.shape_cast %10 : vector<2xf32> to vector<2x1xf32>
    %cst_7 = arith.constant 2.560000e+02 : f32
    %12 = vector.broadcast %cst_7 : f32 to vector<2x1xf32>
    %13 = arith.divf %11, %12 : vector<2x1xf32>
    %cst_8 = arith.constant 9.99999974E-6 : f32
    %14 = vector.broadcast %cst_8 : f32 to vector<2x1xf32>
    %15 = arith.addf %13, %14 : vector<2x1xf32>
    %16 = math.rsqrt %15 : vector<2x1xf32>
    %17 = vector.broadcast %16 : vector<2x1xf32> to vector<2x256xf32>
    %18 = arith.mulf %8, %17 : vector<2x256xf32>
    %19 = vector.broadcast %1 : vector<1x256xf32> to vector<2x256xf32>
    %20 = arith.mulf %18, %19 : vector<2x256xf32>
    %21 = vector.broadcast %2 : vector<1x256xf32> to vector<2x256xf32>
    %22 = arith.addf %20, %21 : vector<2x256xf32>
    %23 = arith.truncf %22 : vector<2x256xf32> to vector<2x256xbf16>
    %c0_9 = arith.constant 0 : index
    %c0_10 = arith.constant 0 : index
    %24 = vector.load %arg3[%c0_9, %c0_10] : memref<256x128xbf16, #tpu.memory_space<vmem>>, vector<256x128xbf16>
    %cst_11 = arith.constant dense<0.000000e+00> : vector<2x128xf32>
    %25 = tpu.matmul %23, %24, %cst_11 {dimension_numbers = #tpu.dot_dimension_numbers<[1], [0], [0], [1], [0, 0, 1, 1], [], []>} : vector<2x256xbf16>, vector<256x128xbf16>, vector<2x128xf32> -> vector<2x128xf32>
    %26 = arith.truncf %25 : vector<2x128xf32> to vector<2x128xbf16>
    %c0_12 = arith.constant 0 : index
    %c0_13 = arith.constant 0 : index
    %27 = vector.load %arg4[%c0_12, %c0_13] : memref<128x128xbf16, #tpu.memory_space<vmem>>, vector<128x128xbf16>
    %cst_14 = arith.constant dense<0.000000e+00> : vector<2x128xf32>
    %28 = tpu.matmul %26, %27, %cst_14 {dimension_numbers = #tpu.dot_dimension_numbers<[1], [0], [0], [1], [0, 0, 1, 1], [], []>} : vector<2x128xbf16>, vector<128x128xbf16>, vector<2x128xf32> -> vector<2x128xf32>
    %c0_15 = arith.constant 0 : index
    %c0_16 = arith.constant 0 : index
    %29 = vector.load %arg5[%c0_15, %c0_16] : memref<1x128xf32, #tpu.memory_space<vmem>>, vector<1x128xf32>
    %30 = vector.broadcast %29 : vector<1x128xf32> to vector<2x128xf32>
    %31 = arith.addf %28, %30 : vector<2x128xf32>
    %cst_17 = arith.constant 0.000000e+00 : f32
    %32 = vector.broadcast %cst_17 : f32 to vector<2x128xf32>
    %33 = arith.maximumf %31, %32 : vector<2x128xf32>
    %34 = arith.truncf %33 : vector<2x128xf32> to vector<2x128xbf16>
    %c0_18 = arith.constant 0 : index
    %c0_19 = arith.constant 0 : index
    %35 = vector.load %arg6[%c0_18, %c0_19] : memref<128x128xbf16, #tpu.memory_space<vmem>>, vector<128x128xbf16>
    %cst_20 = arith.constant dense<0.000000e+00> : vector<2x128xf32>
    %36 = tpu.matmul %34, %35, %cst_20 {dimension_numbers = #tpu.dot_dimension_numbers<[1], [0], [0], [1], [0, 0, 1, 1], [], []>} : vector<2x128xbf16>, vector<128x128xbf16>, vector<2x128xf32> -> vector<2x128xf32>
    %c0_21 = arith.constant 0 : index
    %c0_22 = arith.constant 0 : index
    %37 = vector.load %arg7[%c0_21, %c0_22] : memref<1x128xf32, #tpu.memory_space<vmem>>, vector<1x128xf32>
    %38 = vector.broadcast %37 : vector<1x128xf32> to vector<2x128xf32>
    %39 = arith.addf %36, %38 : vector<2x128xf32>
    %c0_23 = arith.constant 0 : index
    %c0_24 = arith.constant 0 : index
    %40 = vector.load %arg8[%c0_23, %c0_24] : memref<2x128xf32, #tpu.memory_space<vmem>>, vector<2x128xf32>
    tpu.vector_store %arg8[%c0_23, %c0_24], %39 {strides = array<i32>} : memref<2x128xf32, #tpu.memory_space<vmem>>, vector<2x128xf32>,
    return
  }
}

</mosaic_0001>

<llo_original>
// kernel: image_encoder_forward.5
$region0: #{image_encoder_forward.5}
  #allocation0 [shape = 'u32[]', space=smem, size = 0x4, offset = 0x4, fixed_abs, tag = 'smem constant byte address 0x4 - core index']
  #allocation1 [shape = 'u32[144,128]{1,0:T(1,128)}', space=vmem, size = 0x12000, scoped, tag = 'internal scratch']
  %s0 = inlined_call_operand.vmem [shape: f32[2,256], index: 0, kind: input, shape index: {}]
  %s1 = inlined_call_operand.vmem [shape: f32[1,256], index: 1, kind: input, shape index: {}]
  %s2 = inlined_call_operand.vmem [shape: f32[1,256], index: 2, kind: input, shape index: {}]
  %s3 = inlined_call_operand.vmem [shape: bf16[256,128], index: 3, kind: input, shape index: {}]
  %s4 = inlined_call_operand.vmem [shape: bf16[128,128], index: 4, kind: input, shape index: {}]
  %s5 = inlined_call_operand.vmem [shape: f32[1,128], index: 5, kind: input, shape index: {}]
  %s6 = inlined_call_operand.vmem [shape: bf16[128,128], index: 6, kind: input, shape index: {}]
  %s7 = inlined_call_operand.vmem [shape: f32[1,128], index: 7, kind: input, shape index: {}]
  %s8 = inlined_call_operand.hbm [shape: f32[2,128], index: 8, kind: output, shape index: {}]
  %s9 = sld [smem:[#allocation0]]
  $region42: #{image_encoder_forward.5} parent=0
    _
  %s11 = ssub.s32 1, %s9
  %s12 = scalar_select 0, %s11, %s9
  $region1: #{image_encoder_forward.5} parent=0
    #allocation2 [shape = 'u8[1024]{0}', space=vmem, size = 0x400, scoped, tag = 'output window, operand 0, single buffered']
    #allocation3 [shape = 's32[1]{0}', space=sflag, size = 0x4, scoped, tag = 'scoped memory for image_encoder_forward.5']
    %13 = vsyncpa [#allocation3], 0
    // Predicated region
    $region2: #{image_encoder_forward.5} parent=1 // pred_check
      _
    $region3: #{image_encoder_forward.5} parent=1 // pred_check_branch
      %15 = sbr.rel (0) target = $region5
    $region4: #{image_encoder_forward.5} parent=1 // pred_region
      _
    $region5: #{image_encoder_forward.5} parent=1 // pred_fallthru
      _
    // Predicated region
    $region6: #{image_encoder_forward.5} parent=1 // pred_check
      _
    $region7: #{image_encoder_forward.5} parent=1 // pred_check_branch
      %17 = sbr.rel (0) target = $region9
    $region8: #{image_encoder_forward.5} parent=1 // pred_region
      _
    $region9: #{image_encoder_forward.5} parent=1 // pred_fallthru
      _
    // Predicated region
    $region10: #{image_encoder_forward.5} parent=1 // pred_check
      _
    $region11: #{image_encoder_forward.5} parent=1 // pred_check_branch
      %19 = sbr.rel (0) target = $region13
    $region12: #{image_encoder_forward.5} parent=1 // pred_region
      _
    $region13: #{image_encoder_forward.5} parent=1 // pred_fallthru
      _
    // Predicated region
    $region14: #{image_encoder_forward.5} parent=1 // pred_check
      _
    $region15: #{image_encoder_forward.5} parent=1 // pred_check_branch
      %21 = sbr.rel (0) target = $region17
    $region16: #{image_encoder_forward.5} parent=1 // pred_region
      _
    $region17: #{image_encoder_forward.5} parent=1 // pred_fallthru
      _
    // Predicated region
    $region18: #{image_encoder_forward.5} parent=1 // pred_check
      _
    $region19: #{image_encoder_forward.5} parent=1 // pred_check_branch
      %23 = sbr.rel (0) target = $region21
    $region20: #{image_encoder_forward.5} parent=1 // pred_region
      _
    $region21: #{image_encoder_forward.5} parent=1 // pred_fallthru
      _
    // Predicated region
    $region22: #{image_encoder_forward.5} parent=1 // pred_check
      _
    $region23: #{image_encoder_forward.5} parent=1 // pred_check_branch
      %25 = sbr.rel (0) target = $region25
    $region24: #{image_encoder_forward.5} parent=1 // pred_region
      _
    $region25: #{image_encoder_forward.5} parent=1 // pred_fallthru
      _
    // Predicated region
    $region26: #{image_encoder_forward.5} parent=1 // pred_check
      _
    $region27: #{image_encoder_forward.5} parent=1 // pred_check_branch
      %27 = sbr.rel (0) target = $region29
    $region28: #{image_encoder_forward.5} parent=1 // pred_region
      _
    $region29: #{image_encoder_forward.5} parent=1 // pred_fallthru
      _
    // Predicated region
    $region30: #{image_encoder_forward.5} parent=1 // pred_check
      _
    $region31: #{image_encoder_forward.5} parent=1 // pred_check_branch
      %29 = sbr.rel (0) target = $region33
    $region32: #{image_encoder_forward.5} parent=1 // pred_region
      _
    $region33: #{image_encoder_forward.5} parent=1 // pred_fallthru
      _
    %v31 = vld [vmem:[%s0] sm:$0xf]
    %v32 = vld [vmem:[%s1] sm:$0x3]
    %v33 = vld [vmem:[%s2] sm:$0x3]
    %v36 = vunpack.c.l.s4 1983009808
    %v37 = vunpack.c.0.s8 %v36
    %v38 = vlaneseq
    %v39 = vshrl.u32 %v38, 7
    %v40 = vsub.s32 %v37, %v39
    %v41 = vrot.slane %v31, %v40
    %v42 = vcombine.high %v41, %v41
    %vm45 = vcmask 1041408
    %v46 = vsel %vm45, %v41, 0.0
    %v47 = vsel %vm45, %v42, 0.0
    %v48 = vadd.f32 %v46, %v47
    %49 = vadd.xlane.f32.xlu0 %v48
    %v50 = vpop.xlane.xlu0 %49
    %v51 = vrcp.pop 256.0
    %v52 = vmul.f32 %v50, %v51
    %v55 = vunpack.c.l.s4 269488144
    %v56 = vunpack.c.0.s8 %v55
    %v57 = vlaneseq
    %v58 = vshrl.u32 %v57, 7
    %v59 = vsub.s32 %v56, %v58
    %v60 = vrot.slane %v52, %v59
    %v62 = vsub.f32 %v31, %v60
    %v63 = vmul.f32 %v62, %v62
    %v66 = vunpack.c.l.s4 1983009808
    %v67 = vunpack.c.0.s8 %v66
    %v68 = vlaneseq
    %v69 = vshrl.u32 %v68, 7
    %v70 = vsub.s32 %v67, %v69
    %v71 = vrot.slane %v63, %v70
    %v72 = vcombine.high %v71, %v71
    %v75 = vsel %vm45, %v71, 0.0
    %v76 = vsel %vm45, %v72, 0.0
    %v77 = vadd.f32 %v75, %v76
    %78 = vadd.xlane.f32.xlu0 %v77
    %v79 = vpop.xlane.xlu0 %78
    %v80 = vmul.f32 %v79, %v51
    %v81 = vadd.f32 %v80, 1e-05
    %v82 = vrsqrt.pop %v81
    %v85 = vunpack.c.l.s4 269488144
    %v86 = vunpack.c.0.s8 %v85
    %v87 = vlaneseq
    %v88 = vshrl.u32 %v87, 7
    %v89 = vsub.s32 %v86, %v88
    %v90 = vrot.slane %v82, %v89
    %v92 = vmul.f32 %v62, %v90
    %v94 = vlaneseq
    %v95 = vshrl.u32 %v94, 7
    %v96 = vsub.s32 0, %v95
    %v97 = vrot.slane %v32, %v96
    %v98 = vlaneseq
    %v99 = vshrl.u32 %v98, 7
    %v100 = vsub.s32 1, %v99
    %v101 = vrot.slane %v32, %v100
    %v102 = vcombine.low %v97, %v101
    %v104 = vunpack.c.l.s4 1983009808
    %v105 = vunpack.c.0.s8 %v104
    %v106 = vlaneseq
    %v107 = vshrl.u32 %v106, 7
    %v108 = vsub.s32 %v105, %v107
    %v109 = vrot.slane %v102, %v108
    %v111 = vmul.f32 %v92, %v109
    %v113 = vlaneseq
    %v114 = vshrl.u32 %v113, 7
    %v115 = vsub.s32 0, %v114
    %v116 = vrot.slane %v33, %v115
    %v117 = vlaneseq
    %v118 = vshrl.u32 %v117, 7
    %v119 = vsub.s32 1, %v118
    %v120 = vrot.slane %v33, %v119
    %v121 = vcombine.low %v116, %v120
    %v123 = vunpack.c.l.s4 1983009808
    %v124 = vunpack.c.0.s8 %v123
    %v125 = vlaneseq
    %v126 = vshrl.u32 %v125, 7
    %v127 = vsub.s32 %v124, %v126
    %v128 = vrot.slane %v121, %v127
    %v130 = vadd.f32 %v111, %v128
    %v133 = vunpack.c.l.s4 1983009808
    %v134 = vunpack.c.0.s8 %v133
    %v135 = vlaneseq
    %v136 = vshrl.u32 %v135, 7
    %v137 = vsub.s32 %v134, %v136
    %v138 = vrot.slane %v130, %v137
    %v139 = vcombine.high %v138, %v138
    %v142 = vpack.c.bf16 %v138, %v138
    %v143 = vpack.c.bf16 %v139, %v139
    %v144 = vld [vmem:[%s3] sm:$0xf]
    %v145 = vld [vmem:[%s3 + $0x4] sm:$0xf]
    %v146 = vld [vmem:[%s3 + $0x8] sm:$0xf]
    %v147 = vld [vmem:[%s3 + $0xc] sm:$0xf]
    %v148 = vld [vmem:[%s3 + $0x10] sm:$0xf]
    %v149 = vld [vmem:[%s3 + $0x14] sm:$0xf]
    %v150 = vld [vmem:[%s3 + $0x18] sm:$0xf]
    %v151 = vld [vmem:[%s3 + $0x1c] sm:$0xf]
    %v152 = vld [vmem:[%s3 + $0x20] sm:$0xf]
    %v153 = vld [vmem:[%s3 + $0x24] sm:$0xf]
    %v154 = vld [vmem:[%s3 + $0x28] sm:$0xf]
    %v155 = vld [vmem:[%s3 + $0x2c] sm:$0xf]
    %v156 = vld [vmem:[%s3 + $0x30] sm:$0xf]
    %v157 = vld [vmem:[%s3 + $0x34] sm:$0xf]
    %v158 = vld [vmem:[%s3 + $0x38] sm:$0xf]
    %v159 = vld [vmem:[%s3 + $0x3c] sm:$0xf]
    %v160 = vld [vmem:[%s3 + $0x40] sm:$0xf]
    %v161 = vld [vmem:[%s3 + $0x44] sm:$0xf]
    %v162 = vld [vmem:[%s3 + $0x48] sm:$0xf]
    %v163 = vld [vmem:[%s3 + $0x4c] sm:$0xf]
    %v164 = vld [vmem:[%s3 + $0x50] sm:$0xf]
    %v165 = vld [vmem:[%s3 + $0x54] sm:$0xf]
    %v166 = vld [vmem:[%s3 + $0x58] sm:$0xf]
    %v167 = vld [vmem:[%s3 + $0x5c] sm:$0xf]
    %v168 = vld [vmem:[%s3 + $0x60] sm:$0xf]
    %v169 = vld [vmem:[%s3 + $0x64] sm:$0xf]
    %v170 = vld [vmem:[%s3 + $0x68] sm:$0xf]
    %v171 = vld [vmem:[%s3 + $0x6c] sm:$0xf]
    %v172 = vld [vmem:[%s3 + $0x70] sm:$0xf]
    %v173 = vld [vmem:[%s3 + $0x74] sm:$0xf]
    %v174 = vld [vmem:[%s3 + $0x78] sm:$0xf]
    %v175 = vld [vmem:[%s3 + $0x7c] sm:$0xf]
    %v208 = vunpack.c.l.b16 %v144
    %v209 = vunpack.c.l.b16 %v145
    %v210 = vunpack.c.l.b16 %v146
    %v211 = vunpack.c.l.b16 %v147
    %v212 = vunpack.c.l.b16 %v148
    %v213 = vunpack.c.l.b16 %v149
    %v214 = vunpack.c.l.b16 %v150
    %v215 = vunpack.c.l.b16 %v151
    %v216 = vunpack.c.l.b16 %v152
    %v217 = vunpack.c.l.b16 %v153
    %v218 = vunpack.c.l.b16 %v154
    %v219 = vunpack.c.l.b16 %v155
    %v220 = vunpack.c.l.b16 %v156
    %v221 = vunpack.c.l.b16 %v157
    %v222 = vunpack.c.l.b16 %v158
    %v223 = vunpack.c.l.b16 %v159
    %v224 = vunpack.c.l.b16 %v160
    %v225 = vunpack.c.l.b16 %v161
    %v226 = vunpack.c.l.b16 %v162
    %v227 = vunpack.c.l.b16 %v163
    %v228 = vunpack.c.l.b16 %v164
    %v229 = vunpack.c.l.b16 %v165
    %v230 = vunpack.c.l.b16 %v166
    %v231 = vunpack.c.l.b16 %v167
    %v232 = vunpack.c.l.b16 %v168
    %v233 = vunpack.c.l.b16 %v169
    %v234 = vunpack.c.l.b16 %v170
    %v235 = vunpack.c.l.b16 %v171
    %v236 = vunpack.c.l.b16 %v172
    %v237 = vunpack.c.l.b16 %v173
    %v238 = vunpack.c.l.b16 %v174
    %v239 = vunpack.c.l.b16 %v175
    %v240 = vpack.c.b16 %v209, %v208
    %v241 = vpack.c.b16 %v211, %v210
    %v242 = vpack.c.b16 %v213, %v212
    %v243 = vpack.c.b16 %v215, %v214
    %v244 = vpack.c.b16 %v217, %v216
    %v245 = vpack.c.b16 %v219, %v218
    %v246 = vpack.c.b16 %v221, %v220
    %v247 = vpack.c.b16 %v223, %v222
    %v248 = vpack.c.b16 %v225, %v224
    %v249 = vpack.c.b16 %v227, %v226
    %v250 = vpack.c.b16 %v229, %v228
    %v251 = vpack.c.b16 %v231, %v230
    %v252 = vpack.c.b16 %v233, %v232
    %v253 = vpack.c.b16 %v235, %v234
    %v254 = vpack.c.b16 %v237, %v236
    %v255 = vpack.c.b16 %v239, %v238
    %272 = vmatprep.subr.bf16.mxu0 0
    %273 = vmatpush1.bf16.msra.mxu0 %v240
    %274 = vmatprep.subr.bf16.mxu0 0
    %275 = vmatpush1.bf16.msra.mxu0 %v241
    %276 = vmatprep.subr.bf16.mxu0 0
    %277 = vmatpush1.bf16.msra.mxu0 %v242
    %278 = vmatprep.subr.bf16.mxu0 0
    %279 = vmatpush1.bf16.msra.mxu0 %v243
    %280 = vmatprep.subr.bf16.mxu0 0
    %281 = vmatpush1.bf16.msra.mxu0 %v244
    %282 = vmatprep.subr.bf16.mxu0 0
    %283 = vmatpush1.bf16.msra.mxu0 %v245
    %284 = vmatprep.subr.bf16.mxu0 0
    %285 = vmatpush1.bf16.msra.mxu0 %v246
    %286 = vmatprep.subr.bf16.mxu0 0
    %287 = vmatpush1.bf16.msra.mxu0 %v247
    %288 = vmatprep.subr.bf16.mxu0 0
    %289 = vmatpush1.bf16.msra.mxu0 %v248
    %290 = vmatprep.subr.bf16.mxu0 0
    %291 = vmatpush1.bf16.msra.mxu0 %v249
    %292 = vmatprep.subr.bf16.mxu0 0
    %293 = vmatpush1.bf16.msra.mxu0 %v250
    %294 = vmatprep.subr.bf16.mxu0 0
    %295 = vmatpush1.bf16.msra.mxu0 %v251
    %296 = vmatprep.subr.bf16.mxu0 0
    %297 = vmatpush1.bf16.msra.mxu0 %v252
    %298 = vmatprep.subr.bf16.mxu0 0
    %299 = vmatpush1.bf16.msra.mxu0 %v253
    %300 = vmatprep.subr.bf16.mxu0 0
    %301 = vmatpush1.bf16.msra.mxu0 %v254
    %302 = vmatprep.subr.bf16.mxu0 0
    %303 = vmatpush1.bf16.msra.mxu0 %v255
    %304 = vmatprep.mubr.bf16.mxu0 %v143
    %305 = vmatmul.mubr.bf16.gmra.mrb[0].mxu0 %v142
    %v306 = vpop.f32.mrb[0].mxu0
    %v307 = vadd.f32 0.0, %v306
    %v308 = vpop.f32.mrb[0].mxu0
    %v309 = vpop.f32.mrb[0].mxu0
    %v310 = vpop.f32.mrb[0].mxu0
    %311 = vdwg.mxu0
    %v312 = vpack.c.bf16 %v307, %v307
    %v313 = vld [vmem:[%s4] sm:$0xf]
    %v314 = vld [vmem:[%s4 + $0x4] sm:$0xf]
    %v315 = vld [vmem:[%s4 + $0x8] sm:$0xf]
    %v316 = vld [vmem:[%s4 + $0xc] sm:$0xf]
    %v317 = vld [vmem:[%s4 + $0x10] sm:$0xf]
    %v318 = vld [vmem:[%s4 + $0x14] sm:$0xf]
    %v319 = vld [vmem:[%s4 + $0x18] sm:$0xf]
    %v320 = vld [vmem:[%s4 + $0x1c] sm:$0xf]
    %v321 = vld [vmem:[%s4 + $0x20] sm:$0xf]
    %v322 = vld [vmem:[%s4 + $0x24] sm:$0xf]
    %v323 = vld [vmem:[%s4 + $0x28] sm:$0xf]
    %v324 = vld [vmem:[%s4 + $0x2c] sm:$0xf]
    %v325 = vld [vmem:[%s4 + $0x30] sm:$0xf]
    %v326 = vld [vmem:[%s4 + $0x34] sm:$0xf]
    %v327 = vld [vmem:[%s4 + $0x38] sm:$0xf]
    %v328 = vld [vmem:[%s4 + $0x3c] sm:$0xf]
    %v329 = vld [vmem:[%s5] sm:$0x1]
    %v331 = vlaneseq
    %v332 = vshrl.u32 %v331, 7
    %v333 = vsub.s32 0, %v332
    %v334 = vrot.slane %v329, %v333
    %v352 = vunpack.c.l.b16 %v313
    %v353 = vunpack.c.l.b16 %v314
    %v354 = vunpack.c.l.b16 %v315
    %v355 = vunpack.c.l.b16 %v316
    %v356 = vunpack.c.l.b16 %v317
    %v357 = vunpack.c.l.b16 %v318
    %v358 = vunpack.c.l.b16 %v319
    %v359 = vunpack.c.l.b16 %v320
    %v360 = vunpack.c.l.b16 %v321
    %v361 = vunpack.c.l.b16 %v322
    %v362 = vunpack.c.l.b16 %v323
    %v363 = vunpack.c.l.b16 %v324
    %v364 = vunpack.c.l.b16 %v325
    %v365 = vunpack.c.l.b16 %v326
    %v366 = vunpack.c.l.b16 %v327
    %v367 = vunpack.c.l.b16 %v328
    %v368 = vpack.c.b16 %v353, %v352
    %v369 = vpack.c.b16 %v355, %v354
    %v370 = vpack.c.b16 %v357, %v356
    %v371 = vpack.c.b16 %v359, %v358
    %v372 = vpack.c.b16 %v361, %v360
    %v373 = vpack.c.b16 %v363, %v362
    %v374 = vpack.c.b16 %v365, %v364
    %v375 = vpack.c.b16 %v367, %v366
    %384 = vmatprep.subr.bf16.mxu0 0
    %385 = vmatpush1.bf16.msra.mxu0 %v368
    %386 = vmatprep.subr.bf16.mxu0 0
    %387 = vmatpush1.bf16.msra.mxu0 %v369
    %388 = vmatprep.subr.bf16.mxu0 0
    %389 = vmatpush1.bf16.msra.mxu0 %v370
    %390 = vmatprep.subr.bf16.mxu0 0
    %391 = vmatpush1.bf16.msra.mxu0 %v371
    %392 = vmatprep.subr.bf16.mxu0 0
    %393 = vmatpush1.bf16.msra.mxu0 %v372
    %394 = vmatprep.subr.bf16.mxu0 0
    %395 = vmatpush1.bf16.msra.mxu0 %v373
    %396 = vmatprep.subr.bf16.mxu0 0
    %397 = vmatpush1.bf16.msra.mxu0 %v374
    %398 = vmatprep.subr.bf16.mxu0 0
    %399 = vmatpush1.bf16.msra.mxu0 %v375
    %400 = vmatprep.subr.bf16.mxu0 0
    %401 = vmatpush1.bf16.msra.mxu0 0
    %402 = vmatprep.subr.bf16.mxu0 0
    %403 = vmatpush1.bf16.msra.mxu0 0
    %404 = vmatprep.subr.bf16.mxu0 0
    %405 = vmatpush1.bf16.msra.mxu0 0
    %406 = vmatprep.subr.bf16.mxu0 0
    %407 = vmatpush1.bf16.msra.mxu0 0
    %408 = vmatprep.subr.bf16.mxu0 0
    %409 = vmatpush1.bf16.msra.mxu0 0
    %410 = vmatprep.subr.bf16.mxu0 0
    %411 = vmatpush1.bf16.msra.mxu0 0
    %412 = vmatprep.subr.bf16.mxu0 0
    %413 = vmatpush1.bf16.msra.mxu0 0
    %414 = vmatprep.subr.bf16.mxu0 0
    %415 = vmatpush1.bf16.msra.mxu0 0
    %416 = vmatprep.mubr.bf16.mxu0 0
    %417 = vmatmul.mubr.bf16.gmra.mrb[0].mxu0 %v312
    %v418 = vpop.f32.mrb[0].mxu0
    %v419 = vadd.f32 %v334, %v418
    %v420 = vpop.f32.mrb[0].mxu0
    %v421 = vpop.f32.mrb[0].mxu0
    %v422 = vpop.f32.mrb[0].mxu0
    %423 = vdwg.mxu0
    %v424 = vmax.f32 %v419, 0.0
    %v425 = vpack.c.bf16 %v424, %v424
    %v426 = vld [vmem:[%s6] sm:$0xf]
    %v427 = vld [vmem:[%s6 + $0x4] sm:$0xf]
    %v428 = vld [vmem:[%s6 + $0x8] sm:$0xf]
    %v429 = vld [vmem:[%s6 + $0xc] sm:$0xf]
    %v430 = vld [vmem:[%s6 + $0x10] sm:$0xf]
    %v431 = vld [vmem:[%s6 + $0x14] sm:$0xf]
    %v432 = vld [vmem:[%s6 + $0x18] sm:$0xf]
    %v433 = vld [vmem:[%s6 + $0x1c] sm:$0xf]
    %v434 = vld [vmem:[%s6 + $0x20] sm:$0xf]
    %v435 = vld [vmem:[%s6 + $0x24] sm:$0xf]
    %v436 = vld [vmem:[%s6 + $0x28] sm:$0xf]
    %v437 = vld [vmem:[%s6 + $0x2c] sm:$0xf]
    %v438 = vld [vmem:[%s6 + $0x30] sm:$0xf]
    %v439 = vld [vmem:[%s6 + $0x34] sm:$0xf]
    %v440 = vld [vmem:[%s6 + $0x38] sm:$0xf]
    %v441 = vld [vmem:[%s6 + $0x3c] sm:$0xf]
    %v442 = vld [vmem:[%s7] sm:$0x1]
    %v444 = vlaneseq
    %v445 = vshrl.u32 %v444, 7
    %v446 = vsub.s32 0, %v445
    %v447 = vrot.slane %v442, %v446
    %v465 = vunpack.c.l.b16 %v426
    %v466 = vunpack.c.l.b16 %v427
    %v467 = vunpack.c.l.b16 %v428
    %v468 = vunpack.c.l.b16 %v429
    %v469 = vunpack.c.l.b16 %v430
    %v470 = vunpack.c.l.b16 %v431
    %v471 = vunpack.c.l.b16 %v432
    %v472 = vunpack.c.l.b16 %v433
    %v473 = vunpack.c.l.b16 %v434
    %v474 = vunpack.c.l.b16 %v435
    %v475 = vunpack.c.l.b16 %v436
    %v476 = vunpack.c.l.b16 %v437
    %v477 = vunpack.c.l.b16 %v438
    %v478 = vunpack.c.l.b16 %v439
    %v479 = vunpack.c.l.b16 %v440
    %v480 = vunpack.c.l.b16 %v441
    %v481 = vpack.c.b16 %v466, %v465
    %v482 = vpack.c.b16 %v468, %v467
    %v483 = vpack.c.b16 %v470, %v469
    %v484 = vpack.c.b16 %v472, %v471
    %v485 = vpack.c.b16 %v474, %v473
    %v486 = vpack.c.b16 %v476, %v475
    %v487 = vpack.c.b16 %v478, %v477
    %v488 = vpack.c.b16 %v480, %v479
    %497 = vmatprep.subr.bf16.mxu0 0
    %498 = vmatpush1.bf16.msra.mxu0 %v481
    %499 = vmatprep.subr.bf16.mxu0 0
    %500 = vmatpush1.bf16.msra.mxu0 %v482
    %501 = vmatprep.subr.bf16.mxu0 0
    %502 = vmatpush1.bf16.msra.mxu0 %v483
    %503 = vmatprep.subr.bf16.mxu0 0
    %504 = vmatpush1.bf16.msra.mxu0 %v484
    %505 = vmatprep.subr.bf16.mxu0 0
    %506 = vmatpush1.bf16.msra.mxu0 %v485
    %507 = vmatprep.subr.bf16.mxu0 0
    %508 = vmatpush1.bf16.msra.mxu0 %v486
    %509 = vmatprep.subr.bf16.mxu0 0
    %510 = vmatpush1.bf16.msra.mxu0 %v487
    %511 = vmatprep.subr.bf16.mxu0 0
    %512 = vmatpush1.bf16.msra.mxu0 %v488
    %513 = vmatprep.subr.bf16.mxu0 0
    %514 = vmatpush1.bf16.msra.mxu0 0
    %515 = vmatprep.subr.bf16.mxu0 0
    %516 = vmatpush1.bf16.msra.mxu0 0
    %517 = vmatprep.subr.bf16.mxu0 0
    %518 = vmatpush1.bf16.msra.mxu0 0
    %519 = vmatprep.subr.bf16.mxu0 0
    %520 = vmatpush1.bf16.msra.mxu0 0
    %521 = vmatprep.subr.bf16.mxu0 0
    %522 = vmatpush1.bf16.msra.mxu0 0
    %523 = vmatprep.subr.bf16.mxu0 0
    %524 = vmatpush1.bf16.msra.mxu0 0
    %525 = vmatprep.subr.bf16.mxu0 0
    %526 = vmatpush1.bf16.msra.mxu0 0
    %527 = vmatprep.subr.bf16.mxu0 0
    %528 = vmatpush1.bf16.msra.mxu0 0
    %529 = vmatprep.mubr.bf16.mxu0 0
    %530 = vmatmul.mubr.bf16.gmra.mrb[0].mxu0 %v425
    %v531 = vpop.f32.mrb[0].mxu0
    %v532 = vadd.f32 %v447, %v531
    %v533 = vpop.f32.mrb[0].mxu0
    %v534 = vpop.f32.mrb[0].mxu0
    %v535 = vpop.f32.mrb[0].mxu0
    %536 = vdwg.mxu0
    %537 = vst [vmem:[#allocation2] sm:$0x3] %v532
    // Predicated region
    $region34: #{image_encoder_forward.5} parent=1 // pred_check
      _
    $region35: #{image_encoder_forward.5} parent=1 // pred_check_branch
      %539 = sbr.rel (0) target = $region37
    $region36: #{image_encoder_forward.5} parent=1 // pred_region
      %s541 = ssub.s32 32, 32
      %542 = vsyncadd [#allocation3], %s541
      %s544 = sshll.u32 [#allocation2], 4
      %s545 = int_to_ptr.vmem [resolvable:$true] %s544
      %547 = dma.vmem_to_hbm [thread:$0]  %s545, 32, %s8, [#allocation3]
    $region37: #{image_encoder_forward.5} parent=1 // pred_fallthru
      _
    // Predicated region
    $region38: #{image_encoder_forward.5} parent=1 // pred_check
      _
    $region39: #{image_encoder_forward.5} parent=1 // pred_check_branch
      %549 = sbr.rel (0) target = $region41
    $region40: #{image_encoder_forward.5} parent=1 // pred_region
      %550 = dma.done [#allocation3], 32
    $region41: #{image_encoder_forward.5} parent=1 // pred_fallthru
      _
    %551 = vsyncpa [#allocation3], 1

// kernel: image_encoder_forward.3
$region0: #{image_encoder_forward.3}
  #allocation0 [shape = 'u32[]', space=smem, size = 0x4, offset = 0x4, fixed_abs, tag = 'smem constant byte address 0x4 - core index']
  #allocation1 [shape = 'u32[144,128]{1,0:T(1,128)}', space=vmem, size = 0x12000, scoped, tag = 'internal scratch']
  %s0 = inlined_call_operand.vmem [shape: f32[16,192], index: 0, kind: input, shape index: {}]
  %s1 = inlined_call_operand.vmem [shape: bf16[192,256], index: 1, kind: input, shape index: {}]
  %s2 = inlined_call_operand.vmem [shape: f32[16,256], index: 2, kind: input, shape index: {}]
  %s3 = inlined_call_operand.vmem [shape: f32[1,256], index: 3, kind: input, shape index: {}]
  %s4 = inlined_call_operand.vmem [shape: f32[1,256], index: 4, kind: input, shape index: {}]
  %s5 = inlined_call_operand.vmem [shape: f32[16,256], index: 5, kind: output, shape index: {}]
  %s6 = sld [smem:[#allocation0]]
  $region30: #{image_encoder_forward.3} parent=0
    _
  %s8 = ssub.s32 1, %s6
  %s9 = scalar_select 0, %s8, %s6
  // Predicated region
  $region2: #{image_encoder_forward.3} parent=0 // pred_check
    _
  $region3: #{image_encoder_forward.3} parent=0 // pred_check_branch
    %11 = sbr.rel (0) target = $region5
  $region4: #{image_encoder_forward.3} parent=0 // pred_region
    _
  $region5: #{image_encoder_forward.3} parent=0 // pred_fallthru
    _
  // Predicated region
  $region6: #{image_encoder_forward.3} parent=0 // pred_check
    _
  $region7: #{image_encoder_forward.3} parent=0 // pred_check_branch
    %13 = sbr.rel (0) target = $region9
  $region8: #{image_encoder_forward.3} parent=0 // pred_region
    _
  $region9: #{image_encoder_forward.3} parent=0 // pred_fallthru
    _
  // Predicated region
  $region10: #{image_encoder_forward.3} parent=0 // pred_check
    _
  $region11: #{image_encoder_forward.3} parent=0 // pred_check_branch
    %15 = sbr.rel (0) target = $region13
  $region12: #{image_encoder_forward.3} parent=0 // pred_region
    _
  $region13: #{image_encoder_forward.3} parent=0 // pred_fallthru
    _
  // Predicated region
  $region14: #{image_encoder_forward.3} parent=0 // pred_check
    _
  $region15: #{image_encoder_forward.3} parent=0 // pred_check_branch
    %17 = sbr.rel (0) target = $region17
  $region16: #{image_encoder_forward.3} parent=0 // pred_region
    _
  $region17: #{image_encoder_forward.3} parent=0 // pred_fallthru
    _
  // Predicated region
  $region18: #{image_encoder_forward.3} parent=0 // pred_check
    _
  $region19: #{image_encoder_forward.3} parent=0 // pred_check_branch
    %19 = sbr.rel (0) target = $region21
  $region20: #{image_encoder_forward.3} parent=0 // pred_region
    _
  $region21: #{image_encoder_forward.3} parent=0 // pred_fallthru
    _
  %v21 = vld [vmem:[%s0] sm:$0xff]
  %v22 = vld [vmem:[%s0 + $0x8] sm:$0xff]
  %v23 = vld [vmem:[%s0 + $0x10] sm:$0xff]
  %v24 = vld [vmem:[%s0 + $0x18] sm:$0xff]
  %v25 = vpack.c.bf16 %v23, %v21
  %v26 = vpack.c.bf16 %v24, %v22
  %v27 = vld [vmem:[%s1] sm:$0xff]
  %v28 = vld [vmem:[%s1 + $0x8] sm:$0xff]
  %v29 = vld [vmem:[%s1 + $0x10] sm:$0xff]
  %v30 = vld [vmem:[%s1 + $0x18] sm:$0xff]
  %v31 = vld [vmem:[%s1 + $0x20] sm:$0xff]
  %v32 = vld [vmem:[%s1 + $0x28] sm:$0xff]
  %v33 = vld [vmem:[%s1 + $0x30] sm:$0xff]
  %v34 = vld [vmem:[%s1 + $0x38] sm:$0xff]
  %v35 = vld [vmem:[%s1 + $0x40] sm:$0xff]
  %v36 = vld [vmem:[%s1 + $0x48] sm:$0xff]
  %v37 = vld [vmem:[%s1 + $0x50] sm:$0xff]
  %v38 = vld [vmem:[%s1 + $0x58] sm:$0xff]
  %v39 = vld [vmem:[%s1 + $0x60] sm:$0xff]
  %v40 = vld [vmem:[%s1 + $0x68] sm:$0xff]
  %v41 = vld [vmem:[%s1 + $0x70] sm:$0xff]
  %v42 = vld [vmem:[%s1 + $0x78] sm:$0xff]
  %v43 = vld [vmem:[%s1 + $0x80] sm:$0xff]
  %v44 = vld [vmem:[%s1 + $0x88] sm:$0xff]
  %v45 = vld [vmem:[%s1 + $0x90] sm:$0xff]
  %v46 = vld [vmem:[%s1 + $0x98] sm:$0xff]
  %v47 = vld [vmem:[%s1 + $0xa0] sm:$0xff]
  %v48 = vld [vmem:[%s1 + $0xa8] sm:$0xff]
  %v49 = vld [vmem:[%s1 + $0xb0] sm:$0xff]
  %v50 = vld [vmem:[%s1 + $0xb8] sm:$0xff]
  %v51 = vld [vmem:[%s2] sm:$0xff]
  %v52 = vld [vmem:[%s2 + $0x8] sm:$0xff]
  %v53 = vld [vmem:[%s2 + $0x10] sm:$0xff]
  %v54 = vld [vmem:[%s2 + $0x18] sm:$0xff]
  %v79 = vunpack.c.l.b16 %v27
  %v80 = vunpack.c.h.b16 %v27
  %v81 = vunpack.c.l.b16 %v28
  %v82 = vunpack.c.h.b16 %v28
  %v83 = vunpack.c.l.b16 %v29
  %v84 = vunpack.c.h.b16 %v29
  %v85 = vunpack.c.l.b16 %v30
  %v86 = vunpack.c.h.b16 %v30
  %v87 = vunpack.c.l.b16 %v31
  %v88 = vunpack.c.h.b16 %v31
  %v89 = vunpack.c.l.b16 %v32
  %v90 = vunpack.c.h.b16 %v32
  %v91 = vunpack.c.l.b16 %v33
  %v92 = vunpack.c.h.b16 %v33
  %v93 = vunpack.c.l.b16 %v34
  %v94 = vunpack.c.h.b16 %v34
  %v95 = vunpack.c.l.b16 %v35
  %v96 = vunpack.c.h.b16 %v35
  %v97 = vunpack.c.l.b16 %v36
  %v98 = vunpack.c.h.b16 %v36
  %v99 = vunpack.c.l.b16 %v37
  %v100 = vunpack.c.h.b16 %v37
  %v101 = vunpack.c.l.b16 %v38
  %v102 = vunpack.c.h.b16 %v38
  %v103 = vunpack.c.l.b16 %v39
  %v104 = vunpack.c.h.b16 %v39
  %v105 = vunpack.c.l.b16 %v40
  %v106 = vunpack.c.h.b16 %v40
  %v107 = vunpack.c.l.b16 %v41
  %v108 = vunpack.c.h.b16 %v41
  %v109 = vunpack.c.l.b16 %v42
  %v110 = vunpack.c.h.b16 %v42
  %v111 = vunpack.c.l.b16 %v43
  %v112 = vunpack.c.h.b16 %v43
  %v113 = vunpack.c.l.b16 %v44
  %v114 = vunpack.c.h.b16 %v44
  %v115 = vunpack.c.l.b16 %v45
  %v116 = vunpack.c.h.b16 %v45
  %v117 = vunpack.c.l.b16 %v46
  %v118 = vunpack.c.h.b16 %v46
  %v119 = vunpack.c.l.b16 %v47
  %v120 = vunpack.c.h.b16 %v47
  %v121 = vunpack.c.l.b16 %v48
  %v122 = vunpack.c.h.b16 %v48
  %v123 = vunpack.c.l.b16 %v49
  %v124 = vunpack.c.h.b16 %v49
  %v125 = vunpack.c.l.b16 %v50
  %v126 = vunpack.c.h.b16 %v50
  %v127 = vpack.c.b16 %v81, %v79
  %v128 = vpack.c.b16 %v82, %v80
  %v129 = vpack.c.b16 %v85, %v83
  %v130 = vpack.c.b16 %v86, %v84
  %v131 = vpack.c.b16 %v89, %v87
  %v132 = vpack.c.b16 %v90, %v88
  %v133 = vpack.c.b16 %v93, %v91
  %v134 = vpack.c.b16 %v94, %v92
  %v135 = vpack.c.b16 %v97, %v95
  %v136 = vpack.c.b16 %v98, %v96
  %v137 = vpack.c.b16 %v101, %v99
  %v138 = vpack.c.b16 %v102, %v100
  %v139 = vpack.c.b16 %v105, %v103
  %v140 = vpack.c.b16 %v106, %v104
  %v141 = vpack.c.b16 %v109, %v107
  %v142 = vpack.c.b16 %v110, %v108
  %v143 = vpack.c.b16 %v113, %v111
  %v144 = vpack.c.b16 %v114, %v112
  %v145 = vpack.c.b16 %v117, %v115
  %v146 = vpack.c.b16 %v118, %v116
  %v147 = vpack.c.b16 %v121, %v119
  %v148 = vpack.c.b16 %v122, %v120
  %v149 = vpack.c.b16 %v125, %v123
  %v150 = vpack.c.b16 %v126, %v124
  %vm175 = vcmask 523264
  %v177 = vsel %vm175, %v26, 0
  %179 = vmatprep.subr.bf16.mxu0 %v128
  %180 = vmatpush1.bf16.msra.mxu0 %v127
  %181 = vmatprep.subr.bf16.mxu0 %v130
  %182 = vmatpush1.bf16.msra.mxu0 %v129
  %183 = vmatprep.subr.bf16.mxu0 %v132
  %184 = vmatpush1.bf16.msra.mxu0 %v131
  %185 = vmatprep.subr.bf16.mxu0 %v134
  %186 = vmatpush1.bf16.msra.mxu0 %v133
  %187 = vmatprep.subr.bf16.mxu0 %v136
  %188 = vmatpush1.bf16.msra.mxu0 %v135
  %189 = vmatprep.subr.bf16.mxu0 %v138
  %190 = vmatpush1.bf16.msra.mxu0 %v137
  %191 = vmatprep.subr.bf16.mxu0 %v140
  %192 = vmatpush1.bf16.msra.mxu0 %v139
  %193 = vmatprep.subr.bf16.mxu0 %v142
  %194 = vmatpush1.bf16.msra.mxu0 %v141
  %195 = vmatprep.subr.bf16.mxu0 %v144
  %196 = vmatpush1.bf16.msra.mxu0 %v143
  %197 = vmatprep.subr.bf16.mxu0 %v146
  %198 = vmatpush1.bf16.msra.mxu0 %v145
  %199 = vmatprep.subr.bf16.mxu0 %v148
  %200 = vmatpush1.bf16.msra.mxu0 %v147
  %201 = vmatprep.subr.bf16.mxu0 %v150
  %202 = vmatpush1.bf16.msra.mxu0 %v149
  %203 = vmatprep.subr.bf16.mxu0 0
  %204 = vmatpush1.bf16.msra.mxu0 0
  %205 = vmatprep.subr.bf16.mxu0 0
  %206 = vmatpush1.bf16.msra.mxu0 0
  %207 = vmatprep.subr.bf16.mxu0 0
  %208 = vmatpush1.bf16.msra.mxu0 0
  %209 = vmatprep.subr.bf16.mxu0 0
  %210 = vmatpush1.bf16.msra.mxu0 0
  %211 = vmatprep.mubr.bf16.mxu0 %v177
  %212 = vmatmul.mubr.bf16.gmra.mrb[0].mxu0 %v25
  %v213 = vpop.f32.mrb[0].mxu0
  %v214 = vadd.f32 %v51, %v213
  %v215 = vpop.f32.mrb[0].mxu0
  %v216 = vadd.f32 %v52, %v215
  %v217 = vpop.f32.mrb[0].mxu0
  %v218 = vadd.f32 %v53, %v217
  %v219 = vpop.f32.mrb[0].mxu0
  %v220 = vadd.f32 %v54, %v219
  %221 = vdwg.mxu0
  %v222 = vld [vmem:[%s3] sm:$0x3]
  %v223 = vld [vmem:[%s4] sm:$0x3]
  %v224 = vadd.f32 %v214, %v216
  %225 = vadd.xlane.f32.xlu0 %v224
  %v226 = vpop.xlane.xlu0 %225
  %v227 = vadd.f32 %v218, %v220
  %228 = vadd.xlane.f32.xlu0 %v227
  %v229 = vpop.xlane.xlu0 %228
  %v230 = vrcp.pop 256.0
  %v231 = vmul.f32 %v226, %v230
  %v232 = vmul.f32 %v229, %v230
  %v233 = vsub.f32 %v214, %v231
  %v234 = vsub.f32 %v216, %v231
  %v235 = vsub.f32 %v218, %v232
  %v236 = vsub.f32 %v220, %v232
  %v237 = vmul.f32 %v233, %v233
  %v238 = vmul.f32 %v234, %v234
  %v239 = vmul.f32 %v235, %v235
  %v240 = vmul.f32 %v236, %v236
  %v241 = vadd.f32 %v237, %v238
  %242 = vadd.xlane.f32.xlu0 %v241
  %v243 = vpop.xlane.xlu0 %242
  %v244 = vadd.f32 %v239, %v240
  %245 = vadd.xlane.f32.xlu0 %v244
  %v246 = vpop.xlane.xlu0 %245
  %v247 = vmul.f32 %v243, %v230
  %v248 = vmul.f32 %v246, %v230
  %v249 = vadd.f32 %v247, 1e-05
  %v250 = vadd.f32 %v248, 1e-05
  %v251 = vrsqrt.pop %v249
  %v252 = vrsqrt.pop %v250
  %v253 = vmul.f32 %v233, %v251
  %v254 = vmul.f32 %v234, %v251
  %v255 = vmul.f32 %v235, %v252
  %v256 = vmul.f32 %v236, %v252
  %v258 = vlaneseq
  %v259 = vshrl.u32 %v258, 7
  %v260 = vsub.s32 0, %v259
  %v261 = vrot.slane %v222, %v260
  %v262 = vlaneseq
  %v263 = vshrl.u32 %v262, 7
  %v264 = vsub.s32 1, %v263
  %v265 = vrot.slane %v222, %v264
  %v268 = vmul.f32 %v253, %v261
  %v269 = vmul.f32 %v254, %v265
  %v270 = vmul.f32 %v255, %v261
  %v271 = vmul.f32 %v256, %v265
  %v273 = vlaneseq
  %v274 = vshrl.u32 %v273, 7
  %v275 = vsub.s32 0, %v274
  %v276 = vrot.slane %v223, %v275
  %v277 = vlaneseq
  %v278 = vshrl.u32 %v277, 7
  %v279 = vsub.s32 1, %v278
  %v280 = vrot.slane %v223, %v279
  %v283 = vadd.f32 %v268, %v276
  %v284 = vadd.f32 %v269, %v280
  %v285 = vadd.f32 %v270, %v276
  %v286 = vadd.f32 %v271, %v280
  %287 = vst [vmem:[%s5] sm:$0xff] %v283
  %288 = vst [vmem:[%s5 + $0x8] sm:$0xff] %v284
  %289 = vst [vmem:[%s5 + $0x10] sm:$0xff] %v285
  %290 = vst [vmem:[%s5 + $0x18] sm:$0xff] %v286
  // Predicated region
  $region22: #{image_encoder_forward.3} parent=0 // pred_check
    _
  $region23: #{image_encoder_forward.3} parent=0 // pred_check_branch
    %292 = sbr.rel (0) target = $region25
  $region24: #{image_encoder_forward.3} parent=0 // pred_region
    _
  $region25: #{image_encoder_forward.3} parent=0 // pred_fallthru
    _
  // Predicated region
  $region26: #{image_encoder_forward.3} parent=0 // pred_check
    _
  $region27: #{image_encoder_forward.3} parent=0 // pred_check_branch
    %294 = sbr.rel (0) target = $region29
  $region28: #{image_encoder_forward.3} parent=0 // pred_region
    _
  $region29: #{image_encoder_forward.3} parent=0 // pred_fallthru
    _

// kernel: image_encoder_forward.4
$region0: #{image_encoder_forward.4}
  #allocation0 [shape = 'u32[]', space=smem, size = 0x4, offset = 0x4, fixed_abs, tag = 'smem constant byte address 0x4 - core index']
  #allocation1 [shape = 'u32[144,128]{1,0:T(1,128)}', space=vmem, size = 0x12000, scoped, tag = 'internal scratch']
  #allocation2 [shape = 'f32[16,256]{1,0:T(8,128)}', space=vmem, size = 0x4000, scoped, tag = 'scratch operand']
  %s0 = inlined_call_operand.vmem [shape: f32[16,256], index: 0, kind: input, shape index: {}]
  %s1 = inlined_call_operand.vmem [shape: f32[2,1,256], index: 1, kind: input, shape index: {}]
  %s2 = inlined_call_operand.vmem [shape: f32[2,1,256], index: 2, kind: input, shape index: {}]
  %s3 = inlined_call_operand.hbm [shape: bf16[2,256,768], index: 3, kind: input, shape index: {}]
  %s4 = inlined_call_operand.vmem [shape: f32[2,1,768], index: 4, kind: input, shape index: {}]
  %s5 = inlined_call_operand.vmem [shape: bf16[2,256,256], index: 5, kind: input, shape index: {}]
  %s6 = inlined_call_operand.vmem [shape: f32[2,1,256], index: 6, kind: input, shape index: {}]
  %s7 = inlined_call_operand.vmem [shape: f32[2,1,256], index: 7, kind: input, shape index: {}]
  %s8 = inlined_call_operand.vmem [shape: f32[2,1,256], index: 8, kind: input, shape index: {}]
  %s9 = inlined_call_operand.hbm [shape: bf16[2,256,1024], index: 9, kind: input, shape index: {}]
  %s10 = inlined_call_operand.vmem [shape: f32[2,1,1024], index: 10, kind: input, shape index: {}]
  %s11 = inlined_call_operand.hbm [shape: bf16[2,1024,256], index: 11, kind: input, shape index: {}]
  %s12 = inlined_call_operand.vmem [shape: f32[2,1,256], index: 12, kind: input, shape index: {}]
  %s13 = inlined_call_operand.vmem [shape: f32[16,256], index: 13, kind: output, shape index: {}]
  %s14 = sld [smem:[#allocation0]]
  $region105: #{image_encoder_forward.4} parent=0
    _
  %s16 = ssub.s32 1, %s14
  %s17 = scalar_select 0, %s16, %s14
  $region1: #{image_encoder_forward.4} parent=0
    #allocation3 [shape = 'u8[786432]{0}', space=vmem, size = 0xc0000, scoped, tag = 'input window, operand 3']
    #allocation4 [shape = 's32[2]{0}', space=sflag, size = 0x8, scoped, tag = 'scoped memory for image_encoder_forward.4']
    #allocation5 [shape = 'u8[1048576]{0}', space=vmem, size = 0x100000, scoped, tag = 'input window, operand 9']
    #allocation6 [shape = 's32[2]{0}', space=sflag, size = 0x8, scoped, tag = 'scoped memory for image_encoder_forward.4']
    #allocation7 [shape = 'u8[1048576]{0}', space=vmem, size = 0x100000, scoped, tag = 'input window, operand 11']
    %18 = vsyncpa [#allocation4], 0
    %s19 = scalar_lea.sflag [#allocation4], 1
    %20 = vsyncpa %s19, 0
    %21 = vsyncpa [#allocation6], 0
    %s22 = scalar_lea.sflag [#allocation6], 1
    %23 = vsyncpa %s22, 0
    loop: start=0, step=1, limit=4
    $region2: #{image_encoder_forward.4} parent=1 // loop_pre_header
      _
    $region3: #{image_encoder_forward.4} parent=1 // loop_header
      %s25 = sphi 0, %s29
      %p26 = scmp.ge.s32.totalorder %s25, 4
      %s33 = sphi 0, %s33
      %s35 = sphi 0, %s33
      %s36 = sphi 0, %s35
      %s50 = sphi 0, %s36
      %s56 = sphi 0, %s58
      %s59 = sphi 0, %s56
      %s60 = sphi 0, %s59
      %s76 = sphi 0, %s60
      %s82 = sphi 0, %s84
      %s85 = sphi 0, %s82
      %s86 = sphi 0, %s85
      %s102 = sphi 0, %s86
      %s108 = sphi 0, %s110
      %s111 = sphi 0, %s108
      %s112 = sphi 0, %s111
      %s128 = sphi 0, %s112
      %s134 = sphi 0, %s136
      %s137 = sphi 0, %s134
      %s138 = sphi 0, %s137
      %s154 = sphi 0, %s138
      %s160 = sphi 0, %s162
      %s163 = sphi 0, %s160
      %s164 = sphi 0, %s163
      %s180 = sphi 0, %s164
      %s186 = sphi 0, %s188
      %s189 = sphi 0, %s186
      %s190 = sphi 0, %s189
      %s206 = sphi 0, %s190
      %s212 = sphi 0, %s214
      %s215 = sphi 0, %s212
      %s216 = sphi 0, %s215
      %s232 = sphi 0, %s216
      %s238 = sphi 0, %s240
      %s241 = sphi 0, %s238
      %s242 = sphi 0, %s241
      %s258 = sphi 0, %s242
      %s264 = sphi 0, %s266
      %s267 = sphi 0, %s264
      %s268 = sphi 0, %s267
      %s284 = sphi 0, %s268
      %s290 = sphi 0, %s292
      %s293 = sphi 0, %s290
      %s294 = sphi 0, %s293
      %s310 = sphi 0, %s294
      %s316 = sphi 0, %s318
      %s319 = sphi 0, %s316
      %s320 = sphi 0, %s319
      %s336 = sphi 0, %s320
      %s342 = sphi 0, %s344
      %s345 = sphi 0, %s342
      %s346 = sphi 0, %s345
      %s362 = sphi 0, %s346
      %s366 = sphi 0, %s366
      %s368 = sphi 0, %s366
      %s369 = sphi 0, %s368
      %s383 = sphi 0, %s369
    $region4: #{image_encoder_forward.4} parent=1 // loop_header_branch
      %28 = sbr.rel (%p26) target = $region8
    $region5: #{image_encoder_forward.4} parent=1 // loop_body
      %s30 = ssub.s32 %s25, 1
      %s31 = ssub.s32 %s25, 2
      %s32 = sadd.s32 %s25, 1
      %s34 = sadd.s32 %s33, 1
      %p37 = scmp.eq.s32.totalorder %s25, 1
      %p38 = scmp.ne.s32.totalorder %s33, %s35
      %p39 = scmp.eq.s32.totalorder %s25, 0
      %p40 = por %p38, %p39
      %p41 = scmp.ne.s32.totalorder %s33, %s35
      %p42 = scmp.eq.s32.totalorder %s30, 1
      %p43 = por %p41, %p42
      %p44 = scmp.ne.s32.totalorder %s35, %s36
      %p45 = scmp.eq.s32.totalorder %s30, 0
      %p46 = por %p44, %p45
      %p47 = scmp.ne.s32.totalorder %s35, %s36
      %p48 = scmp.eq.s32.totalorder %s31, 1
      %p49 = por %p47, %p48
      %p51 = scmp.ne.s32.totalorder %s36, %s50
      %p52 = scmp.eq.s32.totalorder %s31, 0
      %p53 = por %p51, %p52
      %s54 = ssub.s32 %s25, %s32
      %p55 = scmp.eq.s32.totalorder %s54, 0
      %s57 = sadd.s32 %s56, 1
      %s58 = scalar_select %p55, %s56, %s57
      %p61 = pneg %p55
      %p62 = scmp.eq.s32.totalorder %s25, 1
      %p63 = por %p61, %p62
      %p64 = scmp.ne.s32.totalorder %s56, %s59
      %p65 = scmp.eq.s32.totalorder %s25, 0
      %p66 = por %p64, %p65
      %p67 = scmp.ne.s32.totalorder %s56, %s59
      %p68 = scmp.eq.s32.totalorder %s30, 1
      %p69 = por %p67, %p68
      %p70 = scmp.ne.s32.totalorder %s59, %s60
      %p71 = scmp.eq.s32.totalorder %s30, 0
      %p72 = por %p70, %p71
      %p73 = scmp.ne.s32.totalorder %s59, %s60
      %p74 = scmp.eq.s32.totalorder %s31, 1
      %p75 = por %p73, %p74
      %p77 = scmp.ne.s32.totalorder %s60, %s76
      %p78 = scmp.eq.s32.totalorder %s31, 0
      %p79 = por %p77, %p78
      %s80 = ssub.s32 %s25, %s32
      %p81 = scmp.eq.s32.totalorder %s80, 0
      %s83 = sadd.s32 %s82, 1
      %s84 = scalar_select %p81, %s82, %s83
      %p87 = pneg %p81
      %p88 = scmp.eq.s32.totalorder %s25, 1
      %p89 = por %p87, %p88
      %p90 = scmp.ne.s32.totalorder %s82, %s85
      %p91 = scmp.eq.s32.totalorder %s25, 0
      %p92 = por %p90, %p91
      %p93 = scmp.ne.s32.totalorder %s82, %s85
      %p94 = scmp.eq.s32.totalorder %s30, 1
      %p95 = por %p93, %p94
      %p96 = scmp.ne.s32.totalorder %s85, %s86
      %p97 = scmp.eq.s32.totalorder %s30, 0
      %p98 = por %p96, %p97
      %p99 = scmp.ne.s32.totalorder %s85, %s86
      %p100 = scmp.eq.s32.totalorder %s31, 1
      %p101 = por %p99, %p100
      %p103 = scmp.ne.s32.totalorder %s86, %s102
      %p104 = scmp.eq.s32.totalorder %s31, 0
      %p105 = por %p103, %p104
      %s106 = ssub.s32 %s25, %s32
      %p107 = scmp.eq.s32.totalorder %s106, 0
      %s109 = sadd.s32 %s108, 1
      %s110 = scalar_select %p107, %s108, %s109
      %p113 = pneg %p107
      %p114 = scmp.eq.s32.totalorder %s25, 1
      %p115 = por %p113, %p114
      %p116 = scmp.ne.s32.totalorder %s108, %s111
      %p117 = scmp.eq.s32.totalorder %s25, 0
      %p118 = por %p116, %p117
      %p119 = scmp.ne.s32.totalorder %s108, %s111
      %p120 = scmp.eq.s32.totalorder %s30, 1
      %p121 = por %p119, %p120
      %p122 = scmp.ne.s32.totalorder %s111, %s112
      %p123 = scmp.eq.s32.totalorder %s30, 0
      %p124 = por %p122, %p123
      %p125 = scmp.ne.s32.totalorder %s111, %s112
      %p126 = scmp.eq.s32.totalorder %s31, 1
      %p127 = por %p125, %p126
      %p129 = scmp.ne.s32.totalorder %s112, %s128
      %p130 = scmp.eq.s32.totalorder %s31, 0
      %p131 = por %p129, %p130
      %s132 = ssub.s32 %s25, %s32
      %p133 = scmp.eq.s32.totalorder %s132, 0
      %s135 = sadd.s32 %s134, 1
      %s136 = scalar_select %p133, %s134, %s135
      %p139 = pneg %p133
      %p140 = scmp.eq.s32.totalorder %s25, 1
      %p141 = por %p139, %p140
      %p142 = scmp.ne.s32.totalorder %s134, %s137
      %p143 = scmp.eq.s32.totalorder %s25, 0
      %p144 = por %p142, %p143
      %p145 = scmp.ne.s32.totalorder %s134, %s137
      %p146 = scmp.eq.s32.totalorder %s30, 1
      %p147 = por %p145, %p146
      %p148 = scmp.ne.s32.totalorder %s137, %s138
      %p149 = scmp.eq.s32.totalorder %s30, 0
      %p150 = por %p148, %p149
      %p151 = scmp.ne.s32.totalorder %s137, %s138
      %p152 = scmp.eq.s32.totalorder %s31, 1
      %p153 = por %p151, %p152
      %p155 = scmp.ne.s32.totalorder %s138, %s154
      %p156 = scmp.eq.s32.totalorder %s31, 0
      %p157 = por %p155, %p156
      %s158 = ssub.s32 %s25, %s32
      %p159 = scmp.eq.s32.totalorder %s158, 0
      %s161 = sadd.s32 %s160, 1
      %s162 = scalar_select %p159, %s160, %s161
      %p165 = pneg %p159
      %p166 = scmp.eq.s32.totalorder %s25, 1
      %p167 = por %p165, %p166
      %p168 = scmp.ne.s32.totalorder %s160, %s163
      %p169 = scmp.eq.s32.totalorder %s25, 0
      %p170 = por %p168, %p169
      %p171 = scmp.ne.s32.totalorder %s160, %s163
      %p172 = scmp.eq.s32.totalorder %s30, 1
      %p173 = por %p171, %p172
      %p174 = scmp.ne.s32.totalorder %s163, %s164
      %p175 = scmp.eq.s32.totalorder %s30, 0
      %p176 = por %p174, %p175
      %p177 = scmp.ne.s32.totalorder %s163, %s164
      %p178 = scmp.eq.s32.totalorder %s31, 1
      %p179 = por %p177, %p178
      %p181 = scmp.ne.s32.totalorder %s164, %s180
      %p182 = scmp.eq.s32.totalorder %s31, 0
      %p183 = por %p181, %p182
      %s184 = ssub.s32 %s25, %s32
      %p185 = scmp.eq.s32.totalorder %s184, 0
      %s187 = sadd.s32 %s186, 1
      %s188 = scalar_select %p185, %s186, %s187
      %p191 = pneg %p185
      %p192 = scmp.eq.s32.totalorder %s25, 1
      %p193 = por %p191, %p192
      %p194 = scmp.ne.s32.totalorder %s186, %s189
      %p195 = scmp.eq.s32.totalorder %s25, 0
      %p196 = por %p194, %p195
      %p197 = scmp.ne.s32.totalorder %s186, %s189
      %p198 = scmp.eq.s32.totalorder %s30, 1
      %p199 = por %p197, %p198
      %p200 = scmp.ne.s32.totalorder %s189, %s190
      %p201 = scmp.eq.s32.totalorder %s30, 0
      %p202 = por %p200, %p201
      %p203 = scmp.ne.s32.totalorder %s189, %s190
      %p204 = scmp.eq.s32.totalorder %s31, 1
      %p205 = por %p203, %p204
      %p207 = scmp.ne.s32.totalorder %s190, %s206
      %p208 = scmp.eq.s32.totalorder %s31, 0
      %p209 = por %p207, %p208
      %s210 = ssub.s32 %s25, %s32
      %p211 = scmp.eq.s32.totalorder %s210, 0
      %s213 = sadd.s32 %s212, 1
      %s214 = scalar_select %p211, %s212, %s213
      %p217 = pneg %p211
      %p218 = scmp.eq.s32.totalorder %s25, 1
      %p219 = por %p217, %p218
      %p220 = scmp.ne.s32.totalorder %s212, %s215
      %p221 = scmp.eq.s32.totalorder %s25, 0
      %p222 = por %p220, %p221
      %p223 = scmp.ne.s32.totalorder %s212, %s215
      %p224 = scmp.eq.s32.totalorder %s30, 1
      %p225 = por %p223, %p224
      %p226 = scmp.ne.s32.totalorder %s215, %s216
      %p227 = scmp.eq.s32.totalorder %s30, 0
      %p228 = por %p226, %p227
      %p229 = scmp.ne.s32.totalorder %s215, %s216
      %p230 = scmp.eq.s32.totalorder %s31, 1
      %p231 = por %p229, %p230
      %p233 = scmp.ne.s32.totalorder %s216, %s232
      %p234 = scmp.eq.s32.totalorder %s31, 0
      %p235 = por %p233, %p234
      %s236 = ssub.s32 %s25, %s32
      %p237 = scmp.eq.s32.totalorder %s236, 0
      %s239 = sadd.s32 %s238, 1
      %s240 = scalar_select %p237, %s238, %s239
      %p243 = pneg %p237
      %p244 = scmp.eq.s32.totalorder %s25, 1
      %p245 = por %p243, %p244
      %p246 = scmp.ne.s32.totalorder %s238, %s241
      %p247 = scmp.eq.s32.totalorder %s25, 0
      %p248 = por %p246, %p247
      %p249 = scmp.ne.s32.totalorder %s238, %s241
      %p250 = scmp.eq.s32.totalorder %s30, 1
      %p251 = por %p249, %p250
      %p252 = scmp.ne.s32.totalorder %s241, %s242
      %p253 = scmp.eq.s32.totalorder %s30, 0
      %p254 = por %p252, %p253
      %p255 = scmp.ne.s32.totalorder %s241, %s242
      %p256 = scmp.eq.s32.totalorder %s31, 1
      %p257 = por %p255, %p256
      %p259 = scmp.ne.s32.totalorder %s242, %s258
      %p260 = scmp.eq.s32.totalorder %s31, 0
      %p261 = por %p259, %p260
      %s262 = ssub.s32 %s25, %s32
      %p263 = scmp.eq.s32.totalorder %s262, 0
      %s265 = sadd.s32 %s264, 1
      %s266 = scalar_select %p263, %s264, %s265
      %p269 = pneg %p263
      %p270 = scmp.eq.s32.totalorder %s25, 1
      %p271 = por %p269, %p270
      %p272 = scmp.ne.s32.totalorder %s264, %s267
      %p273 = scmp.eq.s32.totalorder %s25, 0
      %p274 = por %p272, %p273
      %p275 = scmp.ne.s32.totalorder %s264, %s267
      %p276 = scmp.eq.s32.totalorder %s30, 1
      %p277 = por %p275, %p276
      %p278 = scmp.ne.s32.totalorder %s267, %s268
      %p279 = scmp.eq.s32.totalorder %s30, 0
      %p280 = por %p278, %p279
      %p281 = scmp.ne.s32.totalorder %s267, %s268
      %p282 = scmp.eq.s32.totalorder %s31, 1
      %p283 = por %p281, %p282
      %p285 = scmp.ne.s32.totalorder %s268, %s284
      %p286 = scmp.eq.s32.totalorder %s31, 0
      %p287 = por %p285, %p286
      %s288 = ssub.s32 %s25, %s32
      %p289 = scmp.eq.s32.totalorder %s288, 0
      %s291 = sadd.s32 %s290, 1
      %s292 = scalar_select %p289, %s290, %s291
      %p295 = pneg %p289
      %p296 = scmp.eq.s32.totalorder %s25, 1
      %p297 = por %p295, %p296
      %p298 = scmp.ne.s32.totalorder %s290, %s293
      %p299 = scmp.eq.s32.totalorder %s25, 0
      %p300 = por %p298, %p299
      %p301 = scmp.ne.s32.totalorder %s290, %s293
      %p302 = scmp.eq.s32.totalorder %s30, 1
      %p303 = por %p301, %p302
      %p304 = scmp.ne.s32.totalorder %s293, %s294
      %p305 = scmp.eq.s32.totalorder %s30, 0
      %p306 = por %p304, %p305
      %p307 = scmp.ne.s32.totalorder %s293, %s294
      %p308 = scmp.eq.s32.totalorder %s31, 1
      %p309 = por %p307, %p308
      %p311 = scmp.ne.s32.totalorder %s294, %s310
      %p312 = scmp.eq.s32.totalorder %s31, 0
      %p313 = por %p311, %p312
      %s314 = ssub.s32 %s25, %s32
      %p315 = scmp.eq.s32.totalorder %s314, 0
      %s317 = sadd.s32 %s316, 1
      %s318 = scalar_select %p315, %s316, %s317
      %p321 = pneg %p315
      %p322 = scmp.eq.s32.totalorder %s25, 1
      %p323 = por %p321, %p322
      %p324 = scmp.ne.s32.totalorder %s316, %s319
      %p325 = scmp.eq.s32.totalorder %s25, 0
      %p326 = por %p324, %p325
      %p327 = scmp.ne.s32.totalorder %s316, %s319
      %p328 = scmp.eq.s32.totalorder %s30, 1
      %p329 = por %p327, %p328
      %p330 = scmp.ne.s32.totalorder %s319, %s320
      %p331 = scmp.eq.s32.totalorder %s30, 0
      %p332 = por %p330, %p331
      %p333 = scmp.ne.s32.totalorder %s319, %s320
      %p334 = scmp.eq.s32.totalorder %s31, 1
      %p335 = por %p333, %p334
      %p337 = scmp.ne.s32.totalorder %s320, %s336
      %p338 = scmp.eq.s32.totalorder %s31, 0
      %p339 = por %p337, %p338
      %s340 = ssub.s32 %s25, %s32
      %p341 = scmp.eq.s32.totalorder %s340, 0
      %s343 = sadd.s32 %s342, 1
      %s344 = scalar_select %p341, %s342, %s343
      %p347 = pneg %p341
      %p348 = scmp.eq.s32.totalorder %s25, 1
      %p349 = por %p347, %p348
      %p350 = scmp.ne.s32.totalorder %s342, %s345
      %p351 = scmp.eq.s32.totalorder %s25, 0
      %p352 = por %p350, %p351
      %p353 = scmp.ne.s32.totalorder %s342, %s345
      %p354 = scmp.eq.s32.totalorder %s30, 1
      %p355 = por %p353, %p354
      %p356 = scmp.ne.s32.totalorder %s345, %s346
      %p357 = scmp.eq.s32.totalorder %s30, 0
      %p358 = por %p356, %p357
      %p359 = scmp.ne.s32.totalorder %s345, %s346
      %p360 = scmp.eq.s32.totalorder %s31, 1
      %p361 = por %p359, %p360
      %p363 = scmp.ne.s32.totalorder %s346, %s362
      %p364 = scmp.eq.s32.totalorder %s31, 0
      %p365 = por %p363, %p364
      %s367 = sadd.s32 %s366, 1
      %p370 = scmp.eq.s32.totalorder %s25, 1
      %p371 = scmp.ne.s32.totalorder %s366, %s368
      %p372 = scmp.eq.s32.totalorder %s25, 0
      %p373 = por %p371, %p372
      %p374 = scmp.ne.s32.totalorder %s366, %s368
      %p375 = scmp.eq.s32.totalorder %s30, 1
      %p376 = por %p374, %p375
      %p377 = scmp.ne.s32.totalorder %s368, %s369
      %p378 = scmp.eq.s32.totalorder %s30, 0
      %p379 = por %p377, %p378
      %p380 = scmp.ne.s32.totalorder %s368, %s369
      %p381 = scmp.eq.s32.totalorder %s31, 1
      %p382 = por %p380, %p381
      %p384 = scmp.ne.s32.totalorder %s369, %s383
      %p385 = scmp.eq.s32.totalorder %s31, 0
      %p386 = por %p384, %p385
      %p387 = scmp.le.s32.totalorder 1, %s25
      %p388 = scmp.lt.s32.totalorder %s25, 3
      %p389 = pnand %p387, %p388
      %p390 = pneg %p389
      // Predicated region
      $region9: #{image_encoder_forward.4} parent=5 // pred_check
        _
      $region10: #{image_encoder_forward.4} parent=5 // pred_check_branch
        %392 = sbr.rel (%p389) target = $region12
      $region11: #{image_encoder_forward.4} parent=5 // pred_region
        %s393 = ssub.s32 %s25, 1
        // Predicated region
        $region13: #{image_encoder_forward.4} parent=11 // pred_check
          %p394 = pneg %p46
        $region14: #{image_encoder_forward.4} parent=11 // pred_check_branch
          %396 = sbr.rel (%p394) target = $region16
        $region15: #{image_encoder_forward.4} parent=11 // pred_region
          _
        $region16: #{image_encoder_forward.4} parent=11 // pred_fallthru
          _
      $region12: #{image_encoder_forward.4} parent=5 // pred_fallthru
        _
      %p397 = scmp.lt.s32.totalorder %s25, 2
      // Predicated region
      $region17: #{image_encoder_forward.4} parent=5 // pred_check
        %p398 = pneg %p397
      $region18: #{image_encoder_forward.4} parent=5 // pred_check_branch
        %400 = sbr.rel (%p398) target = $region20
      $region19: #{image_encoder_forward.4} parent=5 // pred_region
        // Predicated region
        $region21: #{image_encoder_forward.4} parent=19 // pred_check
          %p401 = pneg %p66
        $region22: #{image_encoder_forward.4} parent=19 // pred_check_branch
          %403 = sbr.rel (%p401) target = $region24
        $region23: #{image_encoder_forward.4} parent=19 // pred_region
          %p404 = scmp.lt.s32.totalorder %s25, 1
          %s405 = scalar_select %p404, %s25, 1
          %s406 = smul.addr %s405, 2
          %s407 = scalar_lea.vmem %s1, %s406
        $region24: #{image_encoder_forward.4} parent=19 // pred_fallthru
          _
        // Predicated region
        $region25: #{image_encoder_forward.4} parent=19 // pred_check
          %p408 = pneg %p92
        $region26: #{image_encoder_forward.4} parent=19 // pred_check_branch
          %410 = sbr.rel (%p408) target = $region28
        $region27: #{image_encoder_forward.4} parent=19 // pred_region
          %p411 = scmp.lt.s32.totalorder %s25, 1
          %s412 = scalar_select %p411, %s25, 1
          %s413 = smul.addr %s412, 2
          %s414 = scalar_lea.vmem %s2, %s413
        $region28: #{image_encoder_forward.4} parent=19 // pred_fallthru
          _
        // Predicated region
        $region29: #{image_encoder_forward.4} parent=19 // pred_check
          %p415 = pneg %p118
        $region30: #{image_encoder_forward.4} parent=19 // pred_check_branch
          %417 = sbr.rel (%p415) target = $region32
        $region31: #{image_encoder_forward.4} parent=19 // pred_region
          %s418 = sand.u32 %s108, 1
          %s419 = scalar_lea.sflag [#allocation4], %s418
          %s420 = sand.u32 %s108, 1
          %s421 = smul.addr %s420, 768
          %s422 = scalar_lea.vmem [#allocation3], %s421
          %s424 = ssub.s32 12288, 12288
          %425 = vsyncadd %s419, %s424
          %s426 = smul.addr %s25, 192
          %s427 = smul.addr %s426, 64
          %s428 = scalar_lea.hbm %s3, %s427
          %s429 = sshll.u32 %s422, 4
          %s430 = int_to_ptr.vmem [resolvable:$true] %s429
          %435 = dma.hbm_to_vmem [thread:$0]  %s428, 12288, %s430, %s419, 384, 384, 24
        $region32: #{image_encoder_forward.4} parent=19 // pred_fallthru
          _
        // Predicated region
        $region33: #{image_encoder_forward.4} parent=19 // pred_check
          %p436 = pneg %p144
        $region34: #{image_encoder_forward.4} parent=19 // pred_check_branch
          %438 = sbr.rel (%p436) target = $region36
        $region35: #{image_encoder_forward.4} parent=19 // pred_region
          %p439 = scmp.lt.s32.totalorder %s25, 1
          %s440 = scalar_select %p439, %s25, 1
          %s441 = smul.addr %s440, 6
          %s442 = scalar_lea.vmem %s4, %s441
        $region36: #{image_encoder_forward.4} parent=19 // pred_fallthru
          _
        // Predicated region
        $region37: #{image_encoder_forward.4} parent=19 // pred_check
          %p443 = pneg %p170
        $region38: #{image_encoder_forward.4} parent=19 // pred_check_branch
          %445 = sbr.rel (%p443) target = $region40
        $region39: #{image_encoder_forward.4} parent=19 // pred_region
          %p446 = scmp.lt.s32.totalorder %s25, 1
          %s447 = scalar_select %p446, %s25, 1
          %s448 = smul.addr %s447, 64
          %s449 = smul.addr %s448, 4
          %s450 = scalar_lea.vmem %s5, %s449
        $region40: #{image_encoder_forward.4} parent=19 // pred_fallthru
          _
        // Predicated region
        $region41: #{image_encoder_forward.4} parent=19 // pred_check
          %p451 = pneg %p196
        $region42: #{image_encoder_forward.4} parent=19 // pred_check_branch
          %453 = sbr.rel (%p451) target = $region44
        $region43: #{image_encoder_forward.4} parent=19 // pred_region
          %p454 = scmp.lt.s32.totalorder %s25, 1
          %s455 = scalar_select %p454, %s25, 1
          %s456 = smul.addr %s455, 2
          %s457 = scalar_lea.vmem %s6, %s456
        $region44: #{image_encoder_forward.4} parent=19 // pred_fallthru
          _
        // Predicated region
        $region45: #{image_encoder_forward.4} parent=19 // pred_check
          %p458 = pneg %p222
        $region46: #{image_encoder_forward.4} parent=19 // pred_check_branch
          %460 = sbr.rel (%p458) target = $region48
        $region47: #{image_encoder_forward.4} parent=19 // pred_region
          %p461 = scmp.lt.s32.totalorder %s25, 1
          %s462 = scalar_select %p461, %s25, 1
          %s463 = smul.addr %s462, 2
          %s464 = scalar_lea.vmem %s7, %s463
        $region48: #{image_encoder_forward.4} parent=19 // pred_fallthru
          _
        // Predicated region
        $region49: #{image_encoder_forward.4} parent=19 // pred_check
          %p465 = pneg %p248
        $region50: #{image_encoder_forward.4} parent=19 // pred_check_branch
          %467 = sbr.rel (%p465) target = $region52
        $region51: #{image_encoder_forward.4} parent=19 // pred_region
          %p468 = scmp.lt.s32.totalorder %s25, 1
          %s469 = scalar_select %p468, %s25, 1
          %s470 = smul.addr %s469, 2
          %s471 = scalar_lea.vmem %s8, %s470
        $region52: #{image_encoder_forward.4} parent=19 // pred_fallthru
          _
        // Predicated region
        $region53: #{image_encoder_forward.4} parent=19 // pred_check
          %p472 = pneg %p274
        $region54: #{image_encoder_forward.4} parent=19 // pred_check_branch
          %474 = sbr.rel (%p472) target = $region56
        $region55: #{image_encoder_forward.4} parent=19 // pred_region
          %s475 = sand.u32 %s25, 1
          %s476 = scalar_lea.sflag [#allocation6], %s475
          %s477 = sand.u32 %s264, 1
          %s478 = smul.addr %s477, 1024
          %s479 = scalar_lea.vmem [#allocation5], %s478
          %s481 = ssub.s32 16384, 16384
          %482 = vsyncadd %s476, %s481
          %s483 = smul.addr %s25, 256
          %s484 = smul.addr %s483, 64
          %s485 = scalar_lea.hbm %s9, %s484
          %s486 = sshll.u32 %s479, 4
          %s487 = int_to_ptr.vmem [resolvable:$true] %s486
          %492 = dma.hbm_to_vmem [thread:$0]  %s485, 16384, %s487, %s476, 512, 512, 32
        $region56: #{image_encoder_forward.4} parent=19 // pred_fallthru
          _
        // Predicated region
        $region57: #{image_encoder_forward.4} parent=19 // pred_check
          %p493 = pneg %p300
        $region58: #{image_encoder_forward.4} parent=19 // pred_check_branch
          %495 = sbr.rel (%p493) target = $region60
        $region59: #{image_encoder_forward.4} parent=19 // pred_region
          %p496 = scmp.lt.s32.totalorder %s25, 1
          %s497 = scalar_select %p496, %s25, 1
          %s498 = smul.addr %s497, 8
          %s499 = scalar_lea.vmem %s10, %s498
        $region60: #{image_encoder_forward.4} parent=19 // pred_fallthru
          _
        // Predicated region
        $region61: #{image_encoder_forward.4} parent=19 // pred_check
          %p500 = pneg %p326
        $region62: #{image_encoder_forward.4} parent=19 // pred_check_branch
          %502 = sbr.rel (%p500) target = $region64
        $region63: #{image_encoder_forward.4} parent=19 // pred_region
          %s503 = sand.u32 %s25, 1
          %s504 = scalar_lea.sflag [#allocation6], %s503
          %s505 = sand.u32 %s316, 1
          %s506 = smul.addr %s505, 1024
          %s507 = scalar_lea.vmem [#allocation7], %s506
          %s509 = ssub.s32 16384, 16384
          %510 = vsyncadd %s504, %s509
          %s511 = smul.addr %s25, 256
          %s512 = smul.addr %s511, 64
          %s513 = scalar_lea.hbm %s11, %s512
          %s514 = sshll.u32 %s507, 4
          %s515 = int_to_ptr.vmem [resolvable:$true] %s514
          %520 = dma.hbm_to_vmem [thread:$0]  %s513, 16384, %s515, %s504, 128, 128, 8
        $region64: #{image_encoder_forward.4} parent=19 // pred_fallthru
          _
        // Predicated region
        $region65: #{image_encoder_forward.4} parent=19 // pred_check
          %p521 = pneg %p352
        $region66: #{image_encoder_forward.4} parent=19 // pred_check_branch
          %523 = sbr.rel (%p521) target = $region68
        $region67: #{image_encoder_forward.4} parent=19 // pred_region
          %p524 = scmp.lt.s32.totalorder %s25, 1
          %s525 = scalar_select %p524, %s25, 1
          %s526 = smul.addr %s525, 2
          %s527 = scalar_lea.vmem %s12, %s526
        $region68: #{image_encoder_forward.4} parent=19 // pred_fallthru
          _
      $region20: #{image_encoder_forward.4} parent=5 // pred_fallthru
        _
      %p528 = scmp.le.s32.totalorder 1, %s25
      %p529 = scmp.lt.s32.totalorder %s25, 3
      %p530 = pnand %p528, %p529
      %p531 = pneg %p530
      // Predicated region
      $region69: #{image_encoder_forward.4} parent=5 // pred_check
        _
      $region70: #{image_encoder_forward.4} parent=5 // pred_check_branch
        %533 = sbr.rel (%p530) target = $region72
      $region71: #{image_encoder_forward.4} parent=5 // pred_region
        %s534 = ssub.s32 %s25, 1
        %s535 = sand.u32 %s111, 1
        %s536 = scalar_lea.sflag [#allocation4], %s535
        %s537 = sand.u32 %s111, 1
        %s538 = smul.addr %s537, 768
        %s539 = scalar_lea.vmem [#allocation3], %s538
        // Predicated region
        $region73: #{image_encoder_forward.4} parent=71 // pred_check
          %p540 = pneg %p124
        $region74: #{image_encoder_forward.4} parent=71 // pred_check_branch
          %542 = sbr.rel (%p540) target = $region76
        $region75: #{image_encoder_forward.4} parent=71 // pred_region
          %543 = dma.done %s536, 12288
        $region76: #{image_encoder_forward.4} parent=71 // pred_fallthru
          _
        %s544 = sand.u32 %s30, 1
        %s545 = scalar_lea.sflag [#allocation6], %s544
        %s546 = sand.u32 %s267, 1
        %s547 = smul.addr %s546, 1024
        %s548 = scalar_lea.vmem [#allocation5], %s547
        // Predicated region
        $region77: #{image_encoder_forward.4} parent=71 // pred_check
          %p549 = pneg %p280
        $region78: #{image_encoder_forward.4} parent=71 // pred_check_branch
          %551 = sbr.rel (%p549) target = $region80
        $region79: #{image_encoder_forward.4} parent=71 // pred_region
          %552 = dma.done %s545, 16384
        $region80: #{image_encoder_forward.4} parent=71 // pred_fallthru
          _
        %s553 = sand.u32 %s30, 1
        %s554 = scalar_lea.sflag [#allocation6], %s553
        %s555 = sand.u32 %s319, 1
        %s556 = smul.addr %s555, 1024
        %s557 = scalar_lea.vmem [#allocation7], %s556
        // Predicated region
        $region81: #{image_encoder_forward.4} parent=71 // pred_check
          %p558 = pneg %p332
        $region82: #{image_encoder_forward.4} parent=71 // pred_check_branch
          %560 = sbr.rel (%p558) target = $region84
        $region83: #{image_encoder_forward.4} parent=71 // pred_region
          %561 = dma.done %s554, 16384
        $region84: #{image_encoder_forward.4} parent=71 // pred_fallthru
          _
        %p562 = pneg %p46
        %p563 = pneg %p43
        %p564 = scmp.lt.s32.totalorder %s30, 1
        %s565 = scalar_select %p564, %s30, 1
        %s566 = smul.addr %s565, 2
        %s567 = scalar_lea.vmem %s1, %s566
        %p568 = pneg %p72
        %p569 = pneg %p69
        %p570 = scmp.lt.s32.totalorder %s30, 1
        %s571 = scalar_select %p570, %s30, 1
        %s572 = smul.addr %s571, 2
        %s573 = scalar_lea.vmem %s2, %s572
        %p574 = pneg %p98
        %p575 = pneg %p95
        %s576 = sand.u32 %s111, 1
        %s577 = scalar_lea.sflag [#allocation4], %s576
        %s578 = sand.u32 %s111, 1
        %s579 = smul.addr %s578, 768
        %s580 = scalar_lea.vmem [#allocation3], %s579
        %p581 = pneg %p124
        %p582 = pneg %p121
        %p583 = scmp.lt.s32.totalorder %s30, 1
        %s584 = scalar_select %p583, %s30, 1
        %s585 = smul.addr %s584, 6
        %s586 = scalar_lea.vmem %s4, %s585
        %p587 = pneg %p150
        %p588 = pneg %p147
        %p589 = scmp.lt.s32.totalorder %s30, 1
        %s590 = scalar_select %p589, %s30, 1
        %s591 = smul.addr %s590, 64
        %s592 = smul.addr %s591, 4
        %s593 = scalar_lea.vmem %s5, %s592
        %p594 = pneg %p176
        %p595 = pneg %p173
        %p596 = scmp.lt.s32.totalorder %s30, 1
        %s597 = scalar_select %p596, %s30, 1
        %s598 = smul.addr %s597, 2
        %s599 = scalar_lea.vmem %s6, %s598
        %p600 = pneg %p202
        %p601 = pneg %p199
        %p602 = scmp.lt.s32.totalorder %s30, 1
        %s603 = scalar_select %p602, %s30, 1
        %s604 = smul.addr %s603, 2
        %s605 = scalar_lea.vmem %s7, %s604
        %p606 = pneg %p228
        %p607 = pneg %p225
        %p608 = scmp.lt.s32.totalorder %s30, 1
        %s609 = scalar_select %p608, %s30, 1
        %s610 = smul.addr %s609, 2
        %s611 = scalar_lea.vmem %s8, %s610
        %p612 = pneg %p254
        %p613 = pneg %p251
        %s614 = sand.u32 %s30, 1
        %s615 = scalar_lea.sflag [#allocation6], %s614
        %s616 = sand.u32 %s267, 1
        %s617 = smul.addr %s616, 1024
        %s618 = scalar_lea.vmem [#allocation5], %s617
        %p619 = pneg %p280
        %p620 = pneg %p277
        %p621 = scmp.lt.s32.totalorder %s30, 1
        %s622 = scalar_select %p621, %s30, 1
        %s623 = smul.addr %s622, 8
        %s624 = scalar_lea.vmem %s10, %s623
        %p625 = pneg %p306
        %p626 = pneg %p303
        %s627 = sand.u32 %s30, 1
        %s628 = scalar_lea.sflag [#allocation6], %s627
        %s629 = sand.u32 %s319, 1
        %s630 = smul.addr %s629, 1024
        %s631 = scalar_lea.vmem [#allocation7], %s630
        %p632 = pneg %p332
        %p633 = pneg %p329
        %p634 = scmp.lt.s32.totalorder %s30, 1
        %s635 = scalar_select %p634, %s30, 1
        %s636 = smul.addr %s635, 2
        %s637 = scalar_lea.vmem %s12, %s636
        %p638 = pneg %p358
        %p639 = pneg %p355
        %p640 = pneg %p379
        %p641 = pneg %p376
        %p642 = scmp.lt.s32.totalorder %s30, 1
        %s643 = scalar_select %p642, %s30, 1
        %s644 = smul.addr %s643, 2
        %s645 = scalar_lea.vmem %s1, %s644
        %p646 = scmp.lt.s32.totalorder %s30, 1
        %s647 = scalar_select %p646, %s30, 1
        %s648 = smul.addr %s647, 2
        %s649 = scalar_lea.vmem %s2, %s648
        %p650 = scmp.lt.s32.totalorder %s30, 1
        %s651 = scalar_select %p650, %s30, 1
        %s652 = smul.addr %s651, 6
        %s653 = scalar_lea.vmem %s4, %s652
        %p654 = scmp.lt.s32.totalorder %s30, 1
        %s655 = scalar_select %p654, %s30, 1
        %s656 = smul.addr %s655, 64
        %s657 = smul.addr %s656, 4
        %s658 = scalar_lea.vmem %s5, %s657
        %p659 = scmp.lt.s32.totalorder %s30, 1
        %s660 = scalar_select %p659, %s30, 1
        %s661 = smul.addr %s660, 2
        %s662 = scalar_lea.vmem %s6, %s661
        %p663 = scmp.lt.s32.totalorder %s30, 1
        %s664 = scalar_select %p663, %s30, 1
        %s665 = smul.addr %s664, 2
        %s666 = scalar_lea.vmem %s7, %s665
        %p667 = scmp.lt.s32.totalorder %s30, 1
        %s668 = scalar_select %p667, %s30, 1
        %s669 = smul.addr %s668, 2
        %s670 = scalar_lea.vmem %s8, %s669
        %p671 = scmp.lt.s32.totalorder %s30, 1
        %s672 = scalar_select %p671, %s30, 1
        %s673 = smul.addr %s672, 8
        %s674 = scalar_lea.vmem %s10, %s673
        %p675 = scmp.lt.s32.totalorder %s30, 1
        %s676 = scalar_select %p675, %s30, 1
        %s677 = smul.addr %s676, 2
        %s678 = scalar_lea.vmem %s12, %s677
        %p680 = scmp.eq.s32.totalorder %s30, 0
        // Predicated region
        $region85: #{image_encoder_forward.4} parent=71 // pred_check
          %p681 = pneg %p680
        $region86: #{image_encoder_forward.4} parent=71 // pred_check_branch
          %683 = sbr.rel (%p681) target = $region88
        $region87: #{image_encoder_forward.4} parent=71 // pred_region
          %v684 = vld [vmem:[%s0] sm:$0xff]
          %v685 = vld [vmem:[%s0 + $0x8] sm:$0xff]
          %v686 = vld [vmem:[%s0 + $0x10] sm:$0xff]
          %v687 = vld [vmem:[%s0 + $0x18] sm:$0xff]
          %688 = vst [vmem:[#allocation2] sm:$0xff] %v684
          %689 = vst [vmem:[#allocation2 + $0x8] sm:$0xff] %v685
          %690 = vst [vmem:[#allocation2 + $0x10] sm:$0xff] %v686
          %691 = vst [vmem:[#allocation2 + $0x18] sm:$0xff] %v687
        $region88: #{image_encoder_forward.4} parent=71 // pred_fallthru
          _
        %v692 = vld [vmem:[#allocation2] sm:$0xff]
        %v693 = vld [vmem:[#allocation2 + $0x8] sm:$0xff]
        %v694 = vld [vmem:[#allocation2 + $0x10] sm:$0xff]
        %v695 = vld [vmem:[#allocation2 + $0x18] sm:$0xff]
        %v696 = vld [vmem:[%s645] sm:$0x3]
        %v697 = vld [vmem:[%s649] sm:$0x3]
        %v698 = vadd.f32 %v692, %v693
        %699 = vadd.xlane.f32.xlu0 %v698
        %v700 = vpop.xlane.xlu0 %699
        %v701 = vadd.f32 %v694, %v695
        %702 = vadd.xlane.f32.xlu0 %v701
        %v703 = vpop.xlane.xlu0 %702
        %v704 = vrcp.pop 256.0
        %v705 = vmul.f32 %v700, %v704
        %v706 = vmul.f32 %v703, %v704
        %v707 = vsub.f32 %v692, %v705
        %v708 = vsub.f32 %v693, %v705
        %v709 = vsub.f32 %v694, %v706
        %v710 = vsub.f32 %v695, %v706
        %v711 = vmul.f32 %v707, %v707
        %v712 = vmul.f32 %v708, %v708
        %v713 = vmul.f32 %v709, %v709
        %v714 = vmul.f32 %v710, %v710
        %v715 = vadd.f32 %v711, %v712
        %716 = vadd.xlane.f32.xlu0 %v715
        %v717 = vpop.xlane.xlu0 %716
        %v718 = vadd.f32 %v713, %v714
        %719 = vadd.xlane.f32.xlu0 %v718
        %v720 = vpop.xlane.xlu0 %719
        %v721 = vmul.f32 %v717, %v704
        %v722 = vmul.f32 %v720, %v704
        %v723 = vadd.f32 %v721, 1e-05
        %v724 = vadd.f32 %v722, 1e-05
        %v725 = vrsqrt.pop %v723
        %v726 = vrsqrt.pop %v724
        %v727 = vmul.f32 %v707, %v725
        %v728 = vmul.f32 %v708, %v725
        %v729 = vmul.f32 %v709, %v726
        %v730 = vmul.f32 %v710, %v726
        %v732 = vlaneseq
        %v733 = vshrl.u32 %v732, 7
        %v734 = vsub.s32 0, %v733
        %v735 = vrot.slane %v696, %v734
        %v736 = vlaneseq
        %v737 = vshrl.u32 %v736, 7
        %v738 = vsub.s32 1, %v737
        %v739 = vrot.slane %v696, %v738
        %v742 = vmul.f32 %v727, %v735
        %v743 = vmul.f32 %v728, %v739
        %v744 = vmul.f32 %v729, %v735
        %v745 = vmul.f32 %v730, %v739
        %v747 = vlaneseq
        %v748 = vshrl.u32 %v747, 7
        %v749 = vsub.s32 0, %v748
        %v750 = vrot.slane %v697, %v749
        %v751 = vlaneseq
        %v752 = vshrl.u32 %v751, 7
        %v753 = vsub.s32 1, %v752
        %v754 = vrot.slane %v697, %v753
        %v757 = vadd.f32 %v742, %v750
        %v758 = vadd.f32 %v743, %v754
        %v759 = vadd.f32 %v744, %v750
        %v760 = vadd.f32 %v745, %v754
        %v761 = vpack.c.bf16 %v759, %v757
        %v762 = vpack.c.bf16 %v760, %v758
        %v763 = vld [vmem:[%s539] sm:$0xff]
        %v764 = vld [vmem:[%s539 + $0x8] sm:$0xff]
        %v765 = vld [vmem:[%s539 + $0x10] sm:$0xff]
        %v766 = vld [vmem:[%s539 + $0x18] sm:$0xff]
        %v767 = vld [vmem:[%s539 + $0x20] sm:$0xff]
        %v768 = vld [vmem:[%s539 + $0x28] sm:$0xff]
        %v769 = vld [vmem:[%s539 + $0x30] sm:$0xff]
        %v770 = vld [vmem:[%s539 + $0x38] sm:$0xff]
        %v771 = vld [vmem:[%s539 + $0x40] sm:$0xff]
        %v772 = vld [vmem:[%s539 + $0x48] sm:$0xff]
        %v773 = vld [vmem:[%s539 + $0x50] sm:$0xff]
        %v774 = vld [vmem:[%s539 + $0x58] sm:$0xff]
        %v775 = vld [vmem:[%s539 + $0x60] sm:$0xff]
        %v776 = vld [vmem:[%s539 + $0x68] sm:$0xff]
        %v777 = vld [vmem:[%s539 + $0x70] sm:$0xff]
        %v778 = vld [vmem:[%s539 + $0x78] sm:$0xff]
        %v779 = vld [vmem:[%s539 + $0x80] sm:$0xff]
        %v780 = vld [vmem:[%s539 + $0x88] sm:$0xff]
        %v781 = vld [vmem:[%s539 + $0x90] sm:$0xff]
        %v782 = vld [vmem:[%s539 + $0x98] sm:$0xff]
        %v783 = vld [vmem:[%s539 + $0xa0] sm:$0xff]
        %v784 = vld [vmem:[%s539 + $0xa8] sm:$0xff]
        %v785 = vld [vmem:[%s539 + $0xb0] sm:$0xff]
        %v786 = vld [vmem:[%s539 + $0xb8] sm:$0xff]
        %v787 = vld [vmem:[%s539 + $0xc0] sm:$0xff]
        %v788 = vld [vmem:[%s539 + $0xc8] sm:$0xff]
        %v789 = vld [vmem:[%s539 + $0xd0] sm:$0xff]
        %v790 = vld [vmem:[%s539 + $0xd8] sm:$0xff]
        %v791 = vld [vmem:[%s539 + $0xe0] sm:$0xff]
        %v792 = vld [vmem:[%s539 + $0xe8] sm:$0xff]
        %v793 = vld [vmem:[%s539 + $0xf0] sm:$0xff]
        %v794 = vld [vmem:[%s539 + $0xf8] sm:$0xff]
        %v795 = vld [vmem:[%s539 + $0x100] sm:$0xff]
        %v796 = vld [vmem:[%s539 + $0x108] sm:$0xff]
        %v797 = vld [vmem:[%s539 + $0x110] sm:$0xff]
        %v798 = vld [vmem:[%s539 + $0x118] sm:$0xff]
        %v799 = vld [vmem:[%s539 + $0x120] sm:$0xff]
        %v800 = vld [vmem:[%s539 + $0x128] sm:$0xff]
        %v801 = vld [vmem:[%s539 + $0x130] sm:$0xff]
        %v802 = vld [vmem:[%s539 + $0x138] sm:$0xff]
        %v803 = vld [vmem:[%s539 + $0x140] sm:$0xff]
        %v804 = vld [vmem:[%s539 + $0x148] sm:$0xff]
        %v805 = vld [vmem:[%s539 + $0x150] sm:$0xff]
        %v806 = vld [vmem:[%s539 + $0x158] sm:$0xff]
        %v807 = vld [vmem:[%s539 + $0x160] sm:$0xff]
        %v808 = vld [vmem:[%s539 + $0x168] sm:$0xff]
        %v809 = vld [vmem:[%s539 + $0x170] sm:$0xff]
        %v810 = vld [vmem:[%s539 + $0x178] sm:$0xff]
        %v811 = vld [vmem:[%s539 + $0x180] sm:$0xff]
        %v812 = vld [vmem:[%s539 + $0x188] sm:$0xff]
        %v813 = vld [vmem:[%s539 + $0x190] sm:$0xff]
        %v814 = vld [vmem:[%s539 + $0x198] sm:$0xff]
        %v815 = vld [vmem:[%s539 + $0x1a0] sm:$0xff]
        %v816 = vld [vmem:[%s539 + $0x1a8] sm:$0xff]
        %v817 = vld [vmem:[%s539 + $0x1b0] sm:$0xff]
        %v818 = vld [vmem:[%s539 + $0x1b8] sm:$0xff]
        %v819 = vld [vmem:[%s539 + $0x1c0] sm:$0xff]
        %v820 = vld [vmem:[%s539 + $0x1c8] sm:$0xff]
        %v821 = vld [vmem:[%s539 + $0x1d0] sm:$0xff]
        %v822 = vld [vmem:[%s539 + $0x1d8] sm:$0xff]
        %v823 = vld [vmem:[%s539 + $0x1e0] sm:$0xff]
        %v824 = vld [vmem:[%s539 + $0x1e8] sm:$0xff]
        %v825 = vld [vmem:[%s539 + $0x1f0] sm:$0xff]
        %v826 = vld [vmem:[%s539 + $0x1f8] sm:$0xff]
        %v827 = vld [vmem:[%s539 + $0x200] sm:$0xff]
        %v828 = vld [vmem:[%s539 + $0x208] sm:$0xff]
        %v829 = vld [vmem:[%s539 + $0x210] sm:$0xff]
        %v830 = vld [vmem:[%s539 + $0x218] sm:$0xff]
        %v831 = vld [vmem:[%s539 + $0x220] sm:$0xff]
        %v832 = vld [vmem:[%s539 + $0x228] sm:$0xff]
        %v833 = vld [vmem:[%s539 + $0x230] sm:$0xff]
        %v834 = vld [vmem:[%s539 + $0x238] sm:$0xff]
        %v835 = vld [vmem:[%s539 + $0x240] sm:$0xff]
        %v836 = vld [vmem:[%s539 + $0x248] sm:$0xff]
        %v837 = vld [vmem:[%s539 + $0x250] sm:$0xff]
        %v838 = vld [vmem:[%s539 + $0x258] sm:$0xff]
        %v839 = vld [vmem:[%s539 + $0x260] sm:$0xff]
        %v840 = vld [vmem:[%s539 + $0x268] sm:$0xff]
        %v841 = vld [vmem:[%s539 + $0x270] sm:$0xff]
        %v842 = vld [vmem:[%s539 + $0x278] sm:$0xff]
        %v843 = vld [vmem:[%s539 + $0x280] sm:$0xff]
        %v844 = vld [vmem:[%s539 + $0x288] sm:$0xff]
        %v845 = vld [vmem:[%s539 + $0x290] sm:$0xff]
        %v846 = vld [vmem:[%s539 + $0x298] sm:$0xff]
        %v847 = vld [vmem:[%s539 + $0x2a0] sm:$0xff]
        %v848 = vld [vmem:[%s539 + $0x2a8] sm:$0xff]
        %v849 = vld [vmem:[%s539 + $0x2b0] sm:$0xff]
        %v850 = vld [vmem:[%s539 + $0x2b8] sm:$0xff]
        %v851 = vld [vmem:[%s539 + $0x2c0] sm:$0xff]
        %v852 = vld [vmem:[%s539 + $0x2c8] sm:$0xff]
        %v853 = vld [vmem:[%s539 + $0x2d0] sm:$0xff]
        %v854 = vld [vmem:[%s539 + $0x2d8] sm:$0xff]
        %v855 = vld [vmem:[%s539 + $0x2e0] sm:$0xff]
        %v856 = vld [vmem:[%s539 + $0x2e8] sm:$0xff]
        %v857 = vld [vmem:[%s539 + $0x2f0] sm:$0xff]
        %v858 = vld [vmem:[%s539 + $0x2f8] sm:$0xff]
        %v859 = vld [vmem:[%s653] sm:$0x3f]
        %v861 = vlaneseq
        %v862 = vshrl.u32 %v861, 7
        %v863 = vsub.s32 0, %v862
        %v864 = vrot.slane %v859, %v863
        %v865 = vlaneseq
        %v866 = vshrl.u32 %v865, 7
        %v867 = vsub.s32 1, %v866
        %v868 = vrot.slane %v859, %v867
        %v869 = vlaneseq
        %v870 = vshrl.u32 %v869, 7
        %v871 = vsub.s32 2, %v870
        %v872 = vrot.slane %v859, %v871
        %v873 = vlaneseq
        %v874 = vshrl.u32 %v873, 7
        %v875 = vsub.s32 3, %v874
        %v876 = vrot.slane %v859, %v875
        %v877 = vlaneseq
        %v878 = vshrl.u32 %v877, 7
        %v879 = vsub.s32 4, %v878
        %v880 = vrot.slane %v859, %v879
        %v881 = vlaneseq
        %v882 = vshrl.u32 %v881, 7
        %v883 = vsub.s32 5, %v882
        %v884 = vrot.slane %v859, %v883
        %v987 = vunpack.c.l.b16 %v763
        %v988 = vunpack.c.h.b16 %v763
        %v989 = vunpack.c.l.b16 %v764
        %v990 = vunpack.c.h.b16 %v764
        %v991 = vunpack.c.l.b16 %v765
        %v992 = vunpack.c.h.b16 %v765
        %v993 = vunpack.c.l.b16 %v766
        %v994 = vunpack.c.h.b16 %v766
        %v995 = vunpack.c.l.b16 %v767
        %v996 = vunpack.c.h.b16 %v767
        %v997 = vunpack.c.l.b16 %v768
        %v998 = vunpack.c.h.b16 %v768
        %v999 = vunpack.c.l.b16 %v769
        %v1000 = vunpack.c.h.b16 %v769
        %v1001 = vunpack.c.l.b16 %v770
        %v1002 = vunpack.c.h.b16 %v770
        %v1003 = vunpack.c.l.b16 %v771
        %v1004 = vunpack.c.h.b16 %v771
        %v1005 = vunpack.c.l.b16 %v772
        %v1006 = vunpack.c.h.b16 %v772
        %v1007 = vunpack.c.l.b16 %v773
        %v1008 = vunpack.c.h.b16 %v773
        %v1009 = vunpack.c.l.b16 %v774
        %v1010 = vunpack.c.h.b16 %v774
        %v1011 = vunpack.c.l.b16 %v775
        %v1012 = vunpack.c.h.b16 %v775
        %v1013 = vunpack.c.l.b16 %v776
        %v1014 = vunpack.c.h.b16 %v776
        %v1015 = vunpack.c.l.b16 %v777
        %v1016 = vunpack.c.h.b16 %v777
        %v1017 = vunpack.c.l.b16 %v778
        %v1018 = vunpack.c.h.b16 %v778
        %v1019 = vunpack.c.l.b16 %v779
        %v1020 = vunpack.c.h.b16 %v779
        %v1021 = vunpack.c.l.b16 %v780
        %v1022 = vunpack.c.h.b16 %v780
        %v1023 = vunpack.c.l.b16 %v781
        %v1024 = vunpack.c.h.b16 %v781
        %v1025 = vunpack.c.l.b16 %v782
        %v1026 = vunpack.c.h.b16 %v782
        %v1027 = vunpack.c.l.b16 %v783
        %v1028 = vunpack.c.h.b16 %v783
        %v1029 = vunpack.c.l.b16 %v784
        %v1030 = vunpack.c.h.b16 %v784
        %v1031 = vunpack.c.l.b16 %v785
        %v1032 = vunpack.c.h.b16 %v785
        %v1033 = vunpack.c.l.b16 %v786
        %v1034 = vunpack.c.h.b16 %v786
        %v1035 = vunpack.c.l.b16 %v787
        %v1036 = vunpack.c.h.b16 %v787
        %v1037 = vunpack.c.l.b16 %v788
        %v1038 = vunpack.c.h.b16 %v788
        %v1039 = vunpack.c.l.b16 %v789
        %v1040 = vunpack.c.h.b16 %v789
        %v1041 = vunpack.c.l.b16 %v790
        %v1042 = vunpack.c.h.b16 %v790
        %v1043 = vunpack.c.l.b16 %v791
        %v1044 = vunpack.c.h.b16 %v791
        %v1045 = vunpack.c.l.b16 %v792
        %v1046 = vunpack.c.h.b16 %v792
        %v1047 = vunpack.c.l.b16 %v793
        %v1048 = vunpack.c.h.b16 %v793
        %v1049 = vunpack.c.l.b16 %v794
        %v1050 = vunpack.c.h.b16 %v794
        %v1051 = vunpack.c.l.b16 %v795
        %v1052 = vunpack.c.h.b16 %v795
        %v1053 = vunpack.c.l.b16 %v796
        %v1054 = vunpack.c.h.b16 %v796
        %v1055 = vunpack.c.l.b16 %v797
        %v1056 = vunpack.c.h.b16 %v797
        %v1057 = vunpack.c.l.b16 %v798
        %v1058 = vunpack.c.h.b16 %v798
        %v1059 = vunpack.c.l.b16 %v799
        %v1060 = vunpack.c.h.b16 %v799
        %v1061 = vunpack.c.l.b16 %v800
        %v1062 = vunpack.c.h.b16 %v800
        %v1063 = vunpack.c.l.b16 %v801
        %v1064 = vunpack.c.h.b16 %v801
        %v1065 = vunpack.c.l.b16 %v802
        %v1066 = vunpack.c.h.b16 %v802
        %v1067 = vunpack.c.l.b16 %v803
        %v1068 = vunpack.c.h.b16 %v803
        %v1069 = vunpack.c.l.b16 %v804
        %v1070 = vunpack.c.h.b16 %v804
        %v1071 = vunpack.c.l.b16 %v805
        %v1072 = vunpack.c.h.b16 %v805
        %v1073 = vunpack.c.l.b16 %v806
        %v1074 = vunpack.c.h.b16 %v806
        %v1075 = vunpack.c.l.b16 %v807
        %v1076 = vunpack.c.h.b16 %v807
        %v1077 = vunpack.c.l.b16 %v808
        %v1078 = vunpack.c.h.b16 %v808
        %v1079 = vunpack.c.l.b16 %v809
        %v1080 = vunpack.c.h.b16 %v809
        %v1081 = vunpack.c.l.b16 %v810
        %v1082 = vunpack.c.h.b16 %v810
        %v1083 = vunpack.c.l.b16 %v811
        %v1084 = vunpack.c.h.b16 %v811
        %v1085 = vunpack.c.l.b16 %v812
        %v1086 = vunpack.c.h.b16 %v812
        %v1087 = vunpack.c.l.b16 %v813
        %v1088 = vunpack.c.h.b16 %v813
        %v1089 = vunpack.c.l.b16 %v814
        %v1090 = vunpack.c.h.b16 %v814
        %v1091 = vunpack.c.l.b16 %v815
        %v1092 = vunpack.c.h.b16 %v815
        %v1093 = vunpack.c.l.b16 %v816
        %v1094 = vunpack.c.h.b16 %v816
        %v1095 = vunpack.c.l.b16 %v817
        %v1096 = vunpack.c.h.b16 %v817
        %v1097 = vunpack.c.l.b16 %v818
        %v1098 = vunpack.c.h.b16 %v818
        %v1099 = vunpack.c.l.b16 %v819
        %v1100 = vunpack.c.h.b16 %v819
        %v1101 = vunpack.c.l.b16 %v820
        %v1102 = vunpack.c.h.b16 %v820
        %v1103 = vunpack.c.l.b16 %v821
        %v1104 = vunpack.c.h.b16 %v821
        %v1105 = vunpack.c.l.b16 %v822
        %v1106 = vunpack.c.h.b16 %v822
        %v1107 = vunpack.c.l.b16 %v823
        %v1108 = vunpack.c.h.b16 %v823
        %v1109 = vunpack.c.l.b16 %v824
        %v1110 = vunpack.c.h.b16 %v824
        %v1111 = vunpack.c.l.b16 %v825
        %v1112 = vunpack.c.h.b16 %v825
        %v1113 = vunpack.c.l.b16 %v826
        %v1114 = vunpack.c.h.b16 %v826
        %v1115 = vunpack.c.l.b16 %v827
        %v1116 = vunpack.c.h.b16 %v827
        %v1117 = vunpack.c.l.b16 %v828
        %v1118 = vunpack.c.h.b16 %v828
        %v1119 = vunpack.c.l.b16 %v829
        %v1120 = vunpack.c.h.b16 %v829
        %v1121 = vunpack.c.l.b16 %v830
        %v1122 = vunpack.c.h.b16 %v830
        %v1123 = vunpack.c.l.b16 %v831
        %v1124 = vunpack.c.h.b16 %v831
        %v1125 = vunpack.c.l.b16 %v832
        %v1126 = vunpack.c.h.b16 %v832
        %v1127 = vunpack.c.l.b16 %v833
        %v1128 = vunpack.c.h.b16 %v833
        %v1129 = vunpack.c.l.b16 %v834
        %v1130 = vunpack.c.h.b16 %v834
        %v1131 = vunpack.c.l.b16 %v835
        %v1132 = vunpack.c.h.b16 %v835
        %v1133 = vunpack.c.l.b16 %v836
        %v1134 = vunpack.c.h.b16 %v836
        %v1135 = vunpack.c.l.b16 %v837
        %v1136 = vunpack.c.h.b16 %v837
        %v1137 = vunpack.c.l.b16 %v838
        %v1138 = vunpack.c.h.b16 %v838
        %v1139 = vunpack.c.l.b16 %v839
        %v1140 = vunpack.c.h.b16 %v839
        %v1141 = vunpack.c.l.b16 %v840
        %v1142 = vunpack.c.h.b16 %v840
        %v1143 = vunpack.c.l.b16 %v841
        %v1144 = vunpack.c.h.b16 %v841
        %v1145 = vunpack.c.l.b16 %v842
        %v1146 = vunpack.c.h.b16 %v842
        %v1147 = vunpack.c.l.b16 %v843
        %v1148 = vunpack.c.h.b16 %v843
        %v1149 = vunpack.c.l.b16 %v844
        %v1150 = vunpack.c.h.b16 %v844
        %v1151 = vunpack.c.l.b16 %v845
        %v1152 = vunpack.c.h.b16 %v845
        %v1153 = vunpack.c.l.b16 %v846
        %v1154 = vunpack.c.h.b16 %v846
        %v1155 = vunpack.c.l.b16 %v847
        %v1156 = vunpack.c.h.b16 %v847
        %v1157 = vunpack.c.l.b16 %v848
        %v1158 = vunpack.c.h.b16 %v848
        %v1159 = vunpack.c.l.b16 %v849
        %v1160 = vunpack.c.h.b16 %v849
        %v1161 = vunpack.c.l.b16 %v850
        %v1162 = vunpack.c.h.b16 %v850
        %v1163 = vunpack.c.l.b16 %v851
        %v1164 = vunpack.c.h.b16 %v851
        %v1165 = vunpack.c.l.b16 %v852
        %v1166 = vunpack.c.h.b16 %v852
        %v1167 = vunpack.c.l.b16 %v853
        %v1168 = vunpack.c.h.b16 %v853
        %v1169 = vunpack.c.l.b16 %v854
        %v1170 = vunpack.c.h.b16 %v854
        %v1171 = vunpack.c.l.b16 %v855
        %v1172 = vunpack.c.h.b16 %v855
        %v1173 = vunpack.c.l.b16 %v856
        %v1174 = vunpack.c.h.b16 %v856
        %v1175 = vunpack.c.l.b16 %v857
        %v1176 = vunpack.c.h.b16 %v857
        %v1177 = vunpack.c.l.b16 %v858
        %v1178 = vunpack.c.h.b16 %v858
        %v1179 = vpack.c.b16 %v993, %v987
        %v1180 = vpack.c.b16 %v994, %v988
        %v1181 = vpack.c.b16 %v995, %v989
        %v1182 = vpack.c.b16 %v996, %v990
        %v1183 = vpack.c.b16 %v997, %v991
        %v1184 = vpack.c.b16 %v998, %v992
        %v1185 = vpack.c.b16 %v1005, %v999
        %v1186 = vpack.c.b16 %v1006, %v1000
        %v1187 = vpack.c.b16 %v1007, %v1001
        %v1188 = vpack.c.b16 %v1008, %v1002
        %v1189 = vpack.c.b16 %v1009, %v1003
        %v1190 = vpack.c.b16 %v1010, %v1004
        %v1191 = vpack.c.b16 %v1017, %v1011
        %v1192 = vpack.c.b16 %v1018, %v1012
        %v1193 = vpack.c.b16 %v1019, %v1013
        %v1194 = vpack.c.b16 %v1020, %v1014
        %v1195 = vpack.c.b16 %v1021, %v1015
        %v1196 = vpack.c.b16 %v1022, %v1016
        %v1197 = vpack.c.b16 %v1029, %v1023
        %v1198 = vpack.c.b16 %v1030, %v1024
        %v1199 = vpack.c.b16 %v1031, %v1025
        %v1200 = vpack.c.b16 %v1032, %v1026
        %v1201 = vpack.c.b16 %v1033, %v1027
        %v1202 = vpack.c.b16 %v1034, %v1028
        %v1203 = vpack.c.b16 %v1041, %v1035
        %v1204 = vpack.c.b16 %v1042, %v1036
        %v1205 = vpack.c.b16 %v1043, %v1037
        %v1206 = vpack.c.b16 %v1044, %v1038
        %v1207 = vpack.c.b16 %v1045, %v1039
        %v1208 = vpack.c.b16 %v1046, %v1040
        %v1209 = vpack.c.b16 %v1053, %v1047
        %v1210 = vpack.c.b16 %v1054, %v1048
        %v1211 = vpack.c.b16 %v1055, %v1049
        %v1212 = vpack.c.b16 %v1056, %v1050
        %v1213 = vpack.c.b16 %v1057, %v1051
        %v1214 = vpack.c.b16 %v1058, %v1052
        %v1215 = vpack.c.b16 %v1065, %v1059
        %v1216 = vpack.c.b16 %v1066, %v1060
        %v1217 = vpack.c.b16 %v1067, %v1061
        %v1218 = vpack.c.b16 %v1068, %v1062
        %v1219 = vpack.c.b16 %v1069, %v1063
        %v1220 = vpack.c.b16 %v1070, %v1064
        %v1221 = vpack.c.b16 %v1077, %v1071
        %v1222 = vpack.c.b16 %v1078, %v1072
        %v1223 = vpack.c.b16 %v1079, %v1073
        %v1224 = vpack.c.b16 %v1080, %v1074
        %v1225 = vpack.c.b16 %v1081, %v1075
        %v1226 = vpack.c.b16 %v1082, %v1076
        %v1227 = vpack.c.b16 %v1089, %v1083
        %v1228 = vpack.c.b16 %v1090, %v1084
        %v1229 = vpack.c.b16 %v1091, %v1085
        %v1230 = vpack.c.b16 %v1092, %v1086
        %v1231 = vpack.c.b16 %v1093, %v1087
        %v1232 = vpack.c.b16 %v1094, %v1088
        %v1233 = vpack.c.b16 %v1101, %v1095
        %v1234 = vpack.c.b16 %v1102, %v1096
        %v1235 = vpack.c.b16 %v1103, %v1097
        %v1236 = vpack.c.b16 %v1104, %v1098
        %v1237 = vpack.c.b16 %v1105, %v1099
        %v1238 = vpack.c.b16 %v1106, %v1100
        %v1239 = vpack.c.b16 %v1113, %v1107
        %v1240 = vpack.c.b16 %v1114, %v1108
        %v1241 = vpack.c.b16 %v1115, %v1109
        %v1242 = vpack.c.b16 %v1116, %v1110
        %v1243 = vpack.c.b16 %v1117, %v1111
        %v1244 = vpack.c.b16 %v1118, %v1112
        %v1245 = vpack.c.b16 %v1125, %v1119
        %v1246 = vpack.c.b16 %v1126, %v1120
        %v1247 = vpack.c.b16 %v1127, %v1121
        %v1248 = vpack.c.b16 %v1128, %v1122
        %v1249 = vpack.c.b16 %v1129, %v1123
        %v1250 = vpack.c.b16 %v1130, %v1124
        %v1251 = vpack.c.b16 %v1137, %v1131
        %v1252 = vpack.c.b16 %v1138, %v1132
        %v1253 = vpack.c.b16 %v1139, %v1133
        %v1254 = vpack.c.b16 %v1140, %v1134
        %v1255 = vpack.c.b16 %v1141, %v1135
        %v1256 = vpack.c.b16 %v1142, %v1136
        %v1257 = vpack.c.b16 %v1149, %v1143
        %v1258 = vpack.c.b16 %v1150, %v1144
        %v1259 = vpack.c.b16 %v1151, %v1145
        %v1260 = vpack.c.b16 %v1152, %v1146
        %v1261 = vpack.c.b16 %v1153, %v1147
        %v1262 = vpack.c.b16 %v1154, %v1148
        %v1263 = vpack.c.b16 %v1161, %v1155
        %v1264 = vpack.c.b16 %v1162, %v1156
        %v1265 = vpack.c.b16 %v1163, %v1157
        %v1266 = vpack.c.b16 %v1164, %v1158
        %v1267 = vpack.c.b16 %v1165, %v1159
        %v1268 = vpack.c.b16 %v1166, %v1160
        %v1269 = vpack.c.b16 %v1173, %v1167
        %v1270 = vpack.c.b16 %v1174, %v1168
        %v1271 = vpack.c.b16 %v1175, %v1169
        %v1272 = vpack.c.b16 %v1176, %v1170
        %v1273 = vpack.c.b16 %v1177, %v1171
        %v1274 = vpack.c.b16 %v1178, %v1172
        %1371 = vmatprep.subr.bf16.mxu0 %v1180
        %1372 = vmatpush1.bf16.msra.mxu0 %v1179
        %1373 = vmatprep.subr.bf16.mxu0 %v1186
        %1374 = vmatpush1.bf16.msra.mxu0 %v1185
        %1375 = vmatprep.subr.bf16.mxu0 %v1192
        %1376 = vmatpush1.bf16.msra.mxu0 %v1191
        %1377 = vmatprep.subr.bf16.mxu0 %v1198
        %1378 = vmatpush1.bf16.msra.mxu0 %v1197
        %1379 = vmatprep.subr.bf16.mxu0 %v1204
        %1380 = vmatpush1.bf16.msra.mxu0 %v1203
        %1381 = vmatprep.subr.bf16.mxu0 %v1210
        %1382 = vmatpush1.bf16.msra.mxu0 %v1209
        %1383 = vmatprep.subr.bf16.mxu0 %v1216
        %1384 = vmatpush1.bf16.msra.mxu0 %v1215
        %1385 = vmatprep.subr.bf16.mxu0 %v1222
        %1386 = vmatpush1.bf16.msra.mxu0 %v1221
        %1387 = vmatprep.subr.bf16.mxu0 %v1228
        %1388 = vmatpush1.bf16.msra.mxu0 %v1227
        %1389 = vmatprep.subr.bf16.mxu0 %v1234
        %1390 = vmatpush1.bf16.msra.mxu0 %v1233
        %1391 = vmatprep.subr.bf16.mxu0 %v1240
        %1392 = vmatpush1.bf16.msra.mxu0 %v1239
        %1393 = vmatprep.subr.bf16.mxu0 %v1246
        %1394 = vmatpush1.bf16.msra.mxu0 %v1245
        %1395 = vmatprep.subr.bf16.mxu0 %v1252
        %1396 = vmatpush1.bf16.msra.mxu0 %v1251
        %1397 = vmatprep.subr.bf16.mxu0 %v1258
        %1398 = vmatpush1.bf16.msra.mxu0 %v1257
        %1399 = vmatprep.subr.bf16.mxu0 %v1264
        %1400 = vmatpush1.bf16.msra.mxu0 %v1263
        %1401 = vmatprep.subr.bf16.mxu0 %v1270
        %1402 = vmatpush1.bf16.msra.mxu0 %v1269
        %1403 = vmatprep.mubr.bf16.mxu0 %v762
        %1404 = vmatmul.mubr.bf16.gmra.mrb[0].mxu0 %v761
        %v1405 = vpop.f32.mrb[0].mxu0
        %v1406 = vadd.f32 %v864, %v1405
        %v1407 = vpop.f32.mrb[0].mxu0
        %v1408 = vadd.f32 %v868, %v1407
        %v1409 = vpop.f32.mrb[0].mxu0
        %v1410 = vadd.f32 %v864, %v1409
        %v1411 = vpop.f32.mrb[0].mxu0
        %v1412 = vadd.f32 %v868, %v1411
        %1413 = vdwg.mxu0
        %1414 = vmatprep.subr.bf16.mxu0 %v1182
        %1415 = vmatpush1.bf16.msra.mxu0 %v1181
        %1416 = vmatprep.subr.bf16.mxu0 %v1188
        %1417 = vmatpush1.bf16.msra.mxu0 %v1187
        %1418 = vmatprep.subr.bf16.mxu0 %v1194
        %1419 = vmatpush1.bf16.msra.mxu0 %v1193
        %1420 = vmatprep.subr.bf16.mxu0 %v1200
        %1421 = vmatpush1.bf16.msra.mxu0 %v1199
        %1422 = vmatprep.subr.bf16.mxu0 %v1206
        %1423 = vmatpush1.bf16.msra.mxu0 %v1205
        %1424 = vmatprep.subr.bf16.mxu0 %v1212
        %1425 = vmatpush1.bf16.msra.mxu0 %v1211
        %1426 = vmatprep.subr.bf16.mxu0 %v1218
        %1427 = vmatpush1.bf16.msra.mxu0 %v1217
        %1428 = vmatprep.subr.bf16.mxu0 %v1224
        %1429 = vmatpush1.bf16.msra.mxu0 %v1223
        %1430 = vmatprep.subr.bf16.mxu0 %v1230
        %1431 = vmatpush1.bf16.msra.mxu0 %v1229
        %1432 = vmatprep.subr.bf16.mxu0 %v1236
        %1433 = vmatpush1.bf16.msra.mxu0 %v1235
        %1434 = vmatprep.subr.bf16.mxu0 %v1242
        %1435 = vmatpush1.bf16.msra.mxu0 %v1241
        %1436 = vmatprep.subr.bf16.mxu0 %v1248
        %1437 = vmatpush1.bf16.msra.mxu0 %v1247
        %1438 = vmatprep.subr.bf16.mxu0 %v1254
        %1439 = vmatpush1.bf16.msra.mxu0 %v1253
        %1440 = vmatprep.subr.bf16.mxu0 %v1260
        %1441 = vmatpush1.bf16.msra.mxu0 %v1259
        %1442 = vmatprep.subr.bf16.mxu0 %v1266
        %1443 = vmatpush1.bf16.msra.mxu0 %v1265
        %1444 = vmatprep.subr.bf16.mxu0 %v1272
        %1445 = vmatpush1.bf16.msra.mxu0 %v1271
        %1446 = vmatprep.mubr.bf16.mxu0 %v762
        %1447 = vmatmul.mubr.bf16.gmra.mrb[0].mxu0 %v761
        %v1448 = vpop.f32.mrb[0].mxu0
        %v1449 = vadd.f32 %v872, %v1448
        %v1450 = vpop.f32.mrb[0].mxu0
        %v1451 = vadd.f32 %v876, %v1450
        %v1452 = vpop.f32.mrb[0].mxu0
        %v1453 = vadd.f32 %v872, %v1452
        %v1454 = vpop.f32.mrb[0].mxu0
        %v1455 = vadd.f32 %v876, %v1454
        %1456 = vdwg.mxu0
        %1457 = vmatprep.subr.bf16.mxu0 %v1184
        %1458 = vmatpush1.bf16.msra.mxu0 %v1183
        %1459 = vmatprep.subr.bf16.mxu0 %v1190
        %1460 = vmatpush1.bf16.msra.mxu0 %v1189
        %1461 = vmatprep.subr.bf16.mxu0 %v1196
        %1462 = vmatpush1.bf16.msra.mxu0 %v1195
        %1463 = vmatprep.subr.bf16.mxu0 %v1202
        %1464 = vmatpush1.bf16.msra.mxu0 %v1201
        %1465 = vmatprep.subr.bf16.mxu0 %v1208
        %1466 = vmatpush1.bf16.msra.mxu0 %v1207
        %1467 = vmatprep.subr.bf16.mxu0 %v1214
        %1468 = vmatpush1.bf16.msra.mxu0 %v1213
        %1469 = vmatprep.subr.bf16.mxu0 %v1220
        %1470 = vmatpush1.bf16.msra.mxu0 %v1219
        %1471 = vmatprep.subr.bf16.mxu0 %v1226
        %1472 = vmatpush1.bf16.msra.mxu0 %v1225
        %1473 = vmatprep.subr.bf16.mxu0 %v1232
        %1474 = vmatpush1.bf16.msra.mxu0 %v1231
        %1475 = vmatprep.subr.bf16.mxu0 %v1238
        %1476 = vmatpush1.bf16.msra.mxu0 %v1237
        %1477 = vmatprep.subr.bf16.mxu0 %v1244
        %1478 = vmatpush1.bf16.msra.mxu0 %v1243
        %1479 = vmatprep.subr.bf16.mxu0 %v1250
        %1480 = vmatpush1.bf16.msra.mxu0 %v1249
        %1481 = vmatprep.subr.bf16.mxu0 %v1256
        %1482 = vmatpush1.bf16.msra.mxu0 %v1255
        %1483 = vmatprep.subr.bf16.mxu0 %v1262
        %1484 = vmatpush1.bf16.msra.mxu0 %v1261
        %1485 = vmatprep.subr.bf16.mxu0 %v1268
        %1486 = vmatpush1.bf16.msra.mxu0 %v1267
        %1487 = vmatprep.subr.bf16.mxu0 %v1274
        %1488 = vmatpush1.bf16.msra.mxu0 %v1273
        %1489 = vmatprep.mubr.bf16.mxu0 %v762
        %1490 = vmatmul.mubr.bf16.gmra.mrb[0].mxu0 %v761
        %v1491 = vpop.f32.mrb[0].mxu0
        %v1492 = vadd.f32 %v880, %v1491
        %v1493 = vpop.f32.mrb[0].mxu0
        %v1494 = vadd.f32 %v884, %v1493
        %v1495 = vpop.f32.mrb[0].mxu0
        %v1496 = vadd.f32 %v880, %v1495
        %v1497 = vpop.f32.mrb[0].mxu0
        %v1498 = vadd.f32 %v884, %v1497
        %1499 = vdwg.mxu0
        %v1500 = vmul.f32 %v1406, 0.088388346
        %v1501 = vmul.f32 %v1408, 0.088388346
        %v1502 = vmul.f32 %v1410, 0.088388346
        %v1503 = vmul.f32 %v1412, 0.088388346
        %v1504 = vlaneseq
        %v1505 = vand.u32 %v1504, 127
        %vm1506 = vcmp.ge.s32.totalorder %v1505, 5
        %v1507 = vsel %vm1506, -1e+30, 0.0
        %v1508 = vpack.c.bf16 %v1500, %v1500
        %v1509 = vpack.c.bf16 %v1449, %v1449
        %v1510 = vpack.c.bf16 %v1492, %v1492
        %1511 = vmatprep.subr.bf16.mxu0 0
        %1512 = vmatpush1.bf16.xpose.msra.mxu0 %v1509
        %1513 = vmatprep.subr.bf16.mxu0 0
        %1514 = vmatpush1.bf16.xpose.msra.mxu0 0
        %1515 = vmatprep.subr.bf16.mxu0 0
        %1516 = vmatpush1.bf16.xpose.msra.mxu0 0
        %1517 = vmatprep.subr.bf16.mxu0 0
        %1518 = vmatpush1.bf16.xpose.msra.mxu0 0
        %1519 = vmatprep.subr.bf16.mxu0 0
        %1520 = vmatpush1.bf16.xpose.msra.mxu0 0
        %1521 = vmatprep.subr.bf16.mxu0 0
        %1522 = vmatpush1.bf16.xpose.msra.mxu0 0
        %1523 = vmatprep.subr.bf16.mxu0 0
        %1524 = vmatpush1.bf16.xpose.msra.mxu0 0
        %1525 = vmatprep.subr.bf16.mxu0 0
        %1526 = vmatpush1.bf16.xpose.msra.mxu0 0
        %1527 = vmatprep.subr.bf16.mxu0 0
        %1528 = vmatpush1.bf16.xpose.msra.mxu0 0
        %1529 = vmatprep.subr.bf16.mxu0 0
        %1530 = vmatpush1.bf16.xpose.msra.mxu0 0
        %1531 = vmatprep.subr.bf16.mxu0 0
        %1532 = vmatpush1.bf16.xpose.msra.mxu0 0
        %1533 = vmatprep.subr.bf16.mxu0 0
        %1534 = vmatpush1.bf16.xpose.msra.mxu0 0
        %1535 = vmatprep.subr.bf16.mxu0 0
        %1536 = vmatpush1.bf16.xpose.msra.mxu0 0
        %1537 = vmatprep.subr.bf16.mxu0 0
        %1538 = vmatpush1.bf16.xpose.msra.mxu0 0
        %1539 = vmatprep.subr.bf16.mxu0 0
        %1540 = vmatpush1.bf16.xpose.msra.mxu0 0
        %1541 = vmatprep.subr.bf16.mxu0 0
        %1542 = vmatpush1.bf16.xpose.msra.mxu0 0
        %1543 = vmatprep.mubr.bf16.mxu0 0
        %1544 = vmatmul.mubr.bf16.gmra.mrb[0].mxu0 %v1508
        %v1545 = vpop.f32.mrb[0].mxu0
        %v1546 = vadd.f32 %v1507, %v1545
        %v1547 = vpop.f32.mrb[0].mxu0
        %v1548 = vpop.f32.mrb[0].mxu0
        %v1549 = vpop.f32.mrb[0].mxu0
        %1550 = vdwg.mxu0
        %vm1551 = vcmask 64512
        %v1552 = vsel %vm1551, %v1546, -inf
        %1553 = vmax.xlane.f32.xlu0 %v1552
        %v1554 = vpop.xlane.xlu0 %1553
        %v1555 = vsub.f32 %v1546, %v1554
        %v1556 = vmul.f32 %v1555, 1.442695
        %v1557 = vpow.pop %v1556
        %v1558 = vsel %vm1551, %v1557, 0.0
        %1559 = vadd.xlane.f32.xlu0 %v1558
        %v1560 = vpop.xlane.xlu0 %1559
        %v1561 = vrcp.pop %v1560
        %v1562 = vmul.f32 %v1557, %v1561
        %v1563 = vpack.c.bf16 %v1562, %v1562
        %v1565 = vsel %vm1551, %v1563, 0
        %vm1567 = vcmask 1043456
        %v1569 = vsel %vm1567, %v1510, 0
        %1571 = vmatprep.subr.bf16.mxu0 0
        %1572 = vmatpush1.bf16.msra.mxu0 %v1569
        %1573 = vmatprep.subr.bf16.mxu0 0
        %1574 = vmatpush1.bf16.msra.mxu0 0
        %1575 = vmatprep.subr.bf16.mxu0 0
        %1576 = vmatpush1.bf16.msra.mxu0 0
        %1577 = vmatprep.subr.bf16.mxu0 0
        %1578 = vmatpush1.bf16.msra.mxu0 0
        %1579 = vmatprep.subr.bf16.mxu0 0
        %1580 = vmatpush1.bf16.msra.mxu0 0
        %1581 = vmatprep.subr.bf16.mxu0 0
        %1582 = vmatpush1.bf16.msra.mxu0 0
        %1583 = vmatprep.subr.bf16.mxu0 0
        %1584 = vmatpush1.bf16.msra.mxu0 0
        %1585 = vmatprep.subr.bf16.mxu0 0
        %1586 = vmatpush1.bf16.msra.mxu0 0
        %1587 = vmatprep.subr.bf16.mxu0 0
        %1588 = vmatpush1.bf16.msra.mxu0 0
        %1589 = vmatprep.subr.bf16.mxu0 0
        %1590 = vmatpush1.bf16.msra.mxu0 0
        %1591 = vmatprep.subr.bf16.mxu0 0
        %1592 = vmatpush1.bf16.msra.mxu0 0
        %1593 = vmatprep.subr.bf16.mxu0 0
        %1594 = vmatpush1.bf16.msra.mxu0 0
        %1595 = vmatprep.subr.bf16.mxu0 0
        %1596 = vmatpush1.bf16.msra.mxu0 0
        %1597 = vmatprep.subr.bf16.mxu0 0
        %1598 = vmatpush1.bf16.msra.mxu0 0
        %1599 = vmatprep.subr.bf16.mxu0 0
        %1600 = vmatpush1.bf16.msra.mxu0 0
        %1601 = vmatprep.subr.bf16.mxu0 0
        %1602 = vmatpush1.bf16.msra.mxu0 0
        %1603 = vmatprep.mubr.bf16.mxu0 0
        %1604 = vmatmul.mubr.bf16.gmra.mrb[0].mxu0 %v1565
        %v1605 = vpop.f32.mrb[0].mxu0
        %v1606 = vadd.f32 0.0, %v1605
        %v1607 = vpop.f32.mrb[0].mxu0
        %v1608 = vpop.f32.mrb[0].mxu0
        %v1609 = vpop.f32.mrb[0].mxu0
        %1610 = vdwg.mxu0
        %v1611 = vpack.c.bf16 %v1501, %v1501
        %v1612 = vpack.c.bf16 %v1451, %v1451
        %v1613 = vpack.c.bf16 %v1494, %v1494
        %1614 = vmatprep.subr.bf16.mxu0 0
        %1615 = vmatpush1.bf16.xpose.msra.mxu0 %v1612
        %1616 = vmatprep.subr.bf16.mxu0 0
        %1617 = vmatpush1.bf16.xpose.msra.mxu0 0
        %1618 = vmatprep.subr.bf16.mxu0 0
        %1619 = vmatpush1.bf16.xpose.msra.mxu0 0
        %1620 = vmatprep.subr.bf16.mxu0 0
        %1621 = vmatpush1.bf16.xpose.msra.mxu0 0
        %1622 = vmatprep.subr.bf16.mxu0 0
        %1623 = vmatpush1.bf16.xpose.msra.mxu0 0
        %1624 = vmatprep.subr.bf16.mxu0 0
        %1625 = vmatpush1.bf16.xpose.msra.mxu0 0
        %1626 = vmatprep.subr.bf16.mxu0 0
        %1627 = vmatpush1.bf16.xpose.msra.mxu0 0
        %1628 = vmatprep.subr.bf16.mxu0 0
        %1629 = vmatpush1.bf16.xpose.msra.mxu0 0
        %1630 = vmatprep.subr.bf16.mxu0 0
        %1631 = vmatpush1.bf16.xpose.msra.mxu0 0
        %1632 = vmatprep.subr.bf16.mxu0 0
        %1633 = vmatpush1.bf16.xpose.msra.mxu0 0
        %1634 = vmatprep.subr.bf16.mxu0 0
        %1635 = vmatpush1.bf16.xpose.msra.mxu0 0
        %1636 = vmatprep.subr.bf16.mxu0 0
        %1637 = vmatpush1.bf16.xpose.msra.mxu0 0
        %1638 = vmatprep.subr.bf16.mxu0 0
        %1639 = vmatpush1.bf16.xpose.msra.mxu0 0
        %1640 = vmatprep.subr.bf16.mxu0 0
        %1641 = vmatpush1.bf16.xpose.msra.mxu0 0
        %1642 = vmatprep.subr.bf16.mxu0 0
        %1643 = vmatpush1.bf16.xpose.msra.mxu0 0
        %1644 = vmatprep.subr.bf16.mxu0 0
        %1645 = vmatpush1.bf16.xpose.msra.mxu0 0
        %1646 = vmatprep.mubr.bf16.mxu0 0
        %1647 = vmatmul.mubr.bf16.gmra.mrb[0].mxu0 %v1611
        %v1648 = vpop.f32.mrb[0].mxu0
        %v1649 = vadd.f32 %v1507, %v1648
        %v1650 = vpop.f32.mrb[0].mxu0
        %v1651 = vpop.f32.mrb[0].mxu0
        %v1652 = vpop.f32.mrb[0].mxu0
        %1653 = vdwg.mxu0
        %v1654 = vsel %vm1551, %v1649, -inf
        %1655 = vmax.xlane.f32.xlu0 %v1654
        %v1656 = vpop.xlane.xlu0 %1655
        %v1657 = vsub.f32 %v1649, %v1656
        %v1658 = vmul.f32 %v1657, 1.442695
        %v1659 = vpow.pop %v1658
        %v1660 = vsel %vm1551, %v1659, 0.0
        %1661 = vadd.xlane.f32.xlu0 %v1660
        %v1662 = vpop.xlane.xlu0 %1661
        %v1663 = vrcp.pop %v1662
        %v1664 = vmul.f32 %v1659, %v1663
        %v1665 = vpack.c.bf16 %v1664, %v1664
        %v1667 = vsel %vm1551, %v1665, 0
        %v1670 = vsel %vm1567, %v1613, 0
        %1672 = vmatprep.subr.bf16.mxu0 0
        %1673 = vmatpush1.bf16.msra.mxu0 %v1670
        %1674 = vmatprep.subr.bf16.mxu0 0
        %1675 = vmatpush1.bf16.msra.mxu0 0
        %1676 = vmatprep.subr.bf16.mxu0 0
        %1677 = vmatpush1.bf16.msra.mxu0 0
        %1678 = vmatprep.subr.bf16.mxu0 0
        %1679 = vmatpush1.bf16.msra.mxu0 0
        %1680 = vmatprep.subr.bf16.mxu0 0
        %1681 = vmatpush1.bf16.msra.mxu0 0
        %1682 = vmatprep.subr.bf16.mxu0 0
        %1683 = vmatpush1.bf16.msra.mxu0 0
        %1684 = vmatprep.subr.bf16.mxu0 0
        %1685 = vmatpush1.bf16.msra.mxu0 0
        %1686 = vmatprep.subr.bf16.mxu0 0
        %1687 = vmatpush1.bf16.msra.mxu0 0
        %1688 = vmatprep.subr.bf16.mxu0 0
        %1689 = vmatpush1.bf16.msra.mxu0 0
        %1690 = vmatprep.subr.bf16.mxu0 0
        %1691 = vmatpush1.bf16.msra.mxu0 0
        %1692 = vmatprep.subr.bf16.mxu0 0
        %1693 = vmatpush1.bf16.msra.mxu0 0
        %1694 = vmatprep.subr.bf16.mxu0 0
        %1695 = vmatpush1.bf16.msra.mxu0 0
        %1696 = vmatprep.subr.bf16.mxu0 0
        %1697 = vmatpush1.bf16.msra.mxu0 0
        %1698 = vmatprep.subr.bf16.mxu0 0
        %1699 = vmatpush1.bf16.msra.mxu0 0
        %1700 = vmatprep.subr.bf16.mxu0 0
        %1701 = vmatpush1.bf16.msra.mxu0 0
        %1702 = vmatprep.subr.bf16.mxu0 0
        %1703 = vmatpush1.bf16.msra.mxu0 0
        %1704 = vmatprep.mubr.bf16.mxu0 0
        %1705 = vmatmul.mubr.bf16.gmra.mrb[0].mxu0 %v1667
        %v1706 = vpop.f32.mrb[0].mxu0
        %v1707 = vadd.f32 0.0, %v1706
        %v1708 = vpop.f32.mrb[0].mxu0
        %v1709 = vpop.f32.mrb[0].mxu0
        %v1710 = vpop.f32.mrb[0].mxu0
        %1711 = vdwg.mxu0
        %v1712 = vpack.c.bf16 %v1502, %v1502
        %v1713 = vpack.c.bf16 %v1453, %v1453
        %v1714 = vpack.c.bf16 %v1496, %v1496
        %1715 = vmatprep.subr.bf16.mxu0 0
        %1716 = vmatpush1.bf16.xpose.msra.mxu0 %v1713
        %1717 = vmatprep.subr.bf16.mxu0 0
        %1718 = vmatpush1.bf16.xpose.msra.mxu0 0
        %1719 = vmatprep.subr.bf16.mxu0 0
        %1720 = vmatpush1.bf16.xpose.msra.mxu0 0
        %1721 = vmatprep.subr.bf16.mxu0 0
        %1722 = vmatpush1.bf16.xpose.msra.mxu0 0
        %1723 = vmatprep.subr.bf16.mxu0 0
        %1724 = vmatpush1.bf16.xpose.msra.mxu0 0
        %1725 = vmatprep.subr.bf16.mxu0 0
        %1726 = vmatpush1.bf16.xpose.msra.mxu0 0
        %1727 = vmatprep.subr.bf16.mxu0 0
        %1728 = vmatpush1.bf16.xpose.msra.mxu0 0
        %1729 = vmatprep.subr.bf16.mxu0 0
        %1730 = vmatpush1.bf16.xpose.msra.mxu0 0
        %1731 = vmatprep.subr.bf16.mxu0 0
        %1732 = vmatpush1.bf16.xpose.msra.mxu0 0
        %1733 = vmatprep.subr.bf16.mxu0 0
        %1734 = vmatpush1.bf16.xpose.msra.mxu0 0
        %1735 = vmatprep.subr.bf16.mxu0 0
        %1736 = vmatpush1.bf16.xpose.msra.mxu0 0
        %1737 = vmatprep.subr.bf16.mxu0 0
        %1738 = vmatpush1.bf16.xpose.msra.mxu0 0
        %1739 = vmatprep.subr.bf16.mxu0 0
        %1740 = vmatpush1.bf16.xpose.msra.mxu0 0
        %1741 = vmatprep.subr.bf16.mxu0 0
        %1742 = vmatpush1.bf16.xpose.msra.mxu0 0
        %1743 = vmatprep.subr.bf16.mxu0 0
        %1744 = vmatpush1.bf16.xpose.msra.mxu0 0
        %1745 = vmatprep.subr.bf16.mxu0 0
        %1746 = vmatpush1.bf16.xpose.msra.mxu0 0
        %1747 = vmatprep.mubr.bf16.mxu0 0
        %1748 = vmatmul.mubr.bf16.gmra.mrb[0].mxu0 %v1712
        %v1749 = vpop.f32.mrb[0].mxu0
        %v1750 = vadd.f32 %v1507, %v1749
        %v1751 = vpop.f32.mrb[0].mxu0
        %v1752 = vpop.f32.mrb[0].mxu0
        %v1753 = vpop.f32.mrb[0].mxu0
        %1754 = vdwg.mxu0
        %v1755 = vsel %vm1551, %v1750, -inf
        %1756 = vmax.xlane.f32.xlu0 %v1755
        %v1757 = vpop.xlane.xlu0 %1756
        %v1758 = vsub.f32 %v1750, %v1757
        %v1759 = vmul.f32 %v1758, 1.442695
        %v1760 = vpow.pop %v1759
        %v1761 = vsel %vm1551, %v1760, 0.0
        %1762 = vadd.xlane.f32.xlu0 %v1761
        %v1763 = vpop.xlane.xlu0 %1762
        %v1764 = vrcp.pop %v1763
        %v1765 = vmul.f32 %v1760, %v1764
        %v1766 = vpack.c.bf16 %v1765, %v1765
        %v1768 = vsel %vm1551, %v1766, 0
        %v1771 = vsel %vm1567, %v1714, 0
        %1773 = vmatprep.subr.bf16.mxu0 0
        %1774 = vmatpush1.bf16.msra.mxu0 %v1771
        %1775 = vmatprep.subr.bf16.mxu0 0
        %1776 = vmatpush1.bf16.msra.mxu0 0
        %1777 = vmatprep.subr.bf16.mxu0 0
        %1778 = vmatpush1.bf16.msra.mxu0 0
        %1779 = vmatprep.subr.bf16.mxu0 0
        %1780 = vmatpush1.bf16.msra.mxu0 0
        %1781 = vmatprep.subr.bf16.mxu0 0
        %1782 = vmatpush1.bf16.msra.mxu0 0
        %1783 = vmatprep.subr.bf16.mxu0 0
        %1784 = vmatpush1.bf16.msra.mxu0 0
        %1785 = vmatprep.subr.bf16.mxu0 0
        %1786 = vmatpush1.bf16.msra.mxu0 0
        %1787 = vmatprep.subr.bf16.mxu0 0
        %1788 = vmatpush1.bf16.msra.mxu0 0
        %1789 = vmatprep.subr.bf16.mxu0 0
        %1790 = vmatpush1.bf16.msra.mxu0 0
        %1791 = vmatprep.subr.bf16.mxu0 0
        %1792 = vmatpush1.bf16.msra.mxu0 0
        %1793 = vmatprep.subr.bf16.mxu0 0
        %1794 = vmatpush1.bf16.msra.mxu0 0
        %1795 = vmatprep.subr.bf16.mxu0 0
        %1796 = vmatpush1.bf16.msra.mxu0 0
        %1797 = vmatprep.subr.bf16.mxu0 0
        %1798 = vmatpush1.bf16.msra.mxu0 0
        %1799 = vmatprep.subr.bf16.mxu0 0
        %1800 = vmatpush1.bf16.msra.mxu0 0
        %1801 = vmatprep.subr.bf16.mxu0 0
        %1802 = vmatpush1.bf16.msra.mxu0 0
        %1803 = vmatprep.subr.bf16.mxu0 0
        %1804 = vmatpush1.bf16.msra.mxu0 0
        %1805 = vmatprep.mubr.bf16.mxu0 0
        %1806 = vmatmul.mubr.bf16.gmra.mrb[0].mxu0 %v1768
        %v1807 = vpop.f32.mrb[0].mxu0
        %v1808 = vadd.f32 0.0, %v1807
        %v1809 = vpop.f32.mrb[0].mxu0
        %v1810 = vpop.f32.mrb[0].mxu0
        %v1811 = vpop.f32.mrb[0].mxu0
        %1812 = vdwg.mxu0
        %v1813 = vpack.c.bf16 %v1503, %v1503
        %v1814 = vpack.c.bf16 %v1455, %v1455
        %v1815 = vpack.c.bf16 %v1498, %v1498
        %1816 = vmatprep.subr.bf16.mxu0 0
        %1817 = vmatpush1.bf16.xpose.msra.mxu0 %v1814
        %1818 = vmatprep.subr.bf16.mxu0 0
        %1819 = vmatpush1.bf16.xpose.msra.mxu0 0
        %1820 = vmatprep.subr.bf16.mxu0 0
        %1821 = vmatpush1.bf16.xpose.msra.mxu0 0
        %1822 = vmatprep.subr.bf16.mxu0 0
        %1823 = vmatpush1.bf16.xpose.msra.mxu0 0
        %1824 = vmatprep.subr.bf16.mxu0 0
        %1825 = vmatpush1.bf16.xpose.msra.mxu0 0
        %1826 = vmatprep.subr.bf16.mxu0 0
        %1827 = vmatpush1.bf16.xpose.msra.mxu0 0
        %1828 = vmatprep.subr.bf16.mxu0 0
        %1829 = vmatpush1.bf16.xpose.msra.mxu0 0
        %1830 = vmatprep.subr.bf16.mxu0 0
        %1831 = vmatpush1.bf16.xpose.msra.mxu0 0
        %1832 = vmatprep.subr.bf16.mxu0 0
        %1833 = vmatpush1.bf16.xpose.msra.mxu0 0
        %1834 = vmatprep.subr.bf16.mxu0 0
        %1835 = vmatpush1.bf16.xpose.msra.mxu0 0
        %1836 = vmatprep.subr.bf16.mxu0 0
        %1837 = vmatpush1.bf16.xpose.msra.mxu0 0
        %1838 = vmatprep.subr.bf16.mxu0 0
        %1839 = vmatpush1.bf16.xpose.msra.mxu0 0
        %1840 = vmatprep.subr.bf16.mxu0 0
        %1841 = vmatpush1.bf16.xpose.msra.mxu0 0
        %1842 = vmatprep.subr.bf16.mxu0 0
        %1843 = vmatpush1.bf16.xpose.msra.mxu0 0
        %1844 = vmatprep.subr.bf16.mxu0 0
        %1845 = vmatpush1.bf16.xpose.msra.mxu0 0
        %1846 = vmatprep.subr.bf16.mxu0 0
        %1847 = vmatpush1.bf16.xpose.msra.mxu0 0
        %1848 = vmatprep.mubr.bf16.mxu0 0
        %1849 = vmatmul.mubr.bf16.gmra.mrb[0].mxu0 %v1813
        %v1850 = vpop.f32.mrb[0].mxu0
        %v1851 = vadd.f32 %v1507, %v1850
        %v1852 = vpop.f32.mrb[0].mxu0
        %v1853 = vpop.f32.mrb[0].mxu0
        %v1854 = vpop.f32.mrb[0].mxu0
        %1855 = vdwg.mxu0
        %v1856 = vsel %vm1551, %v1851, -inf
        %1857 = vmax.xlane.f32.xlu0 %v1856
        %v1858 = vpop.xlane.xlu0 %1857
        %v1859 = vsub.f32 %v1851, %v1858
        %v1860 = vmul.f32 %v1859, 1.442695
        %v1861 = vpow.pop %v1860
        %v1862 = vsel %vm1551, %v1861, 0.0
        %1863 = vadd.xlane.f32.xlu0 %v1862
        %v1864 = vpop.xlane.xlu0 %1863
        %v1865 = vrcp.pop %v1864
        %v1866 = vmul.f32 %v1861, %v1865
        %v1867 = vpack.c.bf16 %v1866, %v1866
        %v1869 = vsel %vm1551, %v1867, 0
        %v1872 = vsel %vm1567, %v1815, 0
        %1874 = vmatprep.subr.bf16.mxu0 0
        %1875 = vmatpush1.bf16.msra.mxu0 %v1872
        %1876 = vmatprep.subr.bf16.mxu0 0
        %1877 = vmatpush1.bf16.msra.mxu0 0
        %1878 = vmatprep.subr.bf16.mxu0 0
        %1879 = vmatpush1.bf16.msra.mxu0 0
        %1880 = vmatprep.subr.bf16.mxu0 0
        %1881 = vmatpush1.bf16.msra.mxu0 0
        %1882 = vmatprep.subr.bf16.mxu0 0
        %1883 = vmatpush1.bf16.msra.mxu0 0
        %1884 = vmatprep.subr.bf16.mxu0 0
        %1885 = vmatpush1.bf16.msra.mxu0 0
        %1886 = vmatprep.subr.bf16.mxu0 0
        %1887 = vmatpush1.bf16.msra.mxu0 0
        %1888 = vmatprep.subr.bf16.mxu0 0
        %1889 = vmatpush1.bf16.msra.mxu0 0
        %1890 = vmatprep.subr.bf16.mxu0 0
        %1891 = vmatpush1.bf16.msra.mxu0 0
        %1892 = vmatprep.subr.bf16.mxu0 0
        %1893 = vmatpush1.bf16.msra.mxu0 0
        %1894 = vmatprep.subr.bf16.mxu0 0
        %1895 = vmatpush1.bf16.msra.mxu0 0
        %1896 = vmatprep.subr.bf16.mxu0 0
        %1897 = vmatpush1.bf16.msra.mxu0 0
        %1898 = vmatprep.subr.bf16.mxu0 0
        %1899 = vmatpush1.bf16.msra.mxu0 0
        %1900 = vmatprep.subr.bf16.mxu0 0
        %1901 = vmatpush1.bf16.msra.mxu0 0
        %1902 = vmatprep.subr.bf16.mxu0 0
        %1903 = vmatpush1.bf16.msra.mxu0 0
        %1904 = vmatprep.subr.bf16.mxu0 0
        %1905 = vmatpush1.bf16.msra.mxu0 0
        %1906 = vmatprep.mubr.bf16.mxu0 0
        %1907 = vmatmul.mubr.bf16.gmra.mrb[0].mxu0 %v1869
        %v1908 = vpop.f32.mrb[0].mxu0
        %v1909 = vadd.f32 0.0, %v1908
        %v1910 = vpop.f32.mrb[0].mxu0
        %v1911 = vpop.f32.mrb[0].mxu0
        %v1912 = vpop.f32.mrb[0].mxu0
        %1913 = vdwg.mxu0
        %v1914 = vpack.c.bf16 %v1808, %v1606
        %v1915 = vpack.c.bf16 %v1909, %v1707
        %v1916 = vld [vmem:[%s658] sm:$0xff]
        %v1917 = vld [vmem:[%s658 + $0x8] sm:$0xff]
        %v1918 = vld [vmem:[%s658 + $0x10] sm:$0xff]
        %v1919 = vld [vmem:[%s658 + $0x18] sm:$0xff]
        %v1920 = vld [vmem:[%s658 + $0x20] sm:$0xff]
        %v1921 = vld [vmem:[%s658 + $0x28] sm:$0xff]
        %v1922 = vld [vmem:[%s658 + $0x30] sm:$0xff]
        %v1923 = vld [vmem:[%s658 + $0x38] sm:$0xff]
        %v1924 = vld [vmem:[%s658 + $0x40] sm:$0xff]
        %v1925 = vld [vmem:[%s658 + $0x48] sm:$0xff]
        %v1926 = vld [vmem:[%s658 + $0x50] sm:$0xff]
        %v1927 = vld [vmem:[%s658 + $0x58] sm:$0xff]
        %v1928 = vld [vmem:[%s658 + $0x60] sm:$0xff]
        %v1929 = vld [vmem:[%s658 + $0x68] sm:$0xff]
        %v1930 = vld [vmem:[%s658 + $0x70] sm:$0xff]
        %v1931 = vld [vmem:[%s658 + $0x78] sm:$0xff]
        %v1932 = vld [vmem:[%s658 + $0x80] sm:$0xff]
        %v1933 = vld [vmem:[%s658 + $0x88] sm:$0xff]
        %v1934 = vld [vmem:[%s658 + $0x90] sm:$0xff]
        %v1935 = vld [vmem:[%s658 + $0x98] sm:$0xff]
        %v1936 = vld [vmem:[%s658 + $0xa0] sm:$0xff]
        %v1937 = vld [vmem:[%s658 + $0xa8] sm:$0xff]
        %v1938 = vld [vmem:[%s658 + $0xb0] sm:$0xff]
        %v1939 = vld [vmem:[%s658 + $0xb8] sm:$0xff]
        %v1940 = vld [vmem:[%s658 + $0xc0] sm:$0xff]
        %v1941 = vld [vmem:[%s658 + $0xc8] sm:$0xff]
        %v1942 = vld [vmem:[%s658 + $0xd0] sm:$0xff]
        %v1943 = vld [vmem:[%s658 + $0xd8] sm:$0xff]
        %v1944 = vld [vmem:[%s658 + $0xe0] sm:$0xff]
        %v1945 = vld [vmem:[%s658 + $0xe8] sm:$0xff]
        %v1946 = vld [vmem:[%s658 + $0xf0] sm:$0xff]
        %v1947 = vld [vmem:[%s658 + $0xf8] sm:$0xff]
        %v1980 = vunpack.c.l.b16 %v1916
        %v1981 = vunpack.c.h.b16 %v1916
        %v1982 = vunpack.c.l.b16 %v1917
        %v1983 = vunpack.c.h.b16 %v1917
        %v1984 = vunpack.c.l.b16 %v1918
        %v1985 = vunpack.c.h.b16 %v1918
        %v1986 = vunpack.c.l.b16 %v1919
        %v1987 = vunpack.c.h.b16 %v1919
        %v1988 = vunpack.c.l.b16 %v1920
        %v1989 = vunpack.c.h.b16 %v1920
        %v1990 = vunpack.c.l.b16 %v1921
        %v1991 = vunpack.c.h.b16 %v1921
        %v1992 = vunpack.c.l.b16 %v1922
        %v1993 = vunpack.c.h.b16 %v1922
        %v1994 = vunpack.c.l.b16 %v1923
        %v1995 = vunpack.c.h.b16 %v1923
        %v1996 = vunpack.c.l.b16 %v1924
        %v1997 = vunpack.c.h.b16 %v1924
        %v1998 = vunpack.c.l.b16 %v1925
        %v1999 = vunpack.c.h.b16 %v1925
        %v2000 = vunpack.c.l.b16 %v1926
        %v2001 = vunpack.c.h.b16 %v1926
        %v2002 = vunpack.c.l.b16 %v1927
        %v2003 = vunpack.c.h.b16 %v1927
        %v2004 = vunpack.c.l.b16 %v1928
        %v2005 = vunpack.c.h.b16 %v1928
        %v2006 = vunpack.c.l.b16 %v1929
        %v2007 = vunpack.c.h.b16 %v1929
        %v2008 = vunpack.c.l.b16 %v1930
        %v2009 = vunpack.c.h.b16 %v1930
        %v2010 = vunpack.c.l.b16 %v1931
        %v2011 = vunpack.c.h.b16 %v1931
        %v2012 = vunpack.c.l.b16 %v1932
        %v2013 = vunpack.c.h.b16 %v1932
        %v2014 = vunpack.c.l.b16 %v1933
        %v2015 = vunpack.c.h.b16 %v1933
        %v2016 = vunpack.c.l.b16 %v1934
        %v2017 = vunpack.c.h.b16 %v1934
        %v2018 = vunpack.c.l.b16 %v1935
        %v2019 = vunpack.c.h.b16 %v1935
        %v2020 = vunpack.c.l.b16 %v1936
        %v2021 = vunpack.c.h.b16 %v1936
        %v2022 = vunpack.c.l.b16 %v1937
        %v2023 = vunpack.c.h.b16 %v1937
        %v2024 = vunpack.c.l.b16 %v1938
        %v2025 = vunpack.c.h.b16 %v1938
        %v2026 = vunpack.c.l.b16 %v1939
        %v2027 = vunpack.c.h.b16 %v1939
        %v2028 = vunpack.c.l.b16 %v1940
        %v2029 = vunpack.c.h.b16 %v1940
        %v2030 = vunpack.c.l.b16 %v1941
        %v2031 = vunpack.c.h.b16 %v1941
        %v2032 = vunpack.c.l.b16 %v1942
        %v2033 = vunpack.c.h.b16 %v1942
        %v2034 = vunpack.c.l.b16 %v1943
        %v2035 = vunpack.c.h.b16 %v1943
        %v2036 = vunpack.c.l.b16 %v1944
        %v2037 = vunpack.c.h.b16 %v1944
        %v2038 = vunpack.c.l.b16 %v1945
        %v2039 = vunpack.c.h.b16 %v1945
        %v2040 = vunpack.c.l.b16 %v1946
        %v2041 = vunpack.c.h.b16 %v1946
        %v2042 = vunpack.c.l.b16 %v1947
        %v2043 = vunpack.c.h.b16 %v1947
        %v2044 = vpack.c.b16 %v1982, %v1980
        %v2045 = vpack.c.b16 %v1983, %v1981
        %v2046 = vpack.c.b16 %v1986, %v1984
        %v2047 = vpack.c.b16 %v1987, %v1985
        %v2048 = vpack.c.b16 %v1990, %v1988
        %v2049 = vpack.c.b16 %v1991, %v1989
        %v2050 = vpack.c.b16 %v1994, %v1992
        %v2051 = vpack.c.b16 %v1995, %v1993
        %v2052 = vpack.c.b16 %v1998, %v1996
        %v2053 = vpack.c.b16 %v1999, %v1997
        %v2054 = vpack.c.b16 %v2002, %v2000
        %v2055 = vpack.c.b16 %v2003, %v2001
        %v2056 = vpack.c.b16 %v2006, %v2004
        %v2057 = vpack.c.b16 %v2007, %v2005
        %v2058 = vpack.c.b16 %v2010, %v2008
        %v2059 = vpack.c.b16 %v2011, %v2009
        %v2060 = vpack.c.b16 %v2014, %v2012
        %v2061 = vpack.c.b16 %v2015, %v2013
        %v2062 = vpack.c.b16 %v2018, %v2016
        %v2063 = vpack.c.b16 %v2019, %v2017
        %v2064 = vpack.c.b16 %v2022, %v2020
        %v2065 = vpack.c.b16 %v2023, %v2021
        %v2066 = vpack.c.b16 %v2026, %v2024
        %v2067 = vpack.c.b16 %v2027, %v2025
        %v2068 = vpack.c.b16 %v2030, %v2028
        %v2069 = vpack.c.b16 %v2031, %v2029
        %v2070 = vpack.c.b16 %v2034, %v2032
        %v2071 = vpack.c.b16 %v2035, %v2033
        %v2072 = vpack.c.b16 %v2038, %v2036
        %v2073 = vpack.c.b16 %v2039, %v2037
        %v2074 = vpack.c.b16 %v2042, %v2040
        %v2075 = vpack.c.b16 %v2043, %v2041
        %2108 = vmatprep.subr.bf16.mxu0 %v2045
        %2109 = vmatpush1.bf16.msra.mxu0 %v2044
        %2110 = vmatprep.subr.bf16.mxu0 %v2047
        %2111 = vmatpush1.bf16.msra.mxu0 %v2046
        %2112 = vmatprep.subr.bf16.mxu0 %v2049
        %2113 = vmatpush1.bf16.msra.mxu0 %v2048
        %2114 = vmatprep.subr.bf16.mxu0 %v2051
        %2115 = vmatpush1.bf16.msra.mxu0 %v2050
        %2116 = vmatprep.subr.bf16.mxu0 %v2053
        %2117 = vmatpush1.bf16.msra.mxu0 %v2052
        %2118 = vmatprep.subr.bf16.mxu0 %v2055
        %2119 = vmatpush1.bf16.msra.mxu0 %v2054
        %2120 = vmatprep.subr.bf16.mxu0 %v2057
        %2121 = vmatpush1.bf16.msra.mxu0 %v2056
        %2122 = vmatprep.subr.bf16.mxu0 %v2059
        %2123 = vmatpush1.bf16.msra.mxu0 %v2058
        %2124 = vmatprep.subr.bf16.mxu0 %v2061
        %2125 = vmatpush1.bf16.msra.mxu0 %v2060
        %2126 = vmatprep.subr.bf16.mxu0 %v2063
        %2127 = vmatpush1.bf16.msra.mxu0 %v2062
        %2128 = vmatprep.subr.bf16.mxu0 %v2065
        %2129 = vmatpush1.bf16.msra.mxu0 %v2064
        %2130 = vmatprep.subr.bf16.mxu0 %v2067
        %2131 = vmatpush1.bf16.msra.mxu0 %v2066
        %2132 = vmatprep.subr.bf16.mxu0 %v2069
        %2133 = vmatpush1.bf16.msra.mxu0 %v2068
        %2134 = vmatprep.subr.bf16.mxu0 %v2071
        %2135 = vmatpush1.bf16.msra.mxu0 %v2070
        %2136 = vmatprep.subr.bf16.mxu0 %v2073
        %2137 = vmatpush1.bf16.msra.mxu0 %v2072
        %2138 = vmatprep.subr.bf16.mxu0 %v2075
        %2139 = vmatpush1.bf16.msra.mxu0 %v2074
        %2140 = vmatprep.mubr.bf16.mxu0 %v1915
        %2141 = vmatmul.mubr.bf16.gmra.mrb[0].mxu0 %v1914
        %v2142 = vpop.f32.mrb[0].mxu0
        %v2143 = vadd.f32 0.0, %v2142
        %v2144 = vpop.f32.mrb[0].mxu0
        %v2145 = vadd.f32 0.0, %v2144
        %v2146 = vpop.f32.mrb[0].mxu0
        %v2147 = vadd.f32 0.0, %v2146
        %v2148 = vpop.f32.mrb[0].mxu0
        %v2149 = vadd.f32 0.0, %v2148
        %2150 = vdwg.mxu0
        %v2151 = vadd.f32 %v692, %v2143
        %v2152 = vadd.f32 %v693, %v2145
        %v2153 = vadd.f32 %v694, %v2147
        %v2154 = vadd.f32 %v695, %v2149
        %v2155 = vld [vmem:[%s662] sm:$0x3]
        %v2157 = vlaneseq
        %v2158 = vshrl.u32 %v2157, 7
        %v2159 = vsub.s32 0, %v2158
        %v2160 = vrot.slane %v2155, %v2159
        %v2161 = vlaneseq
        %v2162 = vshrl.u32 %v2161, 7
        %v2163 = vsub.s32 1, %v2162
        %v2164 = vrot.slane %v2155, %v2163
        %v2167 = vadd.f32 %v2151, %v2160
        %v2168 = vadd.f32 %v2152, %v2164
        %v2169 = vadd.f32 %v2153, %v2160
        %v2170 = vadd.f32 %v2154, %v2164
        %v2171 = vld [vmem:[%s666] sm:$0x3]
        %v2172 = vld [vmem:[%s670] sm:$0x3]
        %v2173 = vadd.f32 %v2167, %v2168
        %2174 = vadd.xlane.f32.xlu0 %v2173
        %v2175 = vpop.xlane.xlu0 %2174
        %v2176 = vadd.f32 %v2169, %v2170
        %2177 = vadd.xlane.f32.xlu0 %v2176
        %v2178 = vpop.xlane.xlu0 %2177
        %v2179 = vmul.f32 %v2175, %v704
        %v2180 = vmul.f32 %v2178, %v704
        %v2181 = vsub.f32 %v2167, %v2179
        %v2182 = vsub.f32 %v2168, %v2179
        %v2183 = vsub.f32 %v2169, %v2180
        %v2184 = vsub.f32 %v2170, %v2180
        %v2185 = vmul.f32 %v2181, %v2181
        %v2186 = vmul.f32 %v2182, %v2182
        %v2187 = vmul.f32 %v2183, %v2183
        %v2188 = vmul.f32 %v2184, %v2184
        %v2189 = vadd.f32 %v2185, %v2186
        %2190 = vadd.xlane.f32.xlu0 %v2189
        %v2191 = vpop.xlane.xlu0 %2190
        %v2192 = vadd.f32 %v2187, %v2188
        %2193 = vadd.xlane.f32.xlu0 %v2192
        %v2194 = vpop.xlane.xlu0 %2193
        %v2195 = vmul.f32 %v2191, %v704
        %v2196 = vmul.f32 %v2194, %v704
        %v2197 = vadd.f32 %v2195, 1e-05
        %v2198 = vadd.f32 %v2196, 1e-05
        %v2199 = vrsqrt.pop %v2197
        %v2200 = vrsqrt.pop %v2198
        %v2201 = vmul.f32 %v2181, %v2199
        %v2202 = vmul.f32 %v2182, %v2199
        %v2203 = vmul.f32 %v2183, %v2200
        %v2204 = vmul.f32 %v2184, %v2200
        %v2206 = vlaneseq
        %v2207 = vshrl.u32 %v2206, 7
        %v2208 = vsub.s32 0, %v2207
        %v2209 = vrot.slane %v2171, %v2208
        %v2210 = vlaneseq
        %v2211 = vshrl.u32 %v2210, 7
        %v2212 = vsub.s32 1, %v2211
        %v2213 = vrot.slane %v2171, %v2212
        %v2216 = vmul.f32 %v2201, %v2209
        %v2217 = vmul.f32 %v2202, %v2213
        %v2218 = vmul.f32 %v2203, %v2209
        %v2219 = vmul.f32 %v2204, %v2213
        %v2221 = vlaneseq
        %v2222 = vshrl.u32 %v2221, 7
        %v2223 = vsub.s32 0, %v2222
        %v2224 = vrot.slane %v2172, %v2223
        %v2225 = vlaneseq
        %v2226 = vshrl.u32 %v2225, 7
        %v2227 = vsub.s32 1, %v2226
        %v2228 = vrot.slane %v2172, %v2227
        %v2231 = vadd.f32 %v2216, %v2224
        %v2232 = vadd.f32 %v2217, %v2228
        %v2233 = vadd.f32 %v2218, %v2224
        %v2234 = vadd.f32 %v2219, %v2228
        %v2235 = vpack.c.bf16 %v2233, %v2231
        %v2236 = vpack.c.bf16 %v2234, %v2232
        %v2237 = vld [vmem:[%s548] sm:$0xff]
        %v2238 = vld [vmem:[%s548 + $0x8] sm:$0xff]
        %v2239 = vld [vmem:[%s548 + $0x10] sm:$0xff]
        %v2240 = vld [vmem:[%s548 + $0x18] sm:$0xff]
        %v2241 = vld [vmem:[%s548 + $0x20] sm:$0xff]
        %v2242 = vld [vmem:[%s548 + $0x28] sm:$0xff]
        %v2243 = vld [vmem:[%s548 + $0x30] sm:$0xff]
        %v2244 = vld [vmem:[%s548 + $0x38] sm:$0xff]
        %v2245 = vld [vmem:[%s548 + $0x40] sm:$0xff]
        %v2246 = vld [vmem:[%s548 + $0x48] sm:$0xff]
        %v2247 = vld [vmem:[%s548 + $0x50] sm:$0xff]
        %v2248 = vld [vmem:[%s548 + $0x58] sm:$0xff]
        %v2249 = vld [vmem:[%s548 + $0x60] sm:$0xff]
        %v2250 = vld [vmem:[%s548 + $0x68] sm:$0xff]
        %v2251 = vld [vmem:[%s548 + $0x70] sm:$0xff]
        %v2252 = vld [vmem:[%s548 + $0x78] sm:$0xff]
        %v2253 = vld [vmem:[%s548 + $0x80] sm:$0xff]
        %v2254 = vld [vmem:[%s548 + $0x88] sm:$0xff]
        %v2255 = vld [vmem:[%s548 + $0x90] sm:$0xff]
        %v2256 = vld [vmem:[%s548 + $0x98] sm:$0xff]
        %v2257 = vld [vmem:[%s548 + $0xa0] sm:$0xff]
        %v2258 = vld [vmem:[%s548 + $0xa8] sm:$0xff]
        %v2259 = vld [vmem:[%s548 + $0xb0] sm:$0xff]
        %v2260 = vld [vmem:[%s548 + $0xb8] sm:$0xff]
        %v2261 = vld [vmem:[%s548 + $0xc0] sm:$0xff]
        %v2262 = vld [vmem:[%s548 + $0xc8] sm:$0xff]
        %v2263 = vld [vmem:[%s548 + $0xd0] sm:$0xff]
        %v2264 = vld [vmem:[%s548 + $0xd8] sm:$0xff]
        %v2265 = vld [vmem:[%s548 + $0xe0] sm:$0xff]
        %v2266 = vld [vmem:[%s548 + $0xe8] sm:$0xff]
        %v2267 = vld [vmem:[%s548 + $0xf0] sm:$0xff]
        %v2268 = vld [vmem:[%s548 + $0xf8] sm:$0xff]
        %v2269 = vld [vmem:[%s548 + $0x100] sm:$0xff]
        %v2270 = vld [vmem:[%s548 + $0x108] sm:$0xff]
        %v2271 = vld [vmem:[%s548 + $0x110] sm:$0xff]
        %v2272 = vld [vmem:[%s548 + $0x118] sm:$0xff]
        %v2273 = vld [vmem:[%s548 + $0x120] sm:$0xff]
        %v2274 = vld [vmem:[%s548 + $0x128] sm:$0xff]
        %v2275 = vld [vmem:[%s548 + $0x130] sm:$0xff]
        %v2276 = vld [vmem:[%s548 + $0x138] sm:$0xff]
        %v2277 = vld [vmem:[%s548 + $0x140] sm:$0xff]
        %v2278 = vld [vmem:[%s548 + $0x148] sm:$0xff]
        %v2279 = vld [vmem:[%s548 + $0x150] sm:$0xff]
        %v2280 = vld [vmem:[%s548 + $0x158] sm:$0xff]
        %v2281 = vld [vmem:[%s548 + $0x160] sm:$0xff]
        %v2282 = vld [vmem:[%s548 + $0x168] sm:$0xff]
        %v2283 = vld [vmem:[%s548 + $0x170] sm:$0xff]
        %v2284 = vld [vmem:[%s548 + $0x178] sm:$0xff]
        %v2285 = vld [vmem:[%s548 + $0x180] sm:$0xff]
        %v2286 = vld [vmem:[%s548 + $0x188] sm:$0xff]
        %v2287 = vld [vmem:[%s548 + $0x190] sm:$0xff]
        %v2288 = vld [vmem:[%s548 + $0x198] sm:$0xff]
        %v2289 = vld [vmem:[%s548 + $0x1a0] sm:$0xff]
        %v2290 = vld [vmem:[%s548 + $0x1a8] sm:$0xff]
        %v2291 = vld [vmem:[%s548 + $0x1b0] sm:$0xff]
        %v2292 = vld [vmem:[%s548 + $0x1b8] sm:$0xff]
        %v2293 = vld [vmem:[%s548 + $0x1c0] sm:$0xff]
        %v2294 = vld [vmem:[%s548 + $0x1c8] sm:$0xff]
        %v2295 = vld [vmem:[%s548 + $0x1d0] sm:$0xff]
        %v2296 = vld [vmem:[%s548 + $0x1d8] sm:$0xff]
        %v2297 = vld [vmem:[%s548 + $0x1e0] sm:$0xff]
        %v2298 = vld [vmem:[%s548 + $0x1e8] sm:$0xff]
        %v2299 = vld [vmem:[%s548 + $0x1f0] sm:$0xff]
        %v2300 = vld [vmem:[%s548 + $0x1f8] sm:$0xff]
        %v2301 = vld [vmem:[%s548 + $0x200] sm:$0xff]
        %v2302 = vld [vmem:[%s548 + $0x208] sm:$0xff]
        %v2303 = vld [vmem:[%s548 + $0x210] sm:$0xff]
        %v2304 = vld [vmem:[%s548 + $0x218] sm:$0xff]
        %v2305 = vld [vmem:[%s548 + $0x220] sm:$0xff]
        %v2306 = vld [vmem:[%s548 + $0x228] sm:$0xff]
        %v2307 = vld [vmem:[%s548 + $0x230] sm:$0xff]
        %v2308 = vld [vmem:[%s548 + $0x238] sm:$0xff]
        %v2309 = vld [vmem:[%s548 + $0x240] sm:$0xff]
        %v2310 = vld [vmem:[%s548 + $0x248] sm:$0xff]
        %v2311 = vld [vmem:[%s548 + $0x250] sm:$0xff]
        %v2312 = vld [vmem:[%s548 + $0x258] sm:$0xff]
        %v2313 = vld [vmem:[%s548 + $0x260] sm:$0xff]
        %v2314 = vld [vmem:[%s548 + $0x268] sm:$0xff]
        %v2315 = vld [vmem:[%s548 + $0x270] sm:$0xff]
        %v2316 = vld [vmem:[%s548 + $0x278] sm:$0xff]
        %v2317 = vld [vmem:[%s548 + $0x280] sm:$0xff]
        %v2318 = vld [vmem:[%s548 + $0x288] sm:$0xff]
        %v2319 = vld [vmem:[%s548 + $0x290] sm:$0xff]
        %v2320 = vld [vmem:[%s548 + $0x298] sm:$0xff]
        %v2321 = vld [vmem:[%s548 + $0x2a0] sm:$0xff]
        %v2322 = vld [vmem:[%s548 + $0x2a8] sm:$0xff]
        %v2323 = vld [vmem:[%s548 + $0x2b0] sm:$0xff]
        %v2324 = vld [vmem:[%s548 + $0x2b8] sm:$0xff]
        %v2325 = vld [vmem:[%s548 + $0x2c0] sm:$0xff]
        %v2326 = vld [vmem:[%s548 + $0x2c8] sm:$0xff]
        %v2327 = vld [vmem:[%s548 + $0x2d0] sm:$0xff]
        %v2328 = vld [vmem:[%s548 + $0x2d8] sm:$0xff]
        %v2329 = vld [vmem:[%s548 + $0x2e0] sm:$0xff]
        %v2330 = vld [vmem:[%s548 + $0x2e8] sm:$0xff]
        %v2331 = vld [vmem:[%s548 + $0x2f0] sm:$0xff]
        %v2332 = vld [vmem:[%s548 + $0x2f8] sm:$0xff]
        %v2333 = vld [vmem:[%s548 + $0x300] sm:$0xff]
        %v2334 = vld [vmem:[%s548 + $0x308] sm:$0xff]
        %v2335 = vld [vmem:[%s548 + $0x310] sm:$0xff]
        %v2336 = vld [vmem:[%s548 + $0x318] sm:$0xff]
        %v2337 = vld [vmem:[%s548 + $0x320] sm:$0xff]
        %v2338 = vld [vmem:[%s548 + $0x328] sm:$0xff]
        %v2339 = vld [vmem:[%s548 + $0x330] sm:$0xff]
        %v2340 = vld [vmem:[%s548 + $0x338] sm:$0xff]
        %v2341 = vld [vmem:[%s548 + $0x340] sm:$0xff]
        %v2342 = vld [vmem:[%s548 + $0x348] sm:$0xff]
        %v2343 = vld [vmem:[%s548 + $0x350] sm:$0xff]
        %v2344 = vld [vmem:[%s548 + $0x358] sm:$0xff]
        %v2345 = vld [vmem:[%s548 + $0x360] sm:$0xff]
        %v2346 = vld [vmem:[%s548 + $0x368] sm:$0xff]
        %v2347 = vld [vmem:[%s548 + $0x370] sm:$0xff]
        %v2348 = vld [vmem:[%s548 + $0x378] sm:$0xff]
        %v2349 = vld [vmem:[%s548 + $0x380] sm:$0xff]
        %v2350 = vld [vmem:[%s548 + $0x388] sm:$0xff]
        %v2351 = vld [vmem:[%s548 + $0x390] sm:$0xff]
        %v2352 = vld [vmem:[%s548 + $0x398] sm:$0xff]
        %v2353 = vld [vmem:[%s548 + $0x3a0] sm:$0xff]
        %v2354 = vld [vmem:[%s548 + $0x3a8] sm:$0xff]
        %v2355 = vld [vmem:[%s548 + $0x3b0] sm:$0xff]
        %v2356 = vld [vmem:[%s548 + $0x3b8] sm:$0xff]
        %v2357 = vld [vmem:[%s548 + $0x3c0] sm:$0xff]
        %v2358 = vld [vmem:[%s548 + $0x3c8] sm:$0xff]
        %v2359 = vld [vmem:[%s548 + $0x3d0] sm:$0xff]
        %v2360 = vld [vmem:[%s548 + $0x3d8] sm:$0xff]
        %v2361 = vld [vmem:[%s548 + $0x3e0] sm:$0xff]
        %v2362 = vld [vmem:[%s548 + $0x3e8] sm:$0xff]
        %v2363 = vld [vmem:[%s548 + $0x3f0] sm:$0xff]
        %v2364 = vld [vmem:[%s548 + $0x3f8] sm:$0xff]
        %v2365 = vld [vmem:[%s674] sm:$0xff]
        %v2367 = vlaneseq
        %v2368 = vshrl.u32 %v2367, 7
        %v2369 = vsub.s32 0, %v2368
        %v2370 = vrot.slane %v2365, %v2369
        %v2371 = vlaneseq
        %v2372 = vshrl.u32 %v2371, 7
        %v2373 = vsub.s32 1, %v2372
        %v2374 = vrot.slane %v2365, %v2373
        %v2375 = vlaneseq
        %v2376 = vshrl.u32 %v2375, 7
        %v2377 = vsub.s32 2, %v2376
        %v2378 = vrot.slane %v2365, %v2377
        %v2379 = vlaneseq
        %v2380 = vshrl.u32 %v2379, 7
        %v2381 = vsub.s32 3, %v2380
        %v2382 = vrot.slane %v2365, %v2381
        %v2383 = vlaneseq
        %v2384 = vshrl.u32 %v2383, 7
        %v2385 = vsub.s32 4, %v2384
        %v2386 = vrot.slane %v2365, %v2385
        %v2387 = vlaneseq
        %v2388 = vshrl.u32 %v2387, 7
        %v2389 = vsub.s32 5, %v2388
        %v2390 = vrot.slane %v2365, %v2389
        %v2391 = vlaneseq
        %v2392 = vshrl.u32 %v2391, 7
        %v2393 = vsub.s32 6, %v2392
        %v2394 = vrot.slane %v2365, %v2393
        %v2395 = vlaneseq
        %v2396 = vshrl.u32 %v2395, 7
        %v2397 = vsub.s32 7, %v2396
        %v2398 = vrot.slane %v2365, %v2397
        %v2535 = vunpack.c.l.b16 %v2237
        %v2536 = vunpack.c.h.b16 %v2237
        %v2537 = vunpack.c.l.b16 %v2238
        %v2538 = vunpack.c.h.b16 %v2238
        %v2539 = vunpack.c.l.b16 %v2239
        %v2540 = vunpack.c.h.b16 %v2239
        %v2541 = vunpack.c.l.b16 %v2240
        %v2542 = vunpack.c.h.b16 %v2240
        %v2543 = vunpack.c.l.b16 %v2241
        %v2544 = vunpack.c.h.b16 %v2241
        %v2545 = vunpack.c.l.b16 %v2242
        %v2546 = vunpack.c.h.b16 %v2242
        %v2547 = vunpack.c.l.b16 %v2243
        %v2548 = vunpack.c.h.b16 %v2243
        %v2549 = vunpack.c.l.b16 %v2244
        %v2550 = vunpack.c.h.b16 %v2244
        %v2551 = vunpack.c.l.b16 %v2245
        %v2552 = vunpack.c.h.b16 %v2245
        %v2553 = vunpack.c.l.b16 %v2246
        %v2554 = vunpack.c.h.b16 %v2246
        %v2555 = vunpack.c.l.b16 %v2247
        %v2556 = vunpack.c.h.b16 %v2247
        %v2557 = vunpack.c.l.b16 %v2248
        %v2558 = vunpack.c.h.b16 %v2248
        %v2559 = vunpack.c.l.b16 %v2249
        %v2560 = vunpack.c.h.b16 %v2249
        %v2561 = vunpack.c.l.b16 %v2250
        %v2562 = vunpack.c.h.b16 %v2250
        %v2563 = vunpack.c.l.b16 %v2251
        %v2564 = vunpack.c.h.b16 %v2251
        %v2565 = vunpack.c.l.b16 %v2252
        %v2566 = vunpack.c.h.b16 %v2252
        %v2567 = vunpack.c.l.b16 %v2253
        %v2568 = vunpack.c.h.b16 %v2253
        %v2569 = vunpack.c.l.b16 %v2254
        %v2570 = vunpack.c.h.b16 %v2254
        %v2571 = vunpack.c.l.b16 %v2255
        %v2572 = vunpack.c.h.b16 %v2255
        %v2573 = vunpack.c.l.b16 %v2256
        %v2574 = vunpack.c.h.b16 %v2256
        %v2575 = vunpack.c.l.b16 %v2257
        %v2576 = vunpack.c.h.b16 %v2257
        %v2577 = vunpack.c.l.b16 %v2258
        %v2578 = vunpack.c.h.b16 %v2258
        %v2579 = vunpack.c.l.b16 %v2259
        %v2580 = vunpack.c.h.b16 %v2259
        %v2581 = vunpack.c.l.b16 %v2260
        %v2582 = vunpack.c.h.b16 %v2260
        %v2583 = vunpack.c.l.b16 %v2261
        %v2584 = vunpack.c.h.b16 %v2261
        %v2585 = vunpack.c.l.b16 %v2262
        %v2586 = vunpack.c.h.b16 %v2262
        %v2587 = vunpack.c.l.b16 %v2263
        %v2588 = vunpack.c.h.b16 %v2263
        %v2589 = vunpack.c.l.b16 %v2264
        %v2590 = vunpack.c.h.b16 %v2264
        %v2591 = vunpack.c.l.b16 %v2265
        %v2592 = vunpack.c.h.b16 %v2265
        %v2593 = vunpack.c.l.b16 %v2266
        %v2594 = vunpack.c.h.b16 %v2266
        %v2595 = vunpack.c.l.b16 %v2267
        %v2596 = vunpack.c.h.b16 %v2267
        %v2597 = vunpack.c.l.b16 %v2268
        %v2598 = vunpack.c.h.b16 %v2268
        %v2599 = vunpack.c.l.b16 %v2269
        %v2600 = vunpack.c.h.b16 %v2269
        %v2601 = vunpack.c.l.b16 %v2270
        %v2602 = vunpack.c.h.b16 %v2270
        %v2603 = vunpack.c.l.b16 %v2271
        %v2604 = vunpack.c.h.b16 %v2271
        %v2605 = vunpack.c.l.b16 %v2272
        %v2606 = vunpack.c.h.b16 %v2272
        %v2607 = vunpack.c.l.b16 %v2273
        %v2608 = vunpack.c.h.b16 %v2273
        %v2609 = vunpack.c.l.b16 %v2274
        %v2610 = vunpack.c.h.b16 %v2274
        %v2611 = vunpack.c.l.b16 %v2275
        %v2612 = vunpack.c.h.b16 %v2275
        %v2613 = vunpack.c.l.b16 %v2276
        %v2614 = vunpack.c.h.b16 %v2276
        %v2615 = vunpack.c.l.b16 %v2277
        %v2616 = vunpack.c.h.b16 %v2277
        %v2617 = vunpack.c.l.b16 %v2278
        %v2618 = vunpack.c.h.b16 %v2278
        %v2619 = vunpack.c.l.b16 %v2279
        %v2620 = vunpack.c.h.b16 %v2279
        %v2621 = vunpack.c.l.b16 %v2280
        %v2622 = vunpack.c.h.b16 %v2280
        %v2623 = vunpack.c.l.b16 %v2281
        %v2624 = vunpack.c.h.b16 %v2281
        %v2625 = vunpack.c.l.b16 %v2282
        %v2626 = vunpack.c.h.b16 %v2282
        %v2627 = vunpack.c.l.b16 %v2283
        %v2628 = vunpack.c.h.b16 %v2283
        %v2629 = vunpack.c.l.b16 %v2284
        %v2630 = vunpack.c.h.b16 %v2284
        %v2631 = vunpack.c.l.b16 %v2285
        %v2632 = vunpack.c.h.b16 %v2285
        %v2633 = vunpack.c.l.b16 %v2286
        %v2634 = vunpack.c.h.b16 %v2286
        %v2635 = vunpack.c.l.b16 %v2287
        %v2636 = vunpack.c.h.b16 %v2287
        %v2637 = vunpack.c.l.b16 %v2288
        %v2638 = vunpack.c.h.b16 %v2288
        %v2639 = vunpack.c.l.b16 %v2289
        %v2640 = vunpack.c.h.b16 %v2289
        %v2641 = vunpack.c.l.b16 %v2290
        %v2642 = vunpack.c.h.b16 %v2290
        %v2643 = vunpack.c.l.b16 %v2291
        %v2644 = vunpack.c.h.b16 %v2291
        %v2645 = vunpack.c.l.b16 %v2292
        %v2646 = vunpack.c.h.b16 %v2292
        %v2647 = vunpack.c.l.b16 %v2293
        %v2648 = vunpack.c.h.b16 %v2293
        %v2649 = vunpack.c.l.b16 %v2294
        %v2650 = vunpack.c.h.b16 %v2294
        %v2651 = vunpack.c.l.b16 %v2295
        %v2652 = vunpack.c.h.b16 %v2295
        %v2653 = vunpack.c.l.b16 %v2296
        %v2654 = vunpack.c.h.b16 %v2296
        %v2655 = vunpack.c.l.b16 %v2297
        %v2656 = vunpack.c.h.b16 %v2297
        %v2657 = vunpack.c.l.b16 %v2298
        %v2658 = vunpack.c.h.b16 %v2298
        %v2659 = vunpack.c.l.b16 %v2299
        %v2660 = vunpack.c.h.b16 %v2299
        %v2661 = vunpack.c.l.b16 %v2300
        %v2662 = vunpack.c.h.b16 %v2300
        %v2663 = vunpack.c.l.b16 %v2301
        %v2664 = vunpack.c.h.b16 %v2301
        %v2665 = vunpack.c.l.b16 %v2302
        %v2666 = vunpack.c.h.b16 %v2302
        %v2667 = vunpack.c.l.b16 %v2303
        %v2668 = vunpack.c.h.b16 %v2303
        %v2669 = vunpack.c.l.b16 %v2304
        %v2670 = vunpack.c.h.b16 %v2304
        %v2671 = vunpack.c.l.b16 %v2305
        %v2672 = vunpack.c.h.b16 %v2305
        %v2673 = vunpack.c.l.b16 %v2306
        %v2674 = vunpack.c.h.b16 %v2306
        %v2675 = vunpack.c.l.b16 %v2307
        %v2676 = vunpack.c.h.b16 %v2307
        %v2677 = vunpack.c.l.b16 %v2308
        %v2678 = vunpack.c.h.b16 %v2308
        %v2679 = vunpack.c.l.b16 %v2309
        %v2680 = vunpack.c.h.b16 %v2309
        %v2681 = vunpack.c.l.b16 %v2310
        %v2682 = vunpack.c.h.b16 %v2310
        %v2683 = vunpack.c.l.b16 %v2311
        %v2684 = vunpack.c.h.b16 %v2311
        %v2685 = vunpack.c.l.b16 %v2312
        %v2686 = vunpack.c.h.b16 %v2312
        %v2687 = vunpack.c.l.b16 %v2313
        %v2688 = vunpack.c.h.b16 %v2313
        %v2689 = vunpack.c.l.b16 %v2314
        %v2690 = vunpack.c.h.b16 %v2314
        %v2691 = vunpack.c.l.b16 %v2315
        %v2692 = vunpack.c.h.b16 %v2315
        %v2693 = vunpack.c.l.b16 %v2316
        %v2694 = vunpack.c.h.b16 %v2316
        %v2695 = vunpack.c.l.b16 %v2317
        %v2696 = vunpack.c.h.b16 %v2317
        %v2697 = vunpack.c.l.b16 %v2318
        %v2698 = vunpack.c.h.b16 %v2318
        %v2699 = vunpack.c.l.b16 %v2319
        %v2700 = vunpack.c.h.b16 %v2319
        %v2701 = vunpack.c.l.b16 %v2320
        %v2702 = vunpack.c.h.b16 %v2320
        %v2703 = vunpack.c.l.b16 %v2321
        %v2704 = vunpack.c.h.b16 %v2321
        %v2705 = vunpack.c.l.b16 %v2322
        %v2706 = vunpack.c.h.b16 %v2322
        %v2707 = vunpack.c.l.b16 %v2323
        %v2708 = vunpack.c.h.b16 %v2323
        %v2709 = vunpack.c.l.b16 %v2324
        %v2710 = vunpack.c.h.b16 %v2324
        %v2711 = vunpack.c.l.b16 %v2325
        %v2712 = vunpack.c.h.b16 %v2325
        %v2713 = vunpack.c.l.b16 %v2326
        %v2714 = vunpack.c.h.b16 %v2326
        %v2715 = vunpack.c.l.b16 %v2327
        %v2716 = vunpack.c.h.b16 %v2327
        %v2717 = vunpack.c.l.b16 %v2328
        %v2718 = vunpack.c.h.b16 %v2328
        %v2719 = vunpack.c.l.b16 %v2329
        %v2720 = vunpack.c.h.b16 %v2329
        %v2721 = vunpack.c.l.b16 %v2330
        %v2722 = vunpack.c.h.b16 %v2330
        %v2723 = vunpack.c.l.b16 %v2331
        %v2724 = vunpack.c.h.b16 %v2331
        %v2725 = vunpack.c.l.b16 %v2332
        %v2726 = vunpack.c.h.b16 %v2332
        %v2727 = vunpack.c.l.b16 %v2333
        %v2728 = vunpack.c.h.b16 %v2333
        %v2729 = vunpack.c.l.b16 %v2334
        %v2730 = vunpack.c.h.b16 %v2334
        %v2731 = vunpack.c.l.b16 %v2335
        %v2732 = vunpack.c.h.b16 %v2335
        %v2733 = vunpack.c.l.b16 %v2336
        %v2734 = vunpack.c.h.b16 %v2336
        %v2735 = vunpack.c.l.b16 %v2337
        %v2736 = vunpack.c.h.b16 %v2337
        %v2737 = vunpack.c.l.b16 %v2338
        %v2738 = vunpack.c.h.b16 %v2338
        %v2739 = vunpack.c.l.b16 %v2339
        %v2740 = vunpack.c.h.b16 %v2339
        %v2741 = vunpack.c.l.b16 %v2340
        %v2742 = vunpack.c.h.b16 %v2340
        %v2743 = vunpack.c.l.b16 %v2341
        %v2744 = vunpack.c.h.b16 %v2341
        %v2745 = vunpack.c.l.b16 %v2342
        %v2746 = vunpack.c.h.b16 %v2342
        %v2747 = vunpack.c.l.b16 %v2343
        %v2748 = vunpack.c.h.b16 %v2343
        %v2749 = vunpack.c.l.b16 %v2344
        %v2750 = vunpack.c.h.b16 %v2344
        %v2751 = vunpack.c.l.b16 %v2345
        %v2752 = vunpack.c.h.b16 %v2345
        %v2753 = vunpack.c.l.b16 %v2346
        %v2754 = vunpack.c.h.b16 %v2346
        %v2755 = vunpack.c.l.b16 %v2347
        %v2756 = vunpack.c.h.b16 %v2347
        %v2757 = vunpack.c.l.b16 %v2348
        %v2758 = vunpack.c.h.b16 %v2348
        %v2759 = vunpack.c.l.b16 %v2349
        %v2760 = vunpack.c.h.b16 %v2349
        %v2761 = vunpack.c.l.b16 %v2350
        %v2762 = vunpack.c.h.b16 %v2350
        %v2763 = vunpack.c.l.b16 %v2351
        %v2764 = vunpack.c.h.b16 %v2351
        %v2765 = vunpack.c.l.b16 %v2352
        %v2766 = vunpack.c.h.b16 %v2352
        %v2767 = vunpack.c.l.b16 %v2353
        %v2768 = vunpack.c.h.b16 %v2353
        %v2769 = vunpack.c.l.b16 %v2354
        %v2770 = vunpack.c.h.b16 %v2354
        %v2771 = vunpack.c.l.b16 %v2355
        %v2772 = vunpack.c.h.b16 %v2355
        %v2773 = vunpack.c.l.b16 %v2356
        %v2774 = vunpack.c.h.b16 %v2356
        %v2775 = vunpack.c.l.b16 %v2357
        %v2776 = vunpack.c.h.b16 %v2357
        %v2777 = vunpack.c.l.b16 %v2358
        %v2778 = vunpack.c.h.b16 %v2358
        %v2779 = vunpack.c.l.b16 %v2359
        %v2780 = vunpack.c.h.b16 %v2359
        %v2781 = vunpack.c.l.b16 %v2360
        %v2782 = vunpack.c.h.b16 %v2360
        %v2783 = vunpack.c.l.b16 %v2361
        %v2784 = vunpack.c.h.b16 %v2361
        %v2785 = vunpack.c.l.b16 %v2362
        %v2786 = vunpack.c.h.b16 %v2362
        %v2787 = vunpack.c.l.b16 %v2363
        %v2788 = vunpack.c.h.b16 %v2363
        %v2789 = vunpack.c.l.b16 %v2364
        %v2790 = vunpack.c.h.b16 %v2364
        %v2791 = vpack.c.b16 %v2543, %v2535
        %v2792 = vpack.c.b16 %v2544, %v2536
        %v2793 = vpack.c.b16 %v2545, %v2537
        %v2794 = vpack.c.b16 %v2546, %v2538
        %v2795 = vpack.c.b16 %v2547, %v2539
        %v2796 = vpack.c.b16 %v2548, %v2540
        %v2797 = vpack.c.b16 %v2549, %v2541
        %v2798 = vpack.c.b16 %v2550, %v2542
        %v2799 = vpack.c.b16 %v2559, %v2551
        %v2800 = vpack.c.b16 %v2560, %v2552
        %v2801 = vpack.c.b16 %v2561, %v2553
        %v2802 = vpack.c.b16 %v2562, %v2554
        %v2803 = vpack.c.b16 %v2563, %v2555
        %v2804 = vpack.c.b16 %v2564, %v2556
        %v2805 = vpack.c.b16 %v2565, %v2557
        %v2806 = vpack.c.b16 %v2566, %v2558
        %v2807 = vpack.c.b16 %v2575, %v2567
        %v2808 = vpack.c.b16 %v2576, %v2568
        %v2809 = vpack.c.b16 %v2577, %v2569
        %v2810 = vpack.c.b16 %v2578, %v2570
        %v2811 = vpack.c.b16 %v2579, %v2571
        %v2812 = vpack.c.b16 %v2580, %v2572
        %v2813 = vpack.c.b16 %v2581, %v2573
        %v2814 = vpack.c.b16 %v2582, %v2574
        %v2815 = vpack.c.b16 %v2591, %v2583
        %v2816 = vpack.c.b16 %v2592, %v2584
        %v2817 = vpack.c.b16 %v2593, %v2585
        %v2818 = vpack.c.b16 %v2594, %v2586
        %v2819 = vpack.c.b16 %v2595, %v2587
        %v2820 = vpack.c.b16 %v2596, %v2588
        %v2821 = vpack.c.b16 %v2597, %v2589
        %v2822 = vpack.c.b16 %v2598, %v2590
        %v2823 = vpack.c.b16 %v2607, %v2599
        %v2824 = vpack.c.b16 %v2608, %v2600
        %v2825 = vpack.c.b16 %v2609, %v2601
        %v2826 = vpack.c.b16 %v2610, %v2602
        %v2827 = vpack.c.b16 %v2611, %v2603
        %v2828 = vpack.c.b16 %v2612, %v2604
        %v2829 = vpack.c.b16 %v2613, %v2605
        %v2830 = vpack.c.b16 %v2614, %v2606
        %v2831 = vpack.c.b16 %v2623, %v2615
        %v2832 = vpack.c.b16 %v2624, %v2616
        %v2833 = vpack.c.b16 %v2625, %v2617
        %v2834 = vpack.c.b16 %v2626, %v2618
        %v2835 = vpack.c.b16 %v2627, %v2619
        %v2836 = vpack.c.b16 %v2628, %v2620
        %v2837 = vpack.c.b16 %v2629, %v2621
        %v2838 = vpack.c.b16 %v2630, %v2622
        %v2839 = vpack.c.b16 %v2639, %v2631
        %v2840 = vpack.c.b16 %v2640, %v2632
        %v2841 = vpack.c.b16 %v2641, %v2633
        %v2842 = vpack.c.b16 %v2642, %v2634
        %v2843 = vpack.c.b16 %v2643, %v2635
        %v2844 = vpack.c.b16 %v2644, %v2636
        %v2845 = vpack.c.b16 %v2645, %v2637
        %v2846 = vpack.c.b16 %v2646, %v2638
        %v2847 = vpack.c.b16 %v2655, %v2647
        %v2848 = vpack.c.b16 %v2656, %v2648
        %v2849 = vpack.c.b16 %v2657, %v2649
        %v2850 = vpack.c.b16 %v2658, %v2650
        %v2851 = vpack.c.b16 %v2659, %v2651
        %v2852 = vpack.c.b16 %v2660, %v2652
        %v2853 = vpack.c.b16 %v2661, %v2653
        %v2854 = vpack.c.b16 %v2662, %v2654
        %v2855 = vpack.c.b16 %v2671, %v2663
        %v2856 = vpack.c.b16 %v2672, %v2664
        %v2857 = vpack.c.b16 %v2673, %v2665
        %v2858 = vpack.c.b16 %v2674, %v2666
        %v2859 = vpack.c.b16 %v2675, %v2667
        %v2860 = vpack.c.b16 %v2676, %v2668
        %v2861 = vpack.c.b16 %v2677, %v2669
        %v2862 = vpack.c.b16 %v2678, %v2670
        %v2863 = vpack.c.b16 %v2687, %v2679
        %v2864 = vpack.c.b16 %v2688, %v2680
        %v2865 = vpack.c.b16 %v2689, %v2681
        %v2866 = vpack.c.b16 %v2690, %v2682
        %v2867 = vpack.c.b16 %v2691, %v2683
        %v2868 = vpack.c.b16 %v2692, %v2684
        %v2869 = vpack.c.b16 %v2693, %v2685
        %v2870 = vpack.c.b16 %v2694, %v2686
        %v2871 = vpack.c.b16 %v2703, %v2695
        %v2872 = vpack.c.b16 %v2704, %v2696
        %v2873 = vpack.c.b16 %v2705, %v2697
        %v2874 = vpack.c.b16 %v2706, %v2698
        %v2875 = vpack.c.b16 %v2707, %v2699
        %v2876 = vpack.c.b16 %v2708, %v2700
        %v2877 = vpack.c.b16 %v2709, %v2701
        %v2878 = vpack.c.b16 %v2710, %v2702
        %v2879 = vpack.c.b16 %v2719, %v2711
        %v2880 = vpack.c.b16 %v2720, %v2712
        %v2881 = vpack.c.b16 %v2721, %v2713
        %v2882 = vpack.c.b16 %v2722, %v2714
        %v2883 = vpack.c.b16 %v2723, %v2715
        %v2884 = vpack.c.b16 %v2724, %v2716
        %v2885 = vpack.c.b16 %v2725, %v2717
        %v2886 = vpack.c.b16 %v2726, %v2718
        %v2887 = vpack.c.b16 %v2735, %v2727
        %v2888 = vpack.c.b16 %v2736, %v2728
        %v2889 = vpack.c.b16 %v2737, %v2729
        %v2890 = vpack.c.b16 %v2738, %v2730
        %v2891 = vpack.c.b16 %v2739, %v2731
        %v2892 = vpack.c.b16 %v2740, %v2732
        %v2893 = vpack.c.b16 %v2741, %v2733
        %v2894 = vpack.c.b16 %v2742, %v2734
        %v2895 = vpack.c.b16 %v2751, %v2743
        %v2896 = vpack.c.b16 %v2752, %v2744
        %v2897 = vpack.c.b16 %v2753, %v2745
        %v2898 = vpack.c.b16 %v2754, %v2746
        %v2899 = vpack.c.b16 %v2755, %v2747
        %v2900 = vpack.c.b16 %v2756, %v2748
        %v2901 = vpack.c.b16 %v2757, %v2749
        %v2902 = vpack.c.b16 %v2758, %v2750
        %v2903 = vpack.c.b16 %v2767, %v2759
        %v2904 = vpack.c.b16 %v2768, %v2760
        %v2905 = vpack.c.b16 %v2769, %v2761
        %v2906 = vpack.c.b16 %v2770, %v2762
        %v2907 = vpack.c.b16 %v2771, %v2763
        %v2908 = vpack.c.b16 %v2772, %v2764
        %v2909 = vpack.c.b16 %v2773, %v2765
        %v2910 = vpack.c.b16 %v2774, %v2766
        %v2911 = vpack.c.b16 %v2783, %v2775
        %v2912 = vpack.c.b16 %v2784, %v2776
        %v2913 = vpack.c.b16 %v2785, %v2777
        %v2914 = vpack.c.b16 %v2786, %v2778
        %v2915 = vpack.c.b16 %v2787, %v2779
        %v2916 = vpack.c.b16 %v2788, %v2780
        %v2917 = vpack.c.b16 %v2789, %v2781
        %v2918 = vpack.c.b16 %v2790, %v2782
        %3047 = vmatprep.subr.bf16.mxu0 %v2792
        %3048 = vmatpush1.bf16.msra.mxu0 %v2791
        %3049 = vmatprep.subr.bf16.mxu0 %v2800
        %3050 = vmatpush1.bf16.msra.mxu0 %v2799
        %3051 = vmatprep.subr.bf16.mxu0 %v2808
        %3052 = vmatpush1.bf16.msra.mxu0 %v2807
        %3053 = vmatprep.subr.bf16.mxu0 %v2816
        %3054 = vmatpush1.bf16.msra.mxu0 %v2815
        %3055 = vmatprep.subr.bf16.mxu0 %v2824
        %3056 = vmatpush1.bf16.msra.mxu0 %v2823
        %3057 = vmatprep.subr.bf16.mxu0 %v2832
        %3058 = vmatpush1.bf16.msra.mxu0 %v2831
        %3059 = vmatprep.subr.bf16.mxu0 %v2840
        %3060 = vmatpush1.bf16.msra.mxu0 %v2839
        %3061 = vmatprep.subr.bf16.mxu0 %v2848
        %3062 = vmatpush1.bf16.msra.mxu0 %v2847
        %3063 = vmatprep.subr.bf16.mxu0 %v2856
        %3064 = vmatpush1.bf16.msra.mxu0 %v2855
        %3065 = vmatprep.subr.bf16.mxu0 %v2864
        %3066 = vmatpush1.bf16.msra.mxu0 %v2863
        %3067 = vmatprep.subr.bf16.mxu0 %v2872
        %3068 = vmatpush1.bf16.msra.mxu0 %v2871
        %3069 = vmatprep.subr.bf16.mxu0 %v2880
        %3070 = vmatpush1.bf16.msra.mxu0 %v2879
        %3071 = vmatprep.subr.bf16.mxu0 %v2888
        %3072 = vmatpush1.bf16.msra.mxu0 %v2887
        %3073 = vmatprep.subr.bf16.mxu0 %v2896
        %3074 = vmatpush1.bf16.msra.mxu0 %v2895
        %3075 = vmatprep.subr.bf16.mxu0 %v2904
        %3076 = vmatpush1.bf16.msra.mxu0 %v2903
        %3077 = vmatprep.subr.bf16.mxu0 %v2912
        %3078 = vmatpush1.bf16.msra.mxu0 %v2911
        %3079 = vmatprep.mubr.bf16.mxu0 %v2236
        %3080 = vmatmul.mubr.bf16.gmra.mrb[0].mxu0 %v2235
        %v3081 = vpop.f32.mrb[0].mxu0
        %v3082 = vadd.f32 %v2370, %v3081
        %v3083 = vpop.f32.mrb[0].mxu0
        %v3084 = vadd.f32 %v2374, %v3083
        %v3085 = vpop.f32.mrb[0].mxu0
        %v3086 = vadd.f32 %v2370, %v3085
        %v3087 = vpop.f32.mrb[0].mxu0
        %v3088 = vadd.f32 %v2374, %v3087
        %3089 = vdwg.mxu0
        %3090 = vmatprep.subr.bf16.mxu0 %v2794
        %3091 = vmatpush1.bf16.msra.mxu0 %v2793
        %3092 = vmatprep.subr.bf16.mxu0 %v2802
        %3093 = vmatpush1.bf16.msra.mxu0 %v2801
        %3094 = vmatprep.subr.bf16.mxu0 %v2810
        %3095 = vmatpush1.bf16.msra.mxu0 %v2809
        %3096 = vmatprep.subr.bf16.mxu0 %v2818
        %3097 = vmatpush1.bf16.msra.mxu0 %v2817
        %3098 = vmatprep.subr.bf16.mxu0 %v2826
        %3099 = vmatpush1.bf16.msra.mxu0 %v2825
        %3100 = vmatprep.subr.bf16.mxu0 %v2834
        %3101 = vmatpush1.bf16.msra.mxu0 %v2833
        %3102 = vmatprep.subr.bf16.mxu0 %v2842
        %3103 = vmatpush1.bf16.msra.mxu0 %v2841
        %3104 = vmatprep.subr.bf16.mxu0 %v2850
        %3105 = vmatpush1.bf16.msra.mxu0 %v2849
        %3106 = vmatprep.subr.bf16.mxu0 %v2858
        %3107 = vmatpush1.bf16.msra.mxu0 %v2857
        %3108 = vmatprep.subr.bf16.mxu0 %v2866
        %3109 = vmatpush1.bf16.msra.mxu0 %v2865
        %3110 = vmatprep.subr.bf16.mxu0 %v2874
        %3111 = vmatpush1.bf16.msra.mxu0 %v2873
        %3112 = vmatprep.subr.bf16.mxu0 %v2882
        %3113 = vmatpush1.bf16.msra.mxu0 %v2881
        %3114 = vmatprep.subr.bf16.mxu0 %v2890
        %3115 = vmatpush1.bf16.msra.mxu0 %v2889
        %3116 = vmatprep.subr.bf16.mxu0 %v2898
        %3117 = vmatpush1.bf16.msra.mxu0 %v2897
        %3118 = vmatprep.subr.bf16.mxu0 %v2906
        %3119 = vmatpush1.bf16.msra.mxu0 %v2905
        %3120 = vmatprep.subr.bf16.mxu0 %v2914
        %3121 = vmatpush1.bf16.msra.mxu0 %v2913
        %3122 = vmatprep.mubr.bf16.mxu0 %v2236
        %3123 = vmatmul.mubr.bf16.gmra.mrb[0].mxu0 %v2235
        %v3124 = vpop.f32.mrb[0].mxu0
        %v3125 = vadd.f32 %v2378, %v3124
        %v3126 = vpop.f32.mrb[0].mxu0
        %v3127 = vadd.f32 %v2382, %v3126
        %v3128 = vpop.f32.mrb[0].mxu0
        %v3129 = vadd.f32 %v2378, %v3128
        %v3130 = vpop.f32.mrb[0].mxu0
        %v3131 = vadd.f32 %v2382, %v3130
        %3132 = vdwg.mxu0
        %3133 = vmatprep.subr.bf16.mxu0 %v2796
        %3134 = vmatpush1.bf16.msra.mxu0 %v2795
        %3135 = vmatprep.subr.bf16.mxu0 %v2804
        %3136 = vmatpush1.bf16.msra.mxu0 %v2803
        %3137 = vmatprep.subr.bf16.mxu0 %v2812
        %3138 = vmatpush1.bf16.msra.mxu0 %v2811
        %3139 = vmatprep.subr.bf16.mxu0 %v2820
        %3140 = vmatpush1.bf16.msra.mxu0 %v2819
        %3141 = vmatprep.subr.bf16.mxu0 %v2828
        %3142 = vmatpush1.bf16.msra.mxu0 %v2827
        %3143 = vmatprep.subr.bf16.mxu0 %v2836
        %3144 = vmatpush1.bf16.msra.mxu0 %v2835
        %3145 = vmatprep.subr.bf16.mxu0 %v2844
        %3146 = vmatpush1.bf16.msra.mxu0 %v2843
        %3147 = vmatprep.subr.bf16.mxu0 %v2852
        %3148 = vmatpush1.bf16.msra.mxu0 %v2851
        %3149 = vmatprep.subr.bf16.mxu0 %v2860
        %3150 = vmatpush1.bf16.msra.mxu0 %v2859
        %3151 = vmatprep.subr.bf16.mxu0 %v2868
        %3152 = vmatpush1.bf16.msra.mxu0 %v2867
        %3153 = vmatprep.subr.bf16.mxu0 %v2876
        %3154 = vmatpush1.bf16.msra.mxu0 %v2875
        %3155 = vmatprep.subr.bf16.mxu0 %v2884
        %3156 = vmatpush1.bf16.msra.mxu0 %v2883
        %3157 = vmatprep.subr.bf16.mxu0 %v2892
        %3158 = vmatpush1.bf16.msra.mxu0 %v2891
        %3159 = vmatprep.subr.bf16.mxu0 %v2900
        %3160 = vmatpush1.bf16.msra.mxu0 %v2899
        %3161 = vmatprep.subr.bf16.mxu0 %v2908
        %3162 = vmatpush1.bf16.msra.mxu0 %v2907
        %3163 = vmatprep.subr.bf16.mxu0 %v2916
        %3164 = vmatpush1.bf16.msra.mxu0 %v2915
        %3165 = vmatprep.mubr.bf16.mxu0 %v2236
        %3166 = vmatmul.mubr.bf16.gmra.mrb[0].mxu0 %v2235
        %v3167 = vpop.f32.mrb[0].mxu0
        %v3168 = vadd.f32 %v2386, %v3167
        %v3169 = vpop.f32.mrb[0].mxu0
        %v3170 = vadd.f32 %v2390, %v3169
        %v3171 = vpop.f32.mrb[0].mxu0
        %v3172 = vadd.f32 %v2386, %v3171
        %v3173 = vpop.f32.mrb[0].mxu0
        %v3174 = vadd.f32 %v2390, %v3173
        %3175 = vdwg.mxu0
        %3176 = vmatprep.subr.bf16.mxu0 %v2798
        %3177 = vmatpush1.bf16.msra.mxu0 %v2797
        %3178 = vmatprep.subr.bf16.mxu0 %v2806
        %3179 = vmatpush1.bf16.msra.mxu0 %v2805
        %3180 = vmatprep.subr.bf16.mxu0 %v2814
        %3181 = vmatpush1.bf16.msra.mxu0 %v2813
        %3182 = vmatprep.subr.bf16.mxu0 %v2822
        %3183 = vmatpush1.bf16.msra.mxu0 %v2821
        %3184 = vmatprep.subr.bf16.mxu0 %v2830
        %3185 = vmatpush1.bf16.msra.mxu0 %v2829
        %3186 = vmatprep.subr.bf16.mxu0 %v2838
        %3187 = vmatpush1.bf16.msra.mxu0 %v2837
        %3188 = vmatprep.subr.bf16.mxu0 %v2846
        %3189 = vmatpush1.bf16.msra.mxu0 %v2845
        %3190 = vmatprep.subr.bf16.mxu0 %v2854
        %3191 = vmatpush1.bf16.msra.mxu0 %v2853
        %3192 = vmatprep.subr.bf16.mxu0 %v2862
        %3193 = vmatpush1.bf16.msra.mxu0 %v2861
        %3194 = vmatprep.subr.bf16.mxu0 %v2870
        %3195 = vmatpush1.bf16.msra.mxu0 %v2869
        %3196 = vmatprep.subr.bf16.mxu0 %v2878
        %3197 = vmatpush1.bf16.msra.mxu0 %v2877
        %3198 = vmatprep.subr.bf16.mxu0 %v2886
        %3199 = vmatpush1.bf16.msra.mxu0 %v2885
        %3200 = vmatprep.subr.bf16.mxu0 %v2894
        %3201 = vmatpush1.bf16.msra.mxu0 %v2893
        %3202 = vmatprep.subr.bf16.mxu0 %v2902
        %3203 = vmatpush1.bf16.msra.mxu0 %v2901
        %3204 = vmatprep.subr.bf16.mxu0 %v2910
        %3205 = vmatpush1.bf16.msra.mxu0 %v2909
        %3206 = vmatprep.subr.bf16.mxu0 %v2918
        %3207 = vmatpush1.bf16.msra.mxu0 %v2917
        %3208 = vmatprep.mubr.bf16.mxu0 %v2236
        %3209 = vmatmul.mubr.bf16.gmra.mrb[0].mxu0 %v2235
        %v3210 = vpop.f32.mrb[0].mxu0
        %v3211 = vadd.f32 %v2394, %v3210
        %v3212 = vpop.f32.mrb[0].mxu0
        %v3213 = vadd.f32 %v2398, %v3212
        %v3214 = vpop.f32.mrb[0].mxu0
        %v3215 = vadd.f32 %v2394, %v3214
        %v3216 = vpop.f32.mrb[0].mxu0
        %v3217 = vadd.f32 %v2398, %v3216
        %3218 = vdwg.mxu0
        %v3219 = vmul.f32 %v3082, 1.702
        %v3220 = vmul.f32 %v3084, 1.702
        %v3221 = vmul.f32 %v3125, 1.702
        %v3222 = vmul.f32 %v3127, 1.702
        %v3223 = vmul.f32 %v3168, 1.702
        %v3224 = vmul.f32 %v3170, 1.702
        %v3225 = vmul.f32 %v3211, 1.702
        %v3226 = vmul.f32 %v3213, 1.702
        %v3227 = vmul.f32 %v3086, 1.702
        %v3228 = vmul.f32 %v3088, 1.702
        %v3229 = vmul.f32 %v3129, 1.702
        %v3230 = vmul.f32 %v3131, 1.702
        %v3231 = vmul.f32 %v3172, 1.702
        %v3232 = vmul.f32 %v3174, 1.702
        %v3233 = vmul.f32 %v3215, 1.702
        %v3234 = vmul.f32 %v3217, 1.702
        %v3235 = vxor.u32 %v3219, 2147483648
        %v3236 = vxor.u32 %v3220, 2147483648
        %v3237 = vxor.u32 %v3221, 2147483648
        %v3238 = vxor.u32 %v3222, 2147483648
        %v3239 = vxor.u32 %v3223, 2147483648
        %v3240 = vxor.u32 %v3224, 2147483648
        %v3241 = vxor.u32 %v3225, 2147483648
        %v3242 = vxor.u32 %v3226, 2147483648
        %v3243 = vxor.u32 %v3227, 2147483648
        %v3244 = vxor.u32 %v3228, 2147483648
        %v3245 = vxor.u32 %v3229, 2147483648
        %v3246 = vxor.u32 %v3230, 2147483648
        %v3247 = vxor.u32 %v3231, 2147483648
        %v3248 = vxor.u32 %v3232, 2147483648
        %v3249 = vxor.u32 %v3233, 2147483648
        %v3250 = vxor.u32 %v3234, 2147483648
        %v3251 = vmul.f32 %v3235, 1.442695
        %v3252 = vpow.pop %v3251
        %v3253 = vmul.f32 %v3236, 1.442695
        %v3254 = vpow.pop %v3253
        %v3255 = vmul.f32 %v3237, 1.442695
        %v3256 = vpow.pop %v3255
        %v3257 = vmul.f32 %v3238, 1.442695
        %v3258 = vpow.pop %v3257
        %v3259 = vmul.f32 %v3239, 1.442695
        %v3260 = vpow.pop %v3259
        %v3261 = vmul.f32 %v3240, 1.442695
        %v3262 = vpow.pop %v3261
        %v3263 = vmul.f32 %v3241, 1.442695
        %v3264 = vpow.pop %v3263
        %v3265 = vmul.f32 %v3242, 1.442695
        %v3266 = vpow.pop %v3265
        %v3267 = vmul.f32 %v3243, 1.442695
        %v3268 = vpow.pop %v3267
        %v3269 = vmul.f32 %v3244, 1.442695
        %v3270 = vpow.pop %v3269
        %v3271 = vmul.f32 %v3245, 1.442695
        %v3272 = vpow.pop %v3271
        %v3273 = vmul.f32 %v3246, 1.442695
        %v3274 = vpow.pop %v3273
        %v3275 = vmul.f32 %v3247, 1.442695
        %v3276 = vpow.pop %v3275
        %v3277 = vmul.f32 %v3248, 1.442695
        %v3278 = vpow.pop %v3277
        %v3279 = vmul.f32 %v3249, 1.442695
        %v3280 = vpow.pop %v3279
        %v3281 = vmul.f32 %v3250, 1.442695
        %v3282 = vpow.pop %v3281
        %v3283 = vadd.f32 %v3252, 1.0
        %v3284 = vadd.f32 %v3254, 1.0
        %v3285 = vadd.f32 %v3256, 1.0
        %v3286 = vadd.f32 %v3258, 1.0
        %v3287 = vadd.f32 %v3260, 1.0
        %v3288 = vadd.f32 %v3262, 1.0
        %v3289 = vadd.f32 %v3264, 1.0
        %v3290 = vadd.f32 %v3266, 1.0
        %v3291 = vadd.f32 %v3268, 1.0
        %v3292 = vadd.f32 %v3270, 1.0
        %v3293 = vadd.f32 %v3272, 1.0
        %v3294 = vadd.f32 %v3274, 1.0
        %v3295 = vadd.f32 %v3276, 1.0
        %v3296 = vadd.f32 %v3278, 1.0
        %v3297 = vadd.f32 %v3280, 1.0
        %v3298 = vadd.f32 %v3282, 1.0
        %v3299 = vrcp.pop %v3283
        %v3300 = vmul.f32 1.0, %v3299
        %v3301 = vrcp.pop %v3284
        %v3302 = vmul.f32 1.0, %v3301
        %v3303 = vrcp.pop %v3285
        %v3304 = vmul.f32 1.0, %v3303
        %v3305 = vrcp.pop %v3286
        %v3306 = vmul.f32 1.0, %v3305
        %v3307 = vrcp.pop %v3287
        %v3308 = vmul.f32 1.0, %v3307
        %v3309 = vrcp.pop %v3288
        %v3310 = vmul.f32 1.0, %v3309
        %v3311 = vrcp.pop %v3289
        %v3312 = vmul.f32 1.0, %v3311
        %v3313 = vrcp.pop %v3290
        %v3314 = vmul.f32 1.0, %v3313
        %v3315 = vrcp.pop %v3291
        %v3316 = vmul.f32 1.0, %v3315
        %v3317 = vrcp.pop %v3292
        %v3318 = vmul.f32 1.0, %v3317
        %v3319 = vrcp.pop %v3293
        %v3320 = vmul.f32 1.0, %v3319
        %v3321 = vrcp.pop %v3294
        %v3322 = vmul.f32 1.0, %v3321
        %v3323 = vrcp.pop %v3295
        %v3324 = vmul.f32 1.0, %v3323
        %v3325 = vrcp.pop %v3296
        %v3326 = vmul.f32 1.0, %v3325
        %v3327 = vrcp.pop %v3297
        %v3328 = vmul.f32 1.0, %v3327
        %v3329 = vrcp.pop %v3298
        %v3330 = vmul.f32 1.0, %v3329
        %v3331 = vmul.f32 %v3082, %v3300
        %v3332 = vmul.f32 %v3084, %v3302
        %v3333 = vmul.f32 %v3125, %v3304
        %v3334 = vmul.f32 %v3127, %v3306
        %v3335 = vmul.f32 %v3168, %v3308
        %v3336 = vmul.f32 %v3170, %v3310
        %v3337 = vmul.f32 %v3211, %v3312
        %v3338 = vmul.f32 %v3213, %v3314
        %v3339 = vmul.f32 %v3086, %v3316
        %v3340 = vmul.f32 %v3088, %v3318
        %v3341 = vmul.f32 %v3129, %v3320
        %v3342 = vmul.f32 %v3131, %v3322
        %v3343 = vmul.f32 %v3172, %v3324
        %v3344 = vmul.f32 %v3174, %v3326
        %v3345 = vmul.f32 %v3215, %v3328
        %v3346 = vmul.f32 %v3217, %v3330
        %v3347 = vpack.c.bf16 %v3339, %v3331
        %v3348 = vpack.c.bf16 %v3340, %v3332
        %v3349 = vpack.c.bf16 %v3341, %v3333
        %v3350 = vpack.c.bf16 %v3342, %v3334
        %v3351 = vpack.c.bf16 %v3343, %v3335
        %v3352 = vpack.c.bf16 %v3344, %v3336
        %v3353 = vpack.c.bf16 %v3345, %v3337
        %v3354 = vpack.c.bf16 %v3346, %v3338
        %v3355 = vld [vmem:[%s557] sm:$0xff]
        %v3356 = vld [vmem:[%s557 + $0x8] sm:$0xff]
        %v3357 = vld [vmem:[%s557 + $0x10] sm:$0xff]
        %v3358 = vld [vmem:[%s557 + $0x18] sm:$0xff]
        %v3359 = vld [vmem:[%s557 + $0x20] sm:$0xff]
        %v3360 = vld [vmem:[%s557 + $0x28] sm:$0xff]
        %v3361 = vld [vmem:[%s557 + $0x30] sm:$0xff]
        %v3362 = vld [vmem:[%s557 + $0x38] sm:$0xff]
        %v3363 = vld [vmem:[%s557 + $0x40] sm:$0xff]
        %v3364 = vld [vmem:[%s557 + $0x48] sm:$0xff]
        %v3365 = vld [vmem:[%s557 + $0x50] sm:$0xff]
        %v3366 = vld [vmem:[%s557 + $0x58] sm:$0xff]
        %v3367 = vld [vmem:[%s557 + $0x60] sm:$0xff]
        %v3368 = vld [vmem:[%s557 + $0x68] sm:$0xff]
        %v3369 = vld [vmem:[%s557 + $0x70] sm:$0xff]
        %v3370 = vld [vmem:[%s557 + $0x78] sm:$0xff]
        %v3371 = vld [vmem:[%s557 + $0x80] sm:$0xff]
        %v3372 = vld [vmem:[%s557 + $0x88] sm:$0xff]
        %v3373 = vld [vmem:[%s557 + $0x90] sm:$0xff]
        %v3374 = vld [vmem:[%s557 + $0x98] sm:$0xff]
        %v3375 = vld [vmem:[%s557 + $0xa0] sm:$0xff]
        %v3376 = vld [vmem:[%s557 + $0xa8] sm:$0xff]
        %v3377 = vld [vmem:[%s557 + $0xb0] sm:$0xff]
        %v3378 = vld [vmem:[%s557 + $0xb8] sm:$0xff]
        %v3379 = vld [vmem:[%s557 + $0xc0] sm:$0xff]
        %v3380 = vld [vmem:[%s557 + $0xc8] sm:$0xff]
        %v3381 = vld [vmem:[%s557 + $0xd0] sm:$0xff]
        %v3382 = vld [vmem:[%s557 + $0xd8] sm:$0xff]
        %v3383 = vld [vmem:[%s557 + $0xe0] sm:$0xff]
        %v3384 = vld [vmem:[%s557 + $0xe8] sm:$0xff]
        %v3385 = vld [vmem:[%s557 + $0xf0] sm:$0xff]
        %v3386 = vld [vmem:[%s557 + $0xf8] sm:$0xff]
        %v3387 = vld [vmem:[%s557 + $0x100] sm:$0xff]
        %v3388 = vld [vmem:[%s557 + $0x108] sm:$0xff]
        %v3389 = vld [vmem:[%s557 + $0x110] sm:$0xff]
        %v3390 = vld [vmem:[%s557 + $0x118] sm:$0xff]
        %v3391 = vld [vmem:[%s557 + $0x120] sm:$0xff]
        %v3392 = vld [vmem:[%s557 + $0x128] sm:$0xff]
        %v3393 = vld [vmem:[%s557 + $0x130] sm:$0xff]
        %v3394 = vld [vmem:[%s557 + $0x138] sm:$0xff]
        %v3395 = vld [vmem:[%s557 + $0x140] sm:$0xff]
        %v3396 = vld [vmem:[%s557 + $0x148] sm:$0xff]
        %v3397 = vld [vmem:[%s557 + $0x150] sm:$0xff]
        %v3398 = vld [vmem:[%s557 + $0x158] sm:$0xff]
        %v3399 = vld [vmem:[%s557 + $0x160] sm:$0xff]
        %v3400 = vld [vmem:[%s557 + $0x168] sm:$0xff]
        %v3401 = vld [vmem:[%s557 + $0x170] sm:$0xff]
        %v3402 = vld [vmem:[%s557 + $0x178] sm:$0xff]
        %v3403 = vld [vmem:[%s557 + $0x180] sm:$0xff]
        %v3404 = vld [vmem:[%s557 + $0x188] sm:$0xff]
        %v3405 = vld [vmem:[%s557 + $0x190] sm:$0xff]
        %v3406 = vld [vmem:[%s557 + $0x198] sm:$0xff]
        %v3407 = vld [vmem:[%s557 + $0x1a0] sm:$0xff]
        %v3408 = vld [vmem:[%s557 + $0x1a8] sm:$0xff]
        %v3409 = vld [vmem:[%s557 + $0x1b0] sm:$0xff]
        %v3410 = vld [vmem:[%s557 + $0x1b8] sm:$0xff]
        %v3411 = vld [vmem:[%s557 + $0x1c0] sm:$0xff]
        %v3412 = vld [vmem:[%s557 + $0x1c8] sm:$0xff]
        %v3413 = vld [vmem:[%s557 + $0x1d0] sm:$0xff]
        %v3414 = vld [vmem:[%s557 + $0x1d8] sm:$0xff]
        %v3415 = vld [vmem:[%s557 + $0x1e0] sm:$0xff]
        %v3416 = vld [vmem:[%s557 + $0x1e8] sm:$0xff]
        %v3417 = vld [vmem:[%s557 + $0x1f0] sm:$0xff]
        %v3418 = vld [vmem:[%s557 + $0x1f8] sm:$0xff]
        %v3419 = vld [vmem:[%s557 + $0x200] sm:$0xff]
        %v3420 = vld [vmem:[%s557 + $0x208] sm:$0xff]
        %v3421 = vld [vmem:[%s557 + $0x210] sm:$0xff]
        %v3422 = vld [vmem:[%s557 + $0x218] sm:$0xff]
        %v3423 = vld [vmem:[%s557 + $0x220] sm:$0xff]
        %v3424 = vld [vmem:[%s557 + $0x228] sm:$0xff]
        %v3425 = vld [vmem:[%s557 + $0x230] sm:$0xff]
        %v3426 = vld [vmem:[%s557 + $0x238] sm:$0xff]
        %v3427 = vld [vmem:[%s557 + $0x240] sm:$0xff]
        %v3428 = vld [vmem:[%s557 + $0x248] sm:$0xff]
        %v3429 = vld [vmem:[%s557 + $0x250] sm:$0xff]
        %v3430 = vld [vmem:[%s557 + $0x258] sm:$0xff]
        %v3431 = vld [vmem:[%s557 + $0x260] sm:$0xff]
        %v3432 = vld [vmem:[%s557 + $0x268] sm:$0xff]
        %v3433 = vld [vmem:[%s557 + $0x270] sm:$0xff]
        %v3434 = vld [vmem:[%s557 + $0x278] sm:$0xff]
        %v3435 = vld [vmem:[%s557 + $0x280] sm:$0xff]
        %v3436 = vld [vmem:[%s557 + $0x288] sm:$0xff]
        %v3437 = vld [vmem:[%s557 + $0x290] sm:$0xff]
        %v3438 = vld [vmem:[%s557 + $0x298] sm:$0xff]
        %v3439 = vld [vmem:[%s557 + $0x2a0] sm:$0xff]
        %v3440 = vld [vmem:[%s557 + $0x2a8] sm:$0xff]
        %v3441 = vld [vmem:[%s557 + $0x2b0] sm:$0xff]
        %v3442 = vld [vmem:[%s557 + $0x2b8] sm:$0xff]
        %v3443 = vld [vmem:[%s557 + $0x2c0] sm:$0xff]
        %v3444 = vld [vmem:[%s557 + $0x2c8] sm:$0xff]
        %v3445 = vld [vmem:[%s557 + $0x2d0] sm:$0xff]
        %v3446 = vld [vmem:[%s557 + $0x2d8] sm:$0xff]
        %v3447 = vld [vmem:[%s557 + $0x2e0] sm:$0xff]
        %v3448 = vld [vmem:[%s557 + $0x2e8] sm:$0xff]
        %v3449 = vld [vmem:[%s557 + $0x2f0] sm:$0xff]
        %v3450 = vld [vmem:[%s557 + $0x2f8] sm:$0xff]
        %v3451 = vld [vmem:[%s557 + $0x300] sm:$0xff]
        %v3452 = vld [vmem:[%s557 + $0x308] sm:$0xff]
        %v3453 = vld [vmem:[%s557 + $0x310] sm:$0xff]
        %v3454 = vld [vmem:[%s557 + $0x318] sm:$0xff]
        %v3455 = vld [vmem:[%s557 + $0x320] sm:$0xff]
        %v3456 = vld [vmem:[%s557 + $0x328] sm:$0xff]
        %v3457 = vld [vmem:[%s557 + $0x330] sm:$0xff]
        %v3458 = vld [vmem:[%s557 + $0x338] sm:$0xff]
        %v3459 = vld [vmem:[%s557 + $0x340] sm:$0xff]
        %v3460 = vld [vmem:[%s557 + $0x348] sm:$0xff]
        %v3461 = vld [vmem:[%s557 + $0x350] sm:$0xff]
        %v3462 = vld [vmem:[%s557 + $0x358] sm:$0xff]
        %v3463 = vld [vmem:[%s557 + $0x360] sm:$0xff]
        %v3464 = vld [vmem:[%s557 + $0x368] sm:$0xff]
        %v3465 = vld [vmem:[%s557 + $0x370] sm:$0xff]
        %v3466 = vld [vmem:[%s557 + $0x378] sm:$0xff]
        %v3467 = vld [vmem:[%s557 + $0x380] sm:$0xff]
        %v3468 = vld [vmem:[%s557 + $0x388] sm:$0xff]
        %v3469 = vld [vmem:[%s557 + $0x390] sm:$0xff]
        %v3470 = vld [vmem:[%s557 + $0x398] sm:$0xff]
        %v3471 = vld [vmem:[%s557 + $0x3a0] sm:$0xff]
        %v3472 = vld [vmem:[%s557 + $0x3a8] sm:$0xff]
        %v3473 = vld [vmem:[%s557 + $0x3b0] sm:$0xff]
        %v3474 = vld [vmem:[%s557 + $0x3b8] sm:$0xff]
        %v3475 = vld [vmem:[%s557 + $0x3c0] sm:$0xff]
        %v3476 = vld [vmem:[%s557 + $0x3c8] sm:$0xff]
        %v3477 = vld [vmem:[%s557 + $0x3d0] sm:$0xff]
        %v3478 = vld [vmem:[%s557 + $0x3d8] sm:$0xff]
        %v3479 = vld [vmem:[%s557 + $0x3e0] sm:$0xff]
        %v3480 = vld [vmem:[%s557 + $0x3e8] sm:$0xff]
        %v3481 = vld [vmem:[%s557 + $0x3f0] sm:$0xff]
        %v3482 = vld [vmem:[%s557 + $0x3f8] sm:$0xff]
        %v3611 = vunpack.c.l.b16 %v3355
        %v3612 = vunpack.c.h.b16 %v3355
        %v3613 = vunpack.c.l.b16 %v3356
        %v3614 = vunpack.c.h.b16 %v3356
        %v3615 = vunpack.c.l.b16 %v3357
        %v3616 = vunpack.c.h.b16 %v3357
        %v3617 = vunpack.c.l.b16 %v3358
        %v3618 = vunpack.c.h.b16 %v3358
        %v3619 = vunpack.c.l.b16 %v3359
        %v3620 = vunpack.c.h.b16 %v3359
        %v3621 = vunpack.c.l.b16 %v3360
        %v3622 = vunpack.c.h.b16 %v3360
        %v3623 = vunpack.c.l.b16 %v3361
        %v3624 = vunpack.c.h.b16 %v3361
        %v3625 = vunpack.c.l.b16 %v3362
        %v3626 = vunpack.c.h.b16 %v3362
        %v3627 = vunpack.c.l.b16 %v3363
        %v3628 = vunpack.c.h.b16 %v3363
        %v3629 = vunpack.c.l.b16 %v3364
        %v3630 = vunpack.c.h.b16 %v3364
        %v3631 = vunpack.c.l.b16 %v3365
        %v3632 = vunpack.c.h.b16 %v3365
        %v3633 = vunpack.c.l.b16 %v3366
        %v3634 = vunpack.c.h.b16 %v3366
        %v3635 = vunpack.c.l.b16 %v3367
        %v3636 = vunpack.c.h.b16 %v3367
        %v3637 = vunpack.c.l.b16 %v3368
        %v3638 = vunpack.c.h.b16 %v3368
        %v3639 = vunpack.c.l.b16 %v3369
        %v3640 = vunpack.c.h.b16 %v3369
        %v3641 = vunpack.c.l.b16 %v3370
        %v3642 = vunpack.c.h.b16 %v3370
        %v3643 = vunpack.c.l.b16 %v3371
        %v3644 = vunpack.c.h.b16 %v3371
        %v3645 = vunpack.c.l.b16 %v3372
        %v3646 = vunpack.c.h.b16 %v3372
        %v3647 = vunpack.c.l.b16 %v3373
        %v3648 = vunpack.c.h.b16 %v3373
        %v3649 = vunpack.c.l.b16 %v3374
        %v3650 = vunpack.c.h.b16 %v3374
        %v3651 = vunpack.c.l.b16 %v3375
        %v3652 = vunpack.c.h.b16 %v3375
        %v3653 = vunpack.c.l.b16 %v3376
        %v3654 = vunpack.c.h.b16 %v3376
        %v3655 = vunpack.c.l.b16 %v3377
        %v3656 = vunpack.c.h.b16 %v3377
        %v3657 = vunpack.c.l.b16 %v3378
        %v3658 = vunpack.c.h.b16 %v3378
        %v3659 = vunpack.c.l.b16 %v3379
        %v3660 = vunpack.c.h.b16 %v3379
        %v3661 = vunpack.c.l.b16 %v3380
        %v3662 = vunpack.c.h.b16 %v3380
        %v3663 = vunpack.c.l.b16 %v3381
        %v3664 = vunpack.c.h.b16 %v3381
        %v3665 = vunpack.c.l.b16 %v3382
        %v3666 = vunpack.c.h.b16 %v3382
        %v3667 = vunpack.c.l.b16 %v3383
        %v3668 = vunpack.c.h.b16 %v3383
        %v3669 = vunpack.c.l.b16 %v3384
        %v3670 = vunpack.c.h.b16 %v3384
        %v3671 = vunpack.c.l.b16 %v3385
        %v3672 = vunpack.c.h.b16 %v3385
        %v3673 = vunpack.c.l.b16 %v3386
        %v3674 = vunpack.c.h.b16 %v3386
        %v3675 = vunpack.c.l.b16 %v3387
        %v3676 = vunpack.c.h.b16 %v3387
        %v3677 = vunpack.c.l.b16 %v3388
        %v3678 = vunpack.c.h.b16 %v3388
        %v3679 = vunpack.c.l.b16 %v3389
        %v3680 = vunpack.c.h.b16 %v3389
        %v3681 = vunpack.c.l.b16 %v3390
        %v3682 = vunpack.c.h.b16 %v3390
        %v3683 = vunpack.c.l.b16 %v3391
        %v3684 = vunpack.c.h.b16 %v3391
        %v3685 = vunpack.c.l.b16 %v3392
        %v3686 = vunpack.c.h.b16 %v3392
        %v3687 = vunpack.c.l.b16 %v3393
        %v3688 = vunpack.c.h.b16 %v3393
        %v3689 = vunpack.c.l.b16 %v3394
        %v3690 = vunpack.c.h.b16 %v3394
        %v3691 = vunpack.c.l.b16 %v3395
        %v3692 = vunpack.c.h.b16 %v3395
        %v3693 = vunpack.c.l.b16 %v3396
        %v3694 = vunpack.c.h.b16 %v3396
        %v3695 = vunpack.c.l.b16 %v3397
        %v3696 = vunpack.c.h.b16 %v3397
        %v3697 = vunpack.c.l.b16 %v3398
        %v3698 = vunpack.c.h.b16 %v3398
        %v3699 = vunpack.c.l.b16 %v3399
        %v3700 = vunpack.c.h.b16 %v3399
        %v3701 = vunpack.c.l.b16 %v3400
        %v3702 = vunpack.c.h.b16 %v3400
        %v3703 = vunpack.c.l.b16 %v3401
        %v3704 = vunpack.c.h.b16 %v3401
        %v3705 = vunpack.c.l.b16 %v3402
        %v3706 = vunpack.c.h.b16 %v3402
        %v3707 = vunpack.c.l.b16 %v3403
        %v3708 = vunpack.c.h.b16 %v3403
        %v3709 = vunpack.c.l.b16 %v3404
        %v3710 = vunpack.c.h.b16 %v3404
        %v3711 = vunpack.c.l.b16 %v3405
        %v3712 = vunpack.c.h.b16 %v3405
        %v3713 = vunpack.c.l.b16 %v3406
        %v3714 = vunpack.c.h.b16 %v3406
        %v3715 = vunpack.c.l.b16 %v3407
        %v3716 = vunpack.c.h.b16 %v3407
        %v3717 = vunpack.c.l.b16 %v3408
        %v3718 = vunpack.c.h.b16 %v3408
        %v3719 = vunpack.c.l.b16 %v3409
        %v3720 = vunpack.c.h.b16 %v3409
        %v3721 = vunpack.c.l.b16 %v3410
        %v3722 = vunpack.c.h.b16 %v3410
        %v3723 = vunpack.c.l.b16 %v3411
        %v3724 = vunpack.c.h.b16 %v3411
        %v3725 = vunpack.c.l.b16 %v3412
        %v3726 = vunpack.c.h.b16 %v3412
        %v3727 = vunpack.c.l.b16 %v3413
        %v3728 = vunpack.c.h.b16 %v3413
        %v3729 = vunpack.c.l.b16 %v3414
        %v3730 = vunpack.c.h.b16 %v3414
        %v3731 = vunpack.c.l.b16 %v3415
        %v3732 = vunpack.c.h.b16 %v3415
        %v3733 = vunpack.c.l.b16 %v3416
        %v3734 = vunpack.c.h.b16 %v3416
        %v3735 = vunpack.c.l.b16 %v3417
        %v3736 = vunpack.c.h.b16 %v3417
        %v3737 = vunpack.c.l.b16 %v3418
        %v3738 = vunpack.c.h.b16 %v3418
        %v3739 = vunpack.c.l.b16 %v3419
        %v3740 = vunpack.c.h.b16 %v3419
        %v3741 = vunpack.c.l.b16 %v3420
        %v3742 = vunpack.c.h.b16 %v3420
        %v3743 = vunpack.c.l.b16 %v3421
        %v3744 = vunpack.c.h.b16 %v3421
        %v3745 = vunpack.c.l.b16 %v3422
        %v3746 = vunpack.c.h.b16 %v3422
        %v3747 = vunpack.c.l.b16 %v3423
        %v3748 = vunpack.c.h.b16 %v3423
        %v3749 = vunpack.c.l.b16 %v3424
        %v3750 = vunpack.c.h.b16 %v3424
        %v3751 = vunpack.c.l.b16 %v3425
        %v3752 = vunpack.c.h.b16 %v3425
        %v3753 = vunpack.c.l.b16 %v3426
        %v3754 = vunpack.c.h.b16 %v3426
        %v3755 = vunpack.c.l.b16 %v3427
        %v3756 = vunpack.c.h.b16 %v3427
        %v3757 = vunpack.c.l.b16 %v3428
        %v3758 = vunpack.c.h.b16 %v3428
        %v3759 = vunpack.c.l.b16 %v3429
        %v3760 = vunpack.c.h.b16 %v3429
        %v3761 = vunpack.c.l.b16 %v3430
        %v3762 = vunpack.c.h.b16 %v3430
        %v3763 = vunpack.c.l.b16 %v3431
        %v3764 = vunpack.c.h.b16 %v3431
        %v3765 = vunpack.c.l.b16 %v3432
        %v3766 = vunpack.c.h.b16 %v3432
        %v3767 = vunpack.c.l.b16 %v3433
        %v3768 = vunpack.c.h.b16 %v3433
        %v3769 = vunpack.c.l.b16 %v3434
        %v3770 = vunpack.c.h.b16 %v3434
        %v3771 = vunpack.c.l.b16 %v3435
        %v3772 = vunpack.c.h.b16 %v3435
        %v3773 = vunpack.c.l.b16 %v3436
        %v3774 = vunpack.c.h.b16 %v3436
        %v3775 = vunpack.c.l.b16 %v3437
        %v3776 = vunpack.c.h.b16 %v3437
        %v3777 = vunpack.c.l.b16 %v3438
        %v3778 = vunpack.c.h.b16 %v3438
        %v3779 = vunpack.c.l.b16 %v3439
        %v3780 = vunpack.c.h.b16 %v3439
        %v3781 = vunpack.c.l.b16 %v3440
        %v3782 = vunpack.c.h.b16 %v3440
        %v3783 = vunpack.c.l.b16 %v3441
        %v3784 = vunpack.c.h.b16 %v3441
        %v3785 = vunpack.c.l.b16 %v3442
        %v3786 = vunpack.c.h.b16 %v3442
        %v3787 = vunpack.c.l.b16 %v3443
        %v3788 = vunpack.c.h.b16 %v3443
        %v3789 = vunpack.c.l.b16 %v3444
        %v3790 = vunpack.c.h.b16 %v3444
        %v3791 = vunpack.c.l.b16 %v3445
        %v3792 = vunpack.c.h.b16 %v3445
        %v3793 = vunpack.c.l.b16 %v3446
        %v3794 = vunpack.c.h.b16 %v3446
        %v3795 = vunpack.c.l.b16 %v3447
        %v3796 = vunpack.c.h.b16 %v3447
        %v3797 = vunpack.c.l.b16 %v3448
        %v3798 = vunpack.c.h.b16 %v3448
        %v3799 = vunpack.c.l.b16 %v3449
        %v3800 = vunpack.c.h.b16 %v3449
        %v3801 = vunpack.c.l.b16 %v3450
        %v3802 = vunpack.c.h.b16 %v3450
        %v3803 = vunpack.c.l.b16 %v3451
        %v3804 = vunpack.c.h.b16 %v3451
        %v3805 = vunpack.c.l.b16 %v3452
        %v3806 = vunpack.c.h.b16 %v3452
        %v3807 = vunpack.c.l.b16 %v3453
        %v3808 = vunpack.c.h.b16 %v3453
        %v3809 = vunpack.c.l.b16 %v3454
        %v3810 = vunpack.c.h.b16 %v3454
        %v3811 = vunpack.c.l.b16 %v3455
        %v3812 = vunpack.c.h.b16 %v3455
        %v3813 = vunpack.c.l.b16 %v3456
        %v3814 = vunpack.c.h.b16 %v3456
        %v3815 = vunpack.c.l.b16 %v3457
        %v3816 = vunpack.c.h.b16 %v3457
        %v3817 = vunpack.c.l.b16 %v3458
        %v3818 = vunpack.c.h.b16 %v3458
        %v3819 = vunpack.c.l.b16 %v3459
        %v3820 = vunpack.c.h.b16 %v3459
        %v3821 = vunpack.c.l.b16 %v3460
        %v3822 = vunpack.c.h.b16 %v3460
        %v3823 = vunpack.c.l.b16 %v3461
        %v3824 = vunpack.c.h.b16 %v3461
        %v3825 = vunpack.c.l.b16 %v3462
        %v3826 = vunpack.c.h.b16 %v3462
        %v3827 = vunpack.c.l.b16 %v3463
        %v3828 = vunpack.c.h.b16 %v3463
        %v3829 = vunpack.c.l.b16 %v3464
        %v3830 = vunpack.c.h.b16 %v3464
        %v3831 = vunpack.c.l.b16 %v3465
        %v3832 = vunpack.c.h.b16 %v3465
        %v3833 = vunpack.c.l.b16 %v3466
        %v3834 = vunpack.c.h.b16 %v3466
        %v3835 = vunpack.c.l.b16 %v3467
        %v3836 = vunpack.c.h.b16 %v3467
        %v3837 = vunpack.c.l.b16 %v3468
        %v3838 = vunpack.c.h.b16 %v3468
        %v3839 = vunpack.c.l.b16 %v3469
        %v3840 = vunpack.c.h.b16 %v3469
        %v3841 = vunpack.c.l.b16 %v3470
        %v3842 = vunpack.c.h.b16 %v3470
        %v3843 = vunpack.c.l.b16 %v3471
        %v3844 = vunpack.c.h.b16 %v3471
        %v3845 = vunpack.c.l.b16 %v3472
        %v3846 = vunpack.c.h.b16 %v3472
        %v3847 = vunpack.c.l.b16 %v3473
        %v3848 = vunpack.c.h.b16 %v3473
        %v3849 = vunpack.c.l.b16 %v3474
        %v3850 = vunpack.c.h.b16 %v3474
        %v3851 = vunpack.c.l.b16 %v3475
        %v3852 = vunpack.c.h.b16 %v3475
        %v3853 = vunpack.c.l.b16 %v3476
        %v3854 = vunpack.c.h.b16 %v3476
        %v3855 = vunpack.c.l.b16 %v3477
        %v3856 = vunpack.c.h.b16 %v3477
        %v3857 = vunpack.c.l.b16 %v3478
        %v3858 = vunpack.c.h.b16 %v3478
        %v3859 = vunpack.c.l.b16 %v3479
        %v3860 = vunpack.c.h.b16 %v3479
        %v3861 = vunpack.c.l.b16 %v3480
        %v3862 = vunpack.c.h.b16 %v3480
        %v3863 = vunpack.c.l.b16 %v3481
        %v3864 = vunpack.c.h.b16 %v3481
        %v3865 = vunpack.c.l.b16 %v3482
        %v3866 = vunpack.c.h.b16 %v3482
        %v3867 = vpack.c.b16 %v3613, %v3611
        %v3868 = vpack.c.b16 %v3614, %v3612
        %v3869 = vpack.c.b16 %v3617, %v3615
        %v3870 = vpack.c.b16 %v3618, %v3616
        %v3871 = vpack.c.b16 %v3621, %v3619
        %v3872 = vpack.c.b16 %v3622, %v3620
        %v3873 = vpack.c.b16 %v3625, %v3623
        %v3874 = vpack.c.b16 %v3626, %v3624
        %v3875 = vpack.c.b16 %v3629, %v3627
        %v3876 = vpack.c.b16 %v3630, %v3628
        %v3877 = vpack.c.b16 %v3633, %v3631
        %v3878 = vpack.c.b16 %v3634, %v3632
        %v3879 = vpack.c.b16 %v3637, %v3635
        %v3880 = vpack.c.b16 %v3638, %v3636
        %v3881 = vpack.c.b16 %v3641, %v3639
        %v3882 = vpack.c.b16 %v3642, %v3640
        %v3883 = vpack.c.b16 %v3645, %v3643
        %v3884 = vpack.c.b16 %v3646, %v3644
        %v3885 = vpack.c.b16 %v3649, %v3647
        %v3886 = vpack.c.b16 %v3650, %v3648
        %v3887 = vpack.c.b16 %v3653, %v3651
        %v3888 = vpack.c.b16 %v3654, %v3652
        %v3889 = vpack.c.b16 %v3657, %v3655
        %v3890 = vpack.c.b16 %v3658, %v3656
        %v3891 = vpack.c.b16 %v3661, %v3659
        %v3892 = vpack.c.b16 %v3662, %v3660
        %v3893 = vpack.c.b16 %v3665, %v3663
        %v3894 = vpack.c.b16 %v3666, %v3664
        %v3895 = vpack.c.b16 %v3669, %v3667
        %v3896 = vpack.c.b16 %v3670, %v3668
        %v3897 = vpack.c.b16 %v3673, %v3671
        %v3898 = vpack.c.b16 %v3674, %v3672
        %v3899 = vpack.c.b16 %v3677, %v3675
        %v3900 = vpack.c.b16 %v3678, %v3676
        %v3901 = vpack.c.b16 %v3681, %v3679
        %v3902 = vpack.c.b16 %v3682, %v3680
        %v3903 = vpack.c.b16 %v3685, %v3683
        %v3904 = vpack.c.b16 %v3686, %v3684
        %v3905 = vpack.c.b16 %v3689, %v3687
        %v3906 = vpack.c.b16 %v3690, %v3688
        %v3907 = vpack.c.b16 %v3693, %v3691
        %v3908 = vpack.c.b16 %v3694, %v3692
        %v3909 = vpack.c.b16 %v3697, %v3695
        %v3910 = vpack.c.b16 %v3698, %v3696
        %v3911 = vpack.c.b16 %v3701, %v3699
        %v3912 = vpack.c.b16 %v3702, %v3700
        %v3913 = vpack.c.b16 %v3705, %v3703
        %v3914 = vpack.c.b16 %v3706, %v3704
        %v3915 = vpack.c.b16 %v3709, %v3707
        %v3916 = vpack.c.b16 %v3710, %v3708
        %v3917 = vpack.c.b16 %v3713, %v3711
        %v3918 = vpack.c.b16 %v3714, %v3712
        %v3919 = vpack.c.b16 %v3717, %v3715
        %v3920 = vpack.c.b16 %v3718, %v3716
        %v3921 = vpack.c.b16 %v3721, %v3719
        %v3922 = vpack.c.b16 %v3722, %v3720
        %v3923 = vpack.c.b16 %v3725, %v3723
        %v3924 = vpack.c.b16 %v3726, %v3724
        %v3925 = vpack.c.b16 %v3729, %v3727
        %v3926 = vpack.c.b16 %v3730, %v3728
        %v3927 = vpack.c.b16 %v3733, %v3731
        %v3928 = vpack.c.b16 %v3734, %v3732
        %v3929 = vpack.c.b16 %v3737, %v3735
        %v3930 = vpack.c.b16 %v3738, %v3736
        %v3931 = vpack.c.b16 %v3741, %v3739
        %v3932 = vpack.c.b16 %v3742, %v3740
        %v3933 = vpack.c.b16 %v3745, %v3743
        %v3934 = vpack.c.b16 %v3746, %v3744
        %v3935 = vpack.c.b16 %v3749, %v3747
        %v3936 = vpack.c.b16 %v3750, %v3748
        %v3937 = vpack.c.b16 %v3753, %v3751
        %v3938 = vpack.c.b16 %v3754, %v3752
        %v3939 = vpack.c.b16 %v3757, %v3755
        %v3940 = vpack.c.b16 %v3758, %v3756
        %v3941 = vpack.c.b16 %v3761, %v3759
        %v3942 = vpack.c.b16 %v3762, %v3760
        %v3943 = vpack.c.b16 %v3765, %v3763
        %v3944 = vpack.c.b16 %v3766, %v3764
        %v3945 = vpack.c.b16 %v3769, %v3767
        %v3946 = vpack.c.b16 %v3770, %v3768
        %v3947 = vpack.c.b16 %v3773, %v3771
        %v3948 = vpack.c.b16 %v3774, %v3772
        %v3949 = vpack.c.b16 %v3777, %v3775
        %v3950 = vpack.c.b16 %v3778, %v3776
        %v3951 = vpack.c.b16 %v3781, %v3779
        %v3952 = vpack.c.b16 %v3782, %v3780
        %v3953 = vpack.c.b16 %v3785, %v3783
        %v3954 = vpack.c.b16 %v3786, %v3784
        %v3955 = vpack.c.b16 %v3789, %v3787
        %v3956 = vpack.c.b16 %v3790, %v3788
        %v3957 = vpack.c.b16 %v3793, %v3791
        %v3958 = vpack.c.b16 %v3794, %v3792
        %v3959 = vpack.c.b16 %v3797, %v3795
        %v3960 = vpack.c.b16 %v3798, %v3796
        %v3961 = vpack.c.b16 %v3801, %v3799
        %v3962 = vpack.c.b16 %v3802, %v3800
        %v3963 = vpack.c.b16 %v3805, %v3803
        %v3964 = vpack.c.b16 %v3806, %v3804
        %v3965 = vpack.c.b16 %v3809, %v3807
        %v3966 = vpack.c.b16 %v3810, %v3808
        %v3967 = vpack.c.b16 %v3813, %v3811
        %v3968 = vpack.c.b16 %v3814, %v3812
        %v3969 = vpack.c.b16 %v3817, %v3815
        %v3970 = vpack.c.b16 %v3818, %v3816
        %v3971 = vpack.c.b16 %v3821, %v3819
        %v3972 = vpack.c.b16 %v3822, %v3820
        %v3973 = vpack.c.b16 %v3825, %v3823
        %v3974 = vpack.c.b16 %v3826, %v3824
        %v3975 = vpack.c.b16 %v3829, %v3827
        %v3976 = vpack.c.b16 %v3830, %v3828
        %v3977 = vpack.c.b16 %v3833, %v3831
        %v3978 = vpack.c.b16 %v3834, %v3832
        %v3979 = vpack.c.b16 %v3837, %v3835
        %v3980 = vpack.c.b16 %v3838, %v3836
        %v3981 = vpack.c.b16 %v3841, %v3839
        %v3982 = vpack.c.b16 %v3842, %v3840
        %v3983 = vpack.c.b16 %v3845, %v3843
        %v3984 = vpack.c.b16 %v3846, %v3844
        %v3985 = vpack.c.b16 %v3849, %v3847
        %v3986 = vpack.c.b16 %v3850, %v3848
        %v3987 = vpack.c.b16 %v3853, %v3851
        %v3988 = vpack.c.b16 %v3854, %v3852
        %v3989 = vpack.c.b16 %v3857, %v3855
        %v3990 = vpack.c.b16 %v3858, %v3856
        %v3991 = vpack.c.b16 %v3861, %v3859
        %v3992 = vpack.c.b16 %v3862, %v3860
        %v3993 = vpack.c.b16 %v3865, %v3863
        %v3994 = vpack.c.b16 %v3866, %v3864
        %4123 = vmatprep.subr.bf16.mxu0 %v3868
        %4124 = vmatpush1.bf16.msra.mxu0 %v3867
        %4125 = vmatprep.subr.bf16.mxu0 %v3870
        %4126 = vmatpush1.bf16.msra.mxu0 %v3869
        %4127 = vmatprep.subr.bf16.mxu0 %v3872
        %4128 = vmatpush1.bf16.msra.mxu0 %v3871
        %4129 = vmatprep.subr.bf16.mxu0 %v3874
        %4130 = vmatpush1.bf16.msra.mxu0 %v3873
        %4131 = vmatprep.subr.bf16.mxu0 %v3876
        %4132 = vmatpush1.bf16.msra.mxu0 %v3875
        %4133 = vmatprep.subr.bf16.mxu0 %v3878
        %4134 = vmatpush1.bf16.msra.mxu0 %v3877
        %4135 = vmatprep.subr.bf16.mxu0 %v3880
        %4136 = vmatpush1.bf16.msra.mxu0 %v3879
        %4137 = vmatprep.subr.bf16.mxu0 %v3882
        %4138 = vmatpush1.bf16.msra.mxu0 %v3881
        %4139 = vmatprep.subr.bf16.mxu0 %v3884
        %4140 = vmatpush1.bf16.msra.mxu0 %v3883
        %4141 = vmatprep.subr.bf16.mxu0 %v3886
        %4142 = vmatpush1.bf16.msra.mxu0 %v3885
        %4143 = vmatprep.subr.bf16.mxu0 %v3888
        %4144 = vmatpush1.bf16.msra.mxu0 %v3887
        %4145 = vmatprep.subr.bf16.mxu0 %v3890
        %4146 = vmatpush1.bf16.msra.mxu0 %v3889
        %4147 = vmatprep.subr.bf16.mxu0 %v3892
        %4148 = vmatpush1.bf16.msra.mxu0 %v3891
        %4149 = vmatprep.subr.bf16.mxu0 %v3894
        %4150 = vmatpush1.bf16.msra.mxu0 %v3893
        %4151 = vmatprep.subr.bf16.mxu0 %v3896
        %4152 = vmatpush1.bf16.msra.mxu0 %v3895
        %4153 = vmatprep.subr.bf16.mxu0 %v3898
        %4154 = vmatpush1.bf16.msra.mxu0 %v3897
        %4155 = vmatprep.mubr.bf16.mxu0 %v3348
        %4156 = vmatmul.mubr.bf16.gmra.mrb[0].mxu0 %v3347
        %v4157 = vpop.f32.mrb[0].mxu0
        %v4158 = vadd.f32 0.0, %v4157
        %v4159 = vpop.f32.mrb[0].mxu0
        %v4160 = vadd.f32 0.0, %v4159
        %v4161 = vpop.f32.mrb[0].mxu0
        %v4162 = vadd.f32 0.0, %v4161
        %v4163 = vpop.f32.mrb[0].mxu0
        %v4164 = vadd.f32 0.0, %v4163
        %4165 = vdwg.mxu0
        %4166 = vmatprep.subr.bf16.mxu0 %v3900
        %4167 = vmatpush1.bf16.msra.mxu0 %v3899
        %4168 = vmatprep.subr.bf16.mxu0 %v3902
        %4169 = vmatpush1.bf16.msra.mxu0 %v3901
        %4170 = vmatprep.subr.bf16.mxu0 %v3904
        %4171 = vmatpush1.bf16.msra.mxu0 %v3903
        %4172 = vmatprep.subr.bf16.mxu0 %v3906
        %4173 = vmatpush1.bf16.msra.mxu0 %v3905
        %4174 = vmatprep.subr.bf16.mxu0 %v3908
        %4175 = vmatpush1.bf16.msra.mxu0 %v3907
        %4176 = vmatprep.subr.bf16.mxu0 %v3910
        %4177 = vmatpush1.bf16.msra.mxu0 %v3909
        %4178 = vmatprep.subr.bf16.mxu0 %v3912
        %4179 = vmatpush1.bf16.msra.mxu0 %v3911
        %4180 = vmatprep.subr.bf16.mxu0 %v3914
        %4181 = vmatpush1.bf16.msra.mxu0 %v3913
        %4182 = vmatprep.subr.bf16.mxu0 %v3916
        %4183 = vmatpush1.bf16.msra.mxu0 %v3915
        %4184 = vmatprep.subr.bf16.mxu0 %v3918
        %4185 = vmatpush1.bf16.msra.mxu0 %v3917
        %4186 = vmatprep.subr.bf16.mxu0 %v3920
        %4187 = vmatpush1.bf16.msra.mxu0 %v3919
        %4188 = vmatprep.subr.bf16.mxu0 %v3922
        %4189 = vmatpush1.bf16.msra.mxu0 %v3921
        %4190 = vmatprep.subr.bf16.mxu0 %v3924
        %4191 = vmatpush1.bf16.msra.mxu0 %v3923
        %4192 = vmatprep.subr.bf16.mxu0 %v3926
        %4193 = vmatpush1.bf16.msra.mxu0 %v3925
        %4194 = vmatprep.subr.bf16.mxu0 %v3928
        %4195 = vmatpush1.bf16.msra.mxu0 %v3927
        %4196 = vmatprep.subr.bf16.mxu0 %v3930
        %4197 = vmatpush1.bf16.msra.mxu0 %v3929
        %4198 = vmatprep.mubr.bf16.mxu0 %v3350
        %4199 = vmatmul.mubr.bf16.gmra.mrb[0].mxu0 %v3349
        %v4200 = vpop.f32.mrb[0].mxu0
        %v4201 = vadd.f32 %v4158, %v4200
        %v4202 = vpop.f32.mrb[0].mxu0
        %v4203 = vadd.f32 %v4160, %v4202
        %v4204 = vpop.f32.mrb[0].mxu0
        %v4205 = vadd.f32 %v4162, %v4204
        %v4206 = vpop.f32.mrb[0].mxu0
        %v4207 = vadd.f32 %v4164, %v4206
        %4208 = vdwg.mxu0
        %4209 = vmatprep.subr.bf16.mxu0 %v3932
        %4210 = vmatpush1.bf16.msra.mxu0 %v3931
        %4211 = vmatprep.subr.bf16.mxu0 %v3934
        %4212 = vmatpush1.bf16.msra.mxu0 %v3933
        %4213 = vmatprep.subr.bf16.mxu0 %v3936
        %4214 = vmatpush1.bf16.msra.mxu0 %v3935
        %4215 = vmatprep.subr.bf16.mxu0 %v3938
        %4216 = vmatpush1.bf16.msra.mxu0 %v3937
        %4217 = vmatprep.subr.bf16.mxu0 %v3940
        %4218 = vmatpush1.bf16.msra.mxu0 %v3939
        %4219 = vmatprep.subr.bf16.mxu0 %v3942
        %4220 = vmatpush1.bf16.msra.mxu0 %v3941
        %4221 = vmatprep.subr.bf16.mxu0 %v3944
        %4222 = vmatpush1.bf16.msra.mxu0 %v3943
        %4223 = vmatprep.subr.bf16.mxu0 %v3946
        %4224 = vmatpush1.bf16.msra.mxu0 %v3945
        %4225 = vmatprep.subr.bf16.mxu0 %v3948
        %4226 = vmatpush1.bf16.msra.mxu0 %v3947
        %4227 = vmatprep.subr.bf16.mxu0 %v3950
        %4228 = vmatpush1.bf16.msra.mxu0 %v3949
        %4229 = vmatprep.subr.bf16.mxu0 %v3952
        %4230 = vmatpush1.bf16.msra.mxu0 %v3951
        %4231 = vmatprep.subr.bf16.mxu0 %v3954
        %4232 = vmatpush1.bf16.msra.mxu0 %v3953
        %4233 = vmatprep.subr.bf16.mxu0 %v3956
        %4234 = vmatpush1.bf16.msra.mxu0 %v3955
        %4235 = vmatprep.subr.bf16.mxu0 %v3958
        %4236 = vmatpush1.bf16.msra.mxu0 %v3957
        %4237 = vmatprep.subr.bf16.mxu0 %v3960
        %4238 = vmatpush1.bf16.msra.mxu0 %v3959
        %4239 = vmatprep.subr.bf16.mxu0 %v3962
        %4240 = vmatpush1.bf16.msra.mxu0 %v3961
        %4241 = vmatprep.mubr.bf16.mxu0 %v3352
        %4242 = vmatmul.mubr.bf16.gmra.mrb[0].mxu0 %v3351
        %v4243 = vpop.f32.mrb[0].mxu0
        %v4244 = vadd.f32 %v4201, %v4243
        %v4245 = vpop.f32.mrb[0].mxu0
        %v4246 = vadd.f32 %v4203, %v4245
        %v4247 = vpop.f32.mrb[0].mxu0
        %v4248 = vadd.f32 %v4205, %v4247
        %v4249 = vpop.f32.mrb[0].mxu0
        %v4250 = vadd.f32 %v4207, %v4249
        %4251 = vdwg.mxu0
        %4252 = vmatprep.subr.bf16.mxu0 %v3964
        %4253 = vmatpush1.bf16.msra.mxu0 %v3963
        %4254 = vmatprep.subr.bf16.mxu0 %v3966
        %4255 = vmatpush1.bf16.msra.mxu0 %v3965
        %4256 = vmatprep.subr.bf16.mxu0 %v3968
        %4257 = vmatpush1.bf16.msra.mxu0 %v3967
        %4258 = vmatprep.subr.bf16.mxu0 %v3970
        %4259 = vmatpush1.bf16.msra.mxu0 %v3969
        %4260 = vmatprep.subr.bf16.mxu0 %v3972
        %4261 = vmatpush1.bf16.msra.mxu0 %v3971
        %4262 = vmatprep.subr.bf16.mxu0 %v3974
        %4263 = vmatpush1.bf16.msra.mxu0 %v3973
        %4264 = vmatprep.subr.bf16.mxu0 %v3976
        %4265 = vmatpush1.bf16.msra.mxu0 %v3975
        %4266 = vmatprep.subr.bf16.mxu0 %v3978
        %4267 = vmatpush1.bf16.msra.mxu0 %v3977
        %4268 = vmatprep.subr.bf16.mxu0 %v3980
        %4269 = vmatpush1.bf16.msra.mxu0 %v3979
        %4270 = vmatprep.subr.bf16.mxu0 %v3982
        %4271 = vmatpush1.bf16.msra.mxu0 %v3981
        %4272 = vmatprep.subr.bf16.mxu0 %v3984
        %4273 = vmatpush1.bf16.msra.mxu0 %v3983
        %4274 = vmatprep.subr.bf16.mxu0 %v3986
        %4275 = vmatpush1.bf16.msra.mxu0 %v3985
        %4276 = vmatprep.subr.bf16.mxu0 %v3988
        %4277 = vmatpush1.bf16.msra.mxu0 %v3987
        %4278 = vmatprep.subr.bf16.mxu0 %v3990
        %4279 = vmatpush1.bf16.msra.mxu0 %v3989
        %4280 = vmatprep.subr.bf16.mxu0 %v3992
        %4281 = vmatpush1.bf16.msra.mxu0 %v3991
        %4282 = vmatprep.subr.bf16.mxu0 %v3994
        %4283 = vmatpush1.bf16.msra.mxu0 %v3993
        %4284 = vmatprep.mubr.bf16.mxu0 %v3354
        %4285 = vmatmul.mubr.bf16.gmra.mrb[0].mxu0 %v3353
        %v4286 = vpop.f32.mrb[0].mxu0
        %v4287 = vadd.f32 %v4244, %v4286
        %v4288 = vpop.f32.mrb[0].mxu0
        %v4289 = vadd.f32 %v4246, %v4288
        %v4290 = vpop.f32.mrb[0].mxu0
        %v4291 = vadd.f32 %v4248, %v4290
        %v4292 = vpop.f32.mrb[0].mxu0
        %v4293 = vadd.f32 %v4250, %v4292
        %4294 = vdwg.mxu0
        %v4295 = vadd.f32 %v2167, %v4287
        %v4296 = vadd.f32 %v2168, %v4289
        %v4297 = vadd.f32 %v2169, %v4291
        %v4298 = vadd.f32 %v2170, %v4293
        %v4299 = vld [vmem:[%s678] sm:$0x3]
        %v4301 = vlaneseq
        %v4302 = vshrl.u32 %v4301, 7
        %v4303 = vsub.s32 0, %v4302
        %v4304 = vrot.slane %v4299, %v4303
        %v4305 = vlaneseq
        %v4306 = vshrl.u32 %v4305, 7
        %v4307 = vsub.s32 1, %v4306
        %v4308 = vrot.slane %v4299, %v4307
        %v4311 = vadd.f32 %v4295, %v4304
        %v4312 = vadd.f32 %v4296, %v4308
        %v4313 = vadd.f32 %v4297, %v4304
        %v4314 = vadd.f32 %v4298, %v4308
        %4315 = vst [vmem:[#allocation2] sm:$0xff] %v4311
        %4316 = vst [vmem:[#allocation2 + $0x8] sm:$0xff] %v4312
        %4317 = vst [vmem:[#allocation2 + $0x10] sm:$0xff] %v4313
        %4318 = vst [vmem:[#allocation2 + $0x18] sm:$0xff] %v4314
        %p4319 = scmp.eq.s32.totalorder %s30, 1
        // Predicated region
        $region89: #{image_encoder_forward.4} parent=71 // pred_check
          %p4320 = pneg %p4319
        $region90: #{image_encoder_forward.4} parent=71 // pred_check_branch
          %4322 = sbr.rel (%p4320) target = $region92
        $region91: #{image_encoder_forward.4} parent=71 // pred_region
          %4323 = vst [vmem:[%s13] sm:$0xff] %v4311
          %4324 = vst [vmem:[%s13 + $0x8] sm:$0xff] %v4312
          %4325 = vst [vmem:[%s13 + $0x10] sm:$0xff] %v4313
          %4326 = vst [vmem:[%s13 + $0x18] sm:$0xff] %v4314
        $region92: #{image_encoder_forward.4} parent=71 // pred_fallthru
          _
        // Predicated region
        $region93: #{image_encoder_forward.4} parent=71 // pred_check
          %p4327 = pneg %p376
        $region94: #{image_encoder_forward.4} parent=71 // pred_check_branch
          %4329 = sbr.rel (%p4327) target = $region96
        $region95: #{image_encoder_forward.4} parent=71 // pred_region
          _
        $region96: #{image_encoder_forward.4} parent=71 // pred_fallthru
          _
        // Predicated region
        $region97: #{image_encoder_forward.4} parent=71 // pred_check
          %p4330 = pneg %p376
        $region98: #{image_encoder_forward.4} parent=71 // pred_check_branch
          %4332 = sbr.rel (%p4330) target = $region100
        $region99: #{image_encoder_forward.4} parent=71 // pred_region
          _
        $region100: #{image_encoder_forward.4} parent=71 // pred_fallthru
          _
      $region72: #{image_encoder_forward.4} parent=5 // pred_fallthru
        _
      %p4333 = scmp.le.s32.totalorder 2, %s25
      // Predicated region
      $region101: #{image_encoder_forward.4} parent=5 // pred_check
        %p4334 = pneg %p4333
      $region102: #{image_encoder_forward.4} parent=5 // pred_check_branch
        %4336 = sbr.rel (%p4334) target = $region104
      $region103: #{image_encoder_forward.4} parent=5 // pred_region
        %s4337 = ssub.s32 %s25, 2
      $region104: #{image_encoder_forward.4} parent=5 // pred_fallthru
        _
    $region6: #{image_encoder_forward.4} parent=1 // loop_footer
      %s29 = sadd.s32 1, %s25
    $region7: #{image_encoder_forward.4} parent=1 // loop_footer_branch
      %24 = sbr.rel target = $region3
    $region8: #{image_encoder_forward.4} parent=1 // loop_exit
      _
    %4338 = vsyncpa [#allocation4], 1
    %s4339 = scalar_lea.sflag [#allocation4], 1
    %4340 = vsyncpa %s4339, 1
    %4341 = vsyncpa [#allocation6], 1
    %s4342 = scalar_lea.sflag [#allocation6], 1
    %4343 = vsyncpa %s4342, 1

</llo_original>
